<compile_context>
chip_gen: v7x
topology: tpu7x:2x2x1
jax: 0.10.0
libtpu: 0.0.40
codegen_flags: <defaults>
</compile_context>

<pallas_src>
import functools
import numpy as np
import jax
import jax.numpy as jnp
from jax.experimental import pallas as pl
from jax.experimental.pallas import tpu as pltpu

# cfg.fuc_k is an external config list; TextPMs uses [1, 2, 3, 4] -> FNUM = 4.
FNUM = 4


# ----------------------------- host-side weight fusion helpers -----------------------------

def _fuse_separable(wa, ba, wb, bb, wc, bc, H, W):
    """Collapse Conv(5,1)+pad(1,1) -> Conv(1,5)+pad(1,1) -> Conv(1,1) into a per-input-channel
    5x5 tap kernel plus an exact (H, W) bias plane.

    Exact because there is no nonlinearity between the three convs.  The intermediate zero
    padding only affects the bias propagation (and makes output rows 0 and H-1 pure bias);
    the x-tap contributions are identical to a plain 5x5 conv with zero extension.
    """
    co, ci, kha, kwa = wa.shape
    o2, co_b, khb, kwb = wb.shape
    oc, o2_c, khc, kwc = wc.shape
    # The boundary math below assumes exactly these kernel sizes and (1,1)/(1,1) zero padding.
    assert (kha, kwa) == (5, 1) and (khb, kwb) == (1, 5) and (khc, kwc) == (1, 1)
    assert co_b == co and o2_c == o2 and oc == 1
    assert ba.shape == (co,) and bb.shape == (o2,) and bc.shape == (1,)
    assert H >= 2 and W >= 2

    wa3 = wa[:, :, :, 0].astype(jnp.float32)        # (co, ci, kh)
    wb3 = wb[:, :, 0, :].astype(jnp.float32)        # (o2, co, kw)
    wcv = wc[0, :, 0, 0].astype(jnp.float32)        # (o2,)

    wb_eff = jnp.einsum('o,ock->ck', wcv, wb3)      # 1x1 folded into the (1,5) conv: (co, kw)
    b_eff = bc[0] + jnp.dot(wcv, bb)
    w5 = jnp.einsum('ck,cih->ihk', wb_eff, wa3)     # effective per-input-channel taps (ci, kh, kw)

    # Conv-A bias only reaches outputs where the padded intermediate is valid.
    b_int = jnp.dot(ba, wb_eff.sum(axis=1))
    bias_row = jnp.full((W,), b_int, jnp.float32)
    bias_row = bias_row.at[0].add(-jnp.dot(ba, wb_eff[:, 0]))
    bias_row = bias_row.at[W - 1].add(-jnp.dot(ba, wb_eff[:, 4]))
    hmask = ((jnp.arange(H) > 0) & (jnp.arange(H) < H - 1)).astype(jnp.float32)
    bias_plane = b_eff + hmask[:, None] * bias_row[None, :]
    return w5, bias_plane.astype(jnp.float32)


def _pack_tap_weights(w5_x, W):
    """(Cx, 5, 5) taps -> (25, Cx*(W+4)-4) lane-packed weight rows matching the packed-x layout."""
    Cx, kh, kw = w5_x.shape
    assert (kh, kw) == (5, 5)
    Wseg = W + 4
    # Shifts of up to kw-1 = 4 lanes must stay inside each channel's padded segment, and the
    # colmask must zero the >= W lanes so nothing bleeds across channel segments (review note).
    assert Wseg > 4 and (kw - 1) + W <= Wseg
    colmask = (jnp.arange(Wseg) < W).astype(jnp.float32)                # only real output lanes
    blocks = w5_x.reshape(Cx, 25)[:, :, None] * colmask[None, None, :]  # (Cx, 25, Wseg)
    a_full = jnp.transpose(blocks, (1, 0, 2)).reshape(25, Cx * Wseg)
    return a_full[:, :Cx * Wseg - 4].astype(jnp.float32)


# ---------------------------------------- kernel ----------------------------------------

def _rrgn_kernel(xp_ref, a0_ref, a1_ref, bias0_ref, bias1_ref, w1f_ref, o_ref, fpad_ref,
                 *, C, H, W):
    Wseg = W + 4
    SW = C * Wseg - 4          # accumulator width: every kw<=4 shift stays inside the slab

    # Hoisted kw lane-shifts: 5 shifted views of the pre-packed padded slab (the only lane
    # rotations on the x path).  Input is already padded + channel lane-packed host-side.
    xs = [xp_ref[:, kw:kw + SW] for kw in range(5)]

    # Interior-row mask: output rows 0 and H-1 are pure bias (intermediate H padding).
    rows = jax.lax.broadcasted_iota(jnp.int32, (H, W), 0)
    rmask = jnp.logical_and(rows > 0, rows < H - 1).astype(jnp.float32)

    # 25 taps; conv0 and conv1's hoisted x-partial accumulate from the same shifted views.
    acc0 = None
    acc1 = None
    for kh in range(5):
        for kw in range(5):
            t = kh * 5 + kw
            s = xs[kw][kh:kh + H, :]              # sublane-only slice of the hoisted kw shift
            c0 = a0_ref[t] * s                    # (H, SW) pre-broadcast weight plane (plain vld)
            c1 = a1_ref[t] * s
            acc0 = c0 if acc0 is None else acc0 + c0
            acc1 = c1 if acc1 is None else acc1 + c1

    def _seg_reduce(acc):                         # fold channel lane-segments back to (H, W)
        out = acc[:, 0:W]
        for ci in range(1, C):
            out = out + acc[:, ci * Wseg:ci * Wseg + W]
        return out

    t0 = _seg_reduce(acc0)        # conv0 tap sum
    tx1 = _seg_reduce(acc1)       # iteration-invariant x-partial of the shared conv1

    bias0 = bias0_ref[...]
    bias1 = bias1_ref[...]
    w1f = [w1f_ref[t] for t in range(25)]         # hoisted SMEM scalar reads

    # Zero-bordered scratch holding f_{i-1}: border zeroed once per grid step, interior
    # rewritten per iteration (replaces the per-iteration _pad2 concatenate chain).
    fpad_ref[...] = jnp.zeros((H + 4, W + 4), jnp.float32)

    # i == 0 : SepareConv0(x)
    f = bias0 + rmask * t0
    o_ref[0] = f.astype(o_ref.dtype)

    # i > 0 : SepareConv1(cat([x, f_{i-1}], dim=1)); weights shared, only the f channel changes.
    for i in range(1, FNUM):
        fpad_ref[2:2 + H, 2:2 + W] = f
        fs = [fpad_ref[:, kw:kw + W] for kw in range(5)]   # hoisted kw lane shifts (5, not 25)
        tf = None
        for kh in range(5):
            for kw in range(5):
                c = w1f[kh * 5 + kw] * fs[kw][kh:kh + H, :]
                tf = c if tf is None else tf + c
        f = bias1 + rmask * (tx1 + tf)
        o_ref[i] = f.astype(o_ref.dtype)


def rrgn_forward(x, params):
    N, C, H, W = x.shape
    w5_0, bias0 = _fuse_separable(params["w0a"], params["b0a"], params["w0b"],
                                  params["b0b"], params["w0c"], params["b0c"], H, W)
    w5_1, bias1 = _fuse_separable(params["w1a"], params["b1a"], params["w1b"],
                                  params["b1b"], params["w1c"], params["b1c"], H, W)
    assert w5_0.shape[0] == C and w5_1.shape[0] == C + 1
    SW = C * (W + 4) - 4

    a0 = _pack_tap_weights(w5_0, W)          # conv0: all C input channels, lane-packed
    a1 = _pack_tap_weights(w5_1[:C], W)      # conv1: hoisted x-channel partial, lane-packed
    # Pre-broadcast the 25 weight rows over H sublanes so the kernel does plain loads instead
    # of 50 XLU sublane broadcasts per grid step.
    a0b = jnp.broadcast_to(a0[:, None, :], (25, H, SW))
    a1b = jnp.broadcast_to(a1[:, None, :], (25, H, SW))
    w1f = w5_1[C].reshape(-1)                # conv1: f_{i-1} channel taps (SMEM scalars)

    # Pre-pad and channel lane-pack x host-side: (N, C, H, W) -> (N, H+4, C*(W+4)).
    xp = jnp.pad(x.astype(jnp.float32), ((0, 0), (0, 0), (2, 2), (2, 2)))
    xp = jnp.transpose(xp, (0, 2, 1, 3)).reshape(N, H + 4, C * (W + 4))

    smem_spec = pl.BlockSpec(memory_space=pltpu.MemorySpace.SMEM)
    kernel = functools.partial(_rrgn_kernel, C=C, H=H, W=W)
    return pl.pallas_call(
        kernel,
        out_shape=jax.ShapeDtypeStruct((N, FNUM, H, W), jnp.float32),
        grid=(N,),
        in_specs=[
            pl.BlockSpec((None, H + 4, C * (W + 4)), lambda n: (n, 0, 0)),
            pl.BlockSpec((25, H, SW), lambda n: (0, 0, 0)),
            pl.BlockSpec((25, H, SW), lambda n: (0, 0, 0)),
            pl.BlockSpec((H, W), lambda n: (0, 0)),
            pl.BlockSpec((H, W), lambda n: (0, 0)),
            smem_spec,
        ],
        out_specs=pl.BlockSpec((None, FNUM, H, W), lambda n: (n, 0, 0, 0)),
        scratch_shapes=[pltpu.VMEM((H + 4, W + 4), jnp.float32)],
        compiler_params=pltpu.CompilerParams(dimension_semantics=("parallel",)),
    )(xp, a0b, a1b, bias0, bias1, w1f)


# ------------------------- pure-JAX reference (for verification) -------------------------

def _conv_ref(x, w, b, pad_h, pad_w):
    y = jax.lax.conv_general_dilated(
        x, w, window_strides=(1, 1),
        padding=((pad_h, pad_h), (pad_w, pad_w)),
        dimension_numbers=("NCHW", "OIHW", "NCHW"),
        precision=jax.lax.Precision.HIGHEST)
    return y + b.reshape(1, -1, 1, 1)


def rrgn_reference(x, p):
    def sep(xi, wa, ba, wb, bb, wc, bc):
        y = _conv_ref(xi, wa, ba, 1, 1)
        y = _conv_ref(y, wb, bb, 1, 1)
        y = _conv_ref(y, wc, bc, 0, 0)
        return y

    f_map = []
    f = sep(x, p["w0a"], p["b0a"], p["w0b"], p["b0b"], p["w0c"], p["b0c"])
    f_map.append(f)
    for i in range(1, FNUM):
        b1 = jnp.concatenate([x, f_map[i - 1]], axis=1)
        f_map.append(sep(b1, p["w1a"], p["b1a"], p["w1b"], p["b1b"],
                         p["w1c"], p["b1c"]))
    return jnp.concatenate(f_map, axis=1)


if __name__ == "__main__":
    N, C, H, W = 2, 4, 16, 16
    C2 = C + 1
    key = jax.random.PRNGKey(0)
    ks = jax.random.split(key, 13)

    def init(k, shape, s=0.1):
        return (s * jax.random.normal(k, shape)).astype(jnp.float32)

    params = {
        "w0a": init(ks[0], (C, C, 5, 1)),   "b0a": init(ks[1], (C,)),
        "w0b": init(ks[2], (C, C, 1, 5)),   "b0b": init(ks[3], (C,)),
        "w0c": init(ks[4], (1, C, 1, 1)),   "b0c": init(ks[5], (1,)),
        "w1a": init(ks[6], (C2, C2, 5, 1)), "b1a": init(ks[7], (C2,)),
        "w1b": init(ks[8], (C2, C2, 1, 5)), "b1b": init(ks[9], (C2,)),
        "w1c": init(ks[10], (1, C2, 1, 1)), "b1c": init(ks[11], (1,)),
    }
    x = jax.random.normal(ks[12], (N, C, H, W), dtype=jnp.float32)

    out = jax.block_until_ready(rrgn_forward(x, params))
    ref = jax.block_until_ready(rrgn_reference(x, params))

    assert out.shape == (N, FNUM, H, W)
    np.testing.assert_allclose(np.asarray(out), np.asarray(ref), rtol=1e-4, atol=1e-4)
    print("KERNEL_OK")
</pallas_src>

<mosaic_0001>
module attributes {stable_mosaic.version = 11 : i64} {
  func.func @_rrgn_kernel(%arg0: i32, %arg1: memref<1x20x80xf32, #tpu.memory_space<vmem>>, %arg2: memref<25x16x76xf32, #tpu.memory_space<vmem>>, %arg3: memref<25x16x76xf32, #tpu.memory_space<vmem>>, %arg4: memref<16x16xf32, #tpu.memory_space<vmem>>, %arg5: memref<16x16xf32, #tpu.memory_space<vmem>>, %arg6: memref<25xf32, #tpu.memory_space<smem>>, %arg7: memref<1x4x16x16xf32, #tpu.memory_space<vmem>>, %arg8: memref<20x20xf32, #tpu.memory_space<vmem>>) attributes {dimension_semantics = [#tpu.dimension_semantics<parallel>], iteration_bounds = array<i64: 2>, scalar_prefetch = 0 : i64, scratch_operands = 1 : i64, tpu.core_type = #tpu.core_type<tc>, window_params = [{transform_indices = @transform_0, window_bounds = array<i64: 1, 20, 80>}, {pipeline_mode = #tpu.pipeline_mode<synchronous>, transform_indices = @transform_1, window_bounds = array<i64: 25, 16, 76>}, {pipeline_mode = #tpu.pipeline_mode<synchronous>, transform_indices = @transform_2, window_bounds = array<i64: 25, 16, 76>}, {pipeline_mode = #tpu.pipeline_mode<synchronous>, transform_indices = @transform_3, window_bounds = array<i64: 16, 16>}, {pipeline_mode = #tpu.pipeline_mode<synchronous>, transform_indices = @transform_4, window_bounds = array<i64: 16, 16>}, {transform_indices = @transform_5, window_bounds = array<i64: 25>}, {transform_indices = @transform_6, window_bounds = array<i64: 1, 4, 16, 16>}]} {
    %c0 = arith.constant 0 : index
    %c0_0 = arith.constant 0 : index
    %c0_1 = arith.constant 0 : index
    %0 = vector.load %arg1[%c0, %c0_0, %c0_1] : memref<1x20x80xf32, #tpu.memory_space<vmem>>, vector<1x20x76xf32>
    %1 = vector.shape_cast %0 : vector<1x20x76xf32> to vector<20x76xf32>
    %c0_2 = arith.constant 0 : index
    %c0_3 = arith.constant 0 : index
    %c1 = arith.constant 1 : index
    %2 = vector.load %arg1[%c0_2, %c0_3, %c1] : memref<1x20x80xf32, #tpu.memory_space<vmem>>, vector<1x20x76xf32>
    %3 = vector.shape_cast %2 : vector<1x20x76xf32> to vector<20x76xf32>
    %c0_4 = arith.constant 0 : index
    %c0_5 = arith.constant 0 : index
    %c2 = arith.constant 2 : index
    %4 = vector.load %arg1[%c0_4, %c0_5, %c2] : memref<1x20x80xf32, #tpu.memory_space<vmem>>, vector<1x20x76xf32>
    %5 = vector.shape_cast %4 : vector<1x20x76xf32> to vector<20x76xf32>
    %c0_6 = arith.constant 0 : index
    %c0_7 = arith.constant 0 : index
    %c3 = arith.constant 3 : index
    %6 = vector.load %arg1[%c0_6, %c0_7, %c3] : memref<1x20x80xf32, #tpu.memory_space<vmem>>, vector<1x20x76xf32>
    %7 = vector.shape_cast %6 : vector<1x20x76xf32> to vector<20x76xf32>
    %c0_8 = arith.constant 0 : index
    %c0_9 = arith.constant 0 : index
    %c4 = arith.constant 4 : index
    %8 = vector.load %arg1[%c0_8, %c0_9, %c4] : memref<1x20x80xf32, #tpu.memory_space<vmem>>, vector<1x20x76xf32>
    %9 = vector.shape_cast %8 : vector<1x20x76xf32> to vector<20x76xf32>
    %10 = tpu.iota {dimensions = array<i32: 0>} : vector<16x16xi32>
    %c0_i32 = arith.constant 0 : i32
    %11 = vector.broadcast %c0_i32 : i32 to vector<16x16xi32>
    %12 = arith.cmpi sgt, %10, %11 : vector<16x16xi32>
    %c15_i32 = arith.constant 15 : i32
    %13 = vector.broadcast %c15_i32 : i32 to vector<16x16xi32>
    %14 = arith.cmpi slt, %10, %13 : vector<16x16xi32>
    %15 = arith.andi %12, %14 : vector<16x16xi1>
    %16 = arith.extui %15 : vector<16x16xi1> to vector<16x16xi32>
    %17 = arith.sitofp %16 : vector<16x16xi32> to vector<16x16xf32>
    %18 = vector.extract_strided_slice %1 {offsets = [0, 0], sizes = [16, 76], strides = [1, 1]} : vector<20x76xf32> to vector<16x76xf32>
    %c0_10 = arith.constant 0 : index
    %c0_11 = arith.constant 0 : index
    %c0_12 = arith.constant 0 : index
    %19 = vector.load %arg2[%c0_10, %c0_11, %c0_12] : memref<25x16x76xf32, #tpu.memory_space<vmem>>, vector<1x16x76xf32>
    %20 = vector.shape_cast %19 : vector<1x16x76xf32> to vector<16x76xf32>
    %21 = arith.mulf %20, %18 : vector<16x76xf32>
    %c0_13 = arith.constant 0 : index
    %c0_14 = arith.constant 0 : index
    %c0_15 = arith.constant 0 : index
    %22 = vector.load %arg3[%c0_13, %c0_14, %c0_15] : memref<25x16x76xf32, #tpu.memory_space<vmem>>, vector<1x16x76xf32>
    %23 = vector.shape_cast %22 : vector<1x16x76xf32> to vector<16x76xf32>
    %24 = arith.mulf %23, %18 : vector<16x76xf32>
    %25 = vector.extract_strided_slice %3 {offsets = [0, 0], sizes = [16, 76], strides = [1, 1]} : vector<20x76xf32> to vector<16x76xf32>
    %c1_16 = arith.constant 1 : index
    %c0_17 = arith.constant 0 : index
    %c0_18 = arith.constant 0 : index
    %26 = vector.load %arg2[%c1_16, %c0_17, %c0_18] : memref<25x16x76xf32, #tpu.memory_space<vmem>>, vector<1x16x76xf32>
    %27 = vector.shape_cast %26 : vector<1x16x76xf32> to vector<16x76xf32>
    %28 = arith.mulf %27, %25 : vector<16x76xf32>
    %c1_19 = arith.constant 1 : index
    %c0_20 = arith.constant 0 : index
    %c0_21 = arith.constant 0 : index
    %29 = vector.load %arg3[%c1_19, %c0_20, %c0_21] : memref<25x16x76xf32, #tpu.memory_space<vmem>>, vector<1x16x76xf32>
    %30 = vector.shape_cast %29 : vector<1x16x76xf32> to vector<16x76xf32>
    %31 = arith.mulf %30, %25 : vector<16x76xf32>
    %32 = arith.addf %21, %28 : vector<16x76xf32>
    %33 = arith.addf %24, %31 : vector<16x76xf32>
    %34 = vector.extract_strided_slice %5 {offsets = [0, 0], sizes = [16, 76], strides = [1, 1]} : vector<20x76xf32> to vector<16x76xf32>
    %c2_22 = arith.constant 2 : index
    %c0_23 = arith.constant 0 : index
    %c0_24 = arith.constant 0 : index
    %35 = vector.load %arg2[%c2_22, %c0_23, %c0_24] : memref<25x16x76xf32, #tpu.memory_space<vmem>>, vector<1x16x76xf32>
    %36 = vector.shape_cast %35 : vector<1x16x76xf32> to vector<16x76xf32>
    %37 = arith.mulf %36, %34 : vector<16x76xf32>
    %c2_25 = arith.constant 2 : index
    %c0_26 = arith.constant 0 : index
    %c0_27 = arith.constant 0 : index
    %38 = vector.load %arg3[%c2_25, %c0_26, %c0_27] : memref<25x16x76xf32, #tpu.memory_space<vmem>>, vector<1x16x76xf32>
    %39 = vector.shape_cast %38 : vector<1x16x76xf32> to vector<16x76xf32>
    %40 = arith.mulf %39, %34 : vector<16x76xf32>
    %41 = arith.addf %32, %37 : vector<16x76xf32>
    %42 = arith.addf %33, %40 : vector<16x76xf32>
    %43 = vector.extract_strided_slice %7 {offsets = [0, 0], sizes = [16, 76], strides = [1, 1]} : vector<20x76xf32> to vector<16x76xf32>
    %c3_28 = arith.constant 3 : index
    %c0_29 = arith.constant 0 : index
    %c0_30 = arith.constant 0 : index
    %44 = vector.load %arg2[%c3_28, %c0_29, %c0_30] : memref<25x16x76xf32, #tpu.memory_space<vmem>>, vector<1x16x76xf32>
    %45 = vector.shape_cast %44 : vector<1x16x76xf32> to vector<16x76xf32>
    %46 = arith.mulf %45, %43 : vector<16x76xf32>
    %c3_31 = arith.constant 3 : index
    %c0_32 = arith.constant 0 : index
    %c0_33 = arith.constant 0 : index
    %47 = vector.load %arg3[%c3_31, %c0_32, %c0_33] : memref<25x16x76xf32, #tpu.memory_space<vmem>>, vector<1x16x76xf32>
    %48 = vector.shape_cast %47 : vector<1x16x76xf32> to vector<16x76xf32>
    %49 = arith.mulf %48, %43 : vector<16x76xf32>
    %50 = arith.addf %41, %46 : vector<16x76xf32>
    %51 = arith.addf %42, %49 : vector<16x76xf32>
    %52 = vector.extract_strided_slice %9 {offsets = [0, 0], sizes = [16, 76], strides = [1, 1]} : vector<20x76xf32> to vector<16x76xf32>
    %c4_34 = arith.constant 4 : index
    %c0_35 = arith.constant 0 : index
    %c0_36 = arith.constant 0 : index
    %53 = vector.load %arg2[%c4_34, %c0_35, %c0_36] : memref<25x16x76xf32, #tpu.memory_space<vmem>>, vector<1x16x76xf32>
    %54 = vector.shape_cast %53 : vector<1x16x76xf32> to vector<16x76xf32>
    %55 = arith.mulf %54, %52 : vector<16x76xf32>
    %c4_37 = arith.constant 4 : index
    %c0_38 = arith.constant 0 : index
    %c0_39 = arith.constant 0 : index
    %56 = vector.load %arg3[%c4_37, %c0_38, %c0_39] : memref<25x16x76xf32, #tpu.memory_space<vmem>>, vector<1x16x76xf32>
    %57 = vector.shape_cast %56 : vector<1x16x76xf32> to vector<16x76xf32>
    %58 = arith.mulf %57, %52 : vector<16x76xf32>
    %59 = arith.addf %50, %55 : vector<16x76xf32>
    %60 = arith.addf %51, %58 : vector<16x76xf32>
    %61 = vector.extract_strided_slice %1 {offsets = [1, 0], sizes = [16, 76], strides = [1, 1]} : vector<20x76xf32> to vector<16x76xf32>
    %c5 = arith.constant 5 : index
    %c0_40 = arith.constant 0 : index
    %c0_41 = arith.constant 0 : index
    %62 = vector.load %arg2[%c5, %c0_40, %c0_41] : memref<25x16x76xf32, #tpu.memory_space<vmem>>, vector<1x16x76xf32>
    %63 = vector.shape_cast %62 : vector<1x16x76xf32> to vector<16x76xf32>
    %64 = arith.mulf %63, %61 : vector<16x76xf32>
    %c5_42 = arith.constant 5 : index
    %c0_43 = arith.constant 0 : index
    %c0_44 = arith.constant 0 : index
    %65 = vector.load %arg3[%c5_42, %c0_43, %c0_44] : memref<25x16x76xf32, #tpu.memory_space<vmem>>, vector<1x16x76xf32>
    %66 = vector.shape_cast %65 : vector<1x16x76xf32> to vector<16x76xf32>
    %67 = arith.mulf %66, %61 : vector<16x76xf32>
    %68 = arith.addf %59, %64 : vector<16x76xf32>
    %69 = arith.addf %60, %67 : vector<16x76xf32>
    %70 = vector.extract_strided_slice %3 {offsets = [1, 0], sizes = [16, 76], strides = [1, 1]} : vector<20x76xf32> to vector<16x76xf32>
    %c6 = arith.constant 6 : index
    %c0_45 = arith.constant 0 : index
    %c0_46 = arith.constant 0 : index
    %71 = vector.load %arg2[%c6, %c0_45, %c0_46] : memref<25x16x76xf32, #tpu.memory_space<vmem>>, vector<1x16x76xf32>
    %72 = vector.shape_cast %71 : vector<1x16x76xf32> to vector<16x76xf32>
    %73 = arith.mulf %72, %70 : vector<16x76xf32>
    %c6_47 = arith.constant 6 : index
    %c0_48 = arith.constant 0 : index
    %c0_49 = arith.constant 0 : index
    %74 = vector.load %arg3[%c6_47, %c0_48, %c0_49] : memref<25x16x76xf32, #tpu.memory_space<vmem>>, vector<1x16x76xf32>
    %75 = vector.shape_cast %74 : vector<1x16x76xf32> to vector<16x76xf32>
    %76 = arith.mulf %75, %70 : vector<16x76xf32>
    %77 = arith.addf %68, %73 : vector<16x76xf32>
    %78 = arith.addf %69, %76 : vector<16x76xf32>
    %79 = vector.extract_strided_slice %5 {offsets = [1, 0], sizes = [16, 76], strides = [1, 1]} : vector<20x76xf32> to vector<16x76xf32>
    %c7 = arith.constant 7 : index
    %c0_50 = arith.constant 0 : index
    %c0_51 = arith.constant 0 : index
    %80 = vector.load %arg2[%c7, %c0_50, %c0_51] : memref<25x16x76xf32, #tpu.memory_space<vmem>>, vector<1x16x76xf32>
    %81 = vector.shape_cast %80 : vector<1x16x76xf32> to vector<16x76xf32>
    %82 = arith.mulf %81, %79 : vector<16x76xf32>
    %c7_52 = arith.constant 7 : index
    %c0_53 = arith.constant 0 : index
    %c0_54 = arith.constant 0 : index
    %83 = vector.load %arg3[%c7_52, %c0_53, %c0_54] : memref<25x16x76xf32, #tpu.memory_space<vmem>>, vector<1x16x76xf32>
    %84 = vector.shape_cast %83 : vector<1x16x76xf32> to vector<16x76xf32>
    %85 = arith.mulf %84, %79 : vector<16x76xf32>
    %86 = arith.addf %77, %82 : vector<16x76xf32>
    %87 = arith.addf %78, %85 : vector<16x76xf32>
    %88 = vector.extract_strided_slice %7 {offsets = [1, 0], sizes = [16, 76], strides = [1, 1]} : vector<20x76xf32> to vector<16x76xf32>
    %c8 = arith.constant 8 : index
    %c0_55 = arith.constant 0 : index
    %c0_56 = arith.constant 0 : index
    %89 = vector.load %arg2[%c8, %c0_55, %c0_56] : memref<25x16x76xf32, #tpu.memory_space<vmem>>, vector<1x16x76xf32>
    %90 = vector.shape_cast %89 : vector<1x16x76xf32> to vector<16x76xf32>
    %91 = arith.mulf %90, %88 : vector<16x76xf32>
    %c8_57 = arith.constant 8 : index
    %c0_58 = arith.constant 0 : index
    %c0_59 = arith.constant 0 : index
    %92 = vector.load %arg3[%c8_57, %c0_58, %c0_59] : memref<25x16x76xf32, #tpu.memory_space<vmem>>, vector<1x16x76xf32>
    %93 = vector.shape_cast %92 : vector<1x16x76xf32> to vector<16x76xf32>
    %94 = arith.mulf %93, %88 : vector<16x76xf32>
    %95 = arith.addf %86, %91 : vector<16x76xf32>
    %96 = arith.addf %87, %94 : vector<16x76xf32>
    %97 = vector.extract_strided_slice %9 {offsets = [1, 0], sizes = [16, 76], strides = [1, 1]} : vector<20x76xf32> to vector<16x76xf32>
    %c9 = arith.constant 9 : index
    %c0_60 = arith.constant 0 : index
    %c0_61 = arith.constant 0 : index
    %98 = vector.load %arg2[%c9, %c0_60, %c0_61] : memref<25x16x76xf32, #tpu.memory_space<vmem>>, vector<1x16x76xf32>
    %99 = vector.shape_cast %98 : vector<1x16x76xf32> to vector<16x76xf32>
    %100 = arith.mulf %99, %97 : vector<16x76xf32>
    %c9_62 = arith.constant 9 : index
    %c0_63 = arith.constant 0 : index
    %c0_64 = arith.constant 0 : index
    %101 = vector.load %arg3[%c9_62, %c0_63, %c0_64] : memref<25x16x76xf32, #tpu.memory_space<vmem>>, vector<1x16x76xf32>
    %102 = vector.shape_cast %101 : vector<1x16x76xf32> to vector<16x76xf32>
    %103 = arith.mulf %102, %97 : vector<16x76xf32>
    %104 = arith.addf %95, %100 : vector<16x76xf32>
    %105 = arith.addf %96, %103 : vector<16x76xf32>
    %106 = vector.extract_strided_slice %1 {offsets = [2, 0], sizes = [16, 76], strides = [1, 1]} : vector<20x76xf32> to vector<16x76xf32>
    %c10 = arith.constant 10 : index
    %c0_65 = arith.constant 0 : index
    %c0_66 = arith.constant 0 : index
    %107 = vector.load %arg2[%c10, %c0_65, %c0_66] : memref<25x16x76xf32, #tpu.memory_space<vmem>>, vector<1x16x76xf32>
    %108 = vector.shape_cast %107 : vector<1x16x76xf32> to vector<16x76xf32>
    %109 = arith.mulf %108, %106 : vector<16x76xf32>
    %c10_67 = arith.constant 10 : index
    %c0_68 = arith.constant 0 : index
    %c0_69 = arith.constant 0 : index
    %110 = vector.load %arg3[%c10_67, %c0_68, %c0_69] : memref<25x16x76xf32, #tpu.memory_space<vmem>>, vector<1x16x76xf32>
    %111 = vector.shape_cast %110 : vector<1x16x76xf32> to vector<16x76xf32>
    %112 = arith.mulf %111, %106 : vector<16x76xf32>
    %113 = arith.addf %104, %109 : vector<16x76xf32>
    %114 = arith.addf %105, %112 : vector<16x76xf32>
    %115 = vector.extract_strided_slice %3 {offsets = [2, 0], sizes = [16, 76], strides = [1, 1]} : vector<20x76xf32> to vector<16x76xf32>
    %c11 = arith.constant 11 : index
    %c0_70 = arith.constant 0 : index
    %c0_71 = arith.constant 0 : index
    %116 = vector.load %arg2[%c11, %c0_70, %c0_71] : memref<25x16x76xf32, #tpu.memory_space<vmem>>, vector<1x16x76xf32>
    %117 = vector.shape_cast %116 : vector<1x16x76xf32> to vector<16x76xf32>
    %118 = arith.mulf %117, %115 : vector<16x76xf32>
    %c11_72 = arith.constant 11 : index
    %c0_73 = arith.constant 0 : index
    %c0_74 = arith.constant 0 : index
    %119 = vector.load %arg3[%c11_72, %c0_73, %c0_74] : memref<25x16x76xf32, #tpu.memory_space<vmem>>, vector<1x16x76xf32>
    %120 = vector.shape_cast %119 : vector<1x16x76xf32> to vector<16x76xf32>
    %121 = arith.mulf %120, %115 : vector<16x76xf32>
    %122 = arith.addf %113, %118 : vector<16x76xf32>
    %123 = arith.addf %114, %121 : vector<16x76xf32>
    %124 = vector.extract_strided_slice %5 {offsets = [2, 0], sizes = [16, 76], strides = [1, 1]} : vector<20x76xf32> to vector<16x76xf32>
    %c12 = arith.constant 12 : index
    %c0_75 = arith.constant 0 : index
    %c0_76 = arith.constant 0 : index
    %125 = vector.load %arg2[%c12, %c0_75, %c0_76] : memref<25x16x76xf32, #tpu.memory_space<vmem>>, vector<1x16x76xf32>
    %126 = vector.shape_cast %125 : vector<1x16x76xf32> to vector<16x76xf32>
    %127 = arith.mulf %126, %124 : vector<16x76xf32>
    %c12_77 = arith.constant 12 : index
    %c0_78 = arith.constant 0 : index
    %c0_79 = arith.constant 0 : index
    %128 = vector.load %arg3[%c12_77, %c0_78, %c0_79] : memref<25x16x76xf32, #tpu.memory_space<vmem>>, vector<1x16x76xf32>
    %129 = vector.shape_cast %128 : vector<1x16x76xf32> to vector<16x76xf32>
    %130 = arith.mulf %129, %124 : vector<16x76xf32>
    %131 = arith.addf %122, %127 : vector<16x76xf32>
    %132 = arith.addf %123, %130 : vector<16x76xf32>
    %133 = vector.extract_strided_slice %7 {offsets = [2, 0], sizes = [16, 76], strides = [1, 1]} : vector<20x76xf32> to vector<16x76xf32>
    %c13 = arith.constant 13 : index
    %c0_80 = arith.constant 0 : index
    %c0_81 = arith.constant 0 : index
    %134 = vector.load %arg2[%c13, %c0_80, %c0_81] : memref<25x16x76xf32, #tpu.memory_space<vmem>>, vector<1x16x76xf32>
    %135 = vector.shape_cast %134 : vector<1x16x76xf32> to vector<16x76xf32>
    %136 = arith.mulf %135, %133 : vector<16x76xf32>
    %c13_82 = arith.constant 13 : index
    %c0_83 = arith.constant 0 : index
    %c0_84 = arith.constant 0 : index
    %137 = vector.load %arg3[%c13_82, %c0_83, %c0_84] : memref<25x16x76xf32, #tpu.memory_space<vmem>>, vector<1x16x76xf32>
    %138 = vector.shape_cast %137 : vector<1x16x76xf32> to vector<16x76xf32>
    %139 = arith.mulf %138, %133 : vector<16x76xf32>
    %140 = arith.addf %131, %136 : vector<16x76xf32>
    %141 = arith.addf %132, %139 : vector<16x76xf32>
    %142 = vector.extract_strided_slice %9 {offsets = [2, 0], sizes = [16, 76], strides = [1, 1]} : vector<20x76xf32> to vector<16x76xf32>
    %c14 = arith.constant 14 : index
    %c0_85 = arith.constant 0 : index
    %c0_86 = arith.constant 0 : index
    %143 = vector.load %arg2[%c14, %c0_85, %c0_86] : memref<25x16x76xf32, #tpu.memory_space<vmem>>, vector<1x16x76xf32>
    %144 = vector.shape_cast %143 : vector<1x16x76xf32> to vector<16x76xf32>
    %145 = arith.mulf %144, %142 : vector<16x76xf32>
    %c14_87 = arith.constant 14 : index
    %c0_88 = arith.constant 0 : index
    %c0_89 = arith.constant 0 : index
    %146 = vector.load %arg3[%c14_87, %c0_88, %c0_89] : memref<25x16x76xf32, #tpu.memory_space<vmem>>, vector<1x16x76xf32>
    %147 = vector.shape_cast %146 : vector<1x16x76xf32> to vector<16x76xf32>
    %148 = arith.mulf %147, %142 : vector<16x76xf32>
    %149 = arith.addf %140, %145 : vector<16x76xf32>
    %150 = arith.addf %141, %148 : vector<16x76xf32>
    %151 = vector.extract_strided_slice %1 {offsets = [3, 0], sizes = [16, 76], strides = [1, 1]} : vector<20x76xf32> to vector<16x76xf32>
    %c15 = arith.constant 15 : index
    %c0_90 = arith.constant 0 : index
    %c0_91 = arith.constant 0 : index
    %152 = vector.load %arg2[%c15, %c0_90, %c0_91] : memref<25x16x76xf32, #tpu.memory_space<vmem>>, vector<1x16x76xf32>
    %153 = vector.shape_cast %152 : vector<1x16x76xf32> to vector<16x76xf32>
    %154 = arith.mulf %153, %151 : vector<16x76xf32>
    %c15_92 = arith.constant 15 : index
    %c0_93 = arith.constant 0 : index
    %c0_94 = arith.constant 0 : index
    %155 = vector.load %arg3[%c15_92, %c0_93, %c0_94] : memref<25x16x76xf32, #tpu.memory_space<vmem>>, vector<1x16x76xf32>
    %156 = vector.shape_cast %155 : vector<1x16x76xf32> to vector<16x76xf32>
    %157 = arith.mulf %156, %151 : vector<16x76xf32>
    %158 = arith.addf %149, %154 : vector<16x76xf32>
    %159 = arith.addf %150, %157 : vector<16x76xf32>
    %160 = vector.extract_strided_slice %3 {offsets = [3, 0], sizes = [16, 76], strides = [1, 1]} : vector<20x76xf32> to vector<16x76xf32>
    %c16 = arith.constant 16 : index
    %c0_95 = arith.constant 0 : index
    %c0_96 = arith.constant 0 : index
    %161 = vector.load %arg2[%c16, %c0_95, %c0_96] : memref<25x16x76xf32, #tpu.memory_space<vmem>>, vector<1x16x76xf32>
    %162 = vector.shape_cast %161 : vector<1x16x76xf32> to vector<16x76xf32>
    %163 = arith.mulf %162, %160 : vector<16x76xf32>
    %c16_97 = arith.constant 16 : index
    %c0_98 = arith.constant 0 : index
    %c0_99 = arith.constant 0 : index
    %164 = vector.load %arg3[%c16_97, %c0_98, %c0_99] : memref<25x16x76xf32, #tpu.memory_space<vmem>>, vector<1x16x76xf32>
    %165 = vector.shape_cast %164 : vector<1x16x76xf32> to vector<16x76xf32>
    %166 = arith.mulf %165, %160 : vector<16x76xf32>
    %167 = arith.addf %158, %163 : vector<16x76xf32>
    %168 = arith.addf %159, %166 : vector<16x76xf32>
    %169 = vector.extract_strided_slice %5 {offsets = [3, 0], sizes = [16, 76], strides = [1, 1]} : vector<20x76xf32> to vector<16x76xf32>
    %c17 = arith.constant 17 : index
    %c0_100 = arith.constant 0 : index
    %c0_101 = arith.constant 0 : index
    %170 = vector.load %arg2[%c17, %c0_100, %c0_101] : memref<25x16x76xf32, #tpu.memory_space<vmem>>, vector<1x16x76xf32>
    %171 = vector.shape_cast %170 : vector<1x16x76xf32> to vector<16x76xf32>
    %172 = arith.mulf %171, %169 : vector<16x76xf32>
    %c17_102 = arith.constant 17 : index
    %c0_103 = arith.constant 0 : index
    %c0_104 = arith.constant 0 : index
    %173 = vector.load %arg3[%c17_102, %c0_103, %c0_104] : memref<25x16x76xf32, #tpu.memory_space<vmem>>, vector<1x16x76xf32>
    %174 = vector.shape_cast %173 : vector<1x16x76xf32> to vector<16x76xf32>
    %175 = arith.mulf %174, %169 : vector<16x76xf32>
    %176 = arith.addf %167, %172 : vector<16x76xf32>
    %177 = arith.addf %168, %175 : vector<16x76xf32>
    %178 = vector.extract_strided_slice %7 {offsets = [3, 0], sizes = [16, 76], strides = [1, 1]} : vector<20x76xf32> to vector<16x76xf32>
    %c18 = arith.constant 18 : index
    %c0_105 = arith.constant 0 : index
    %c0_106 = arith.constant 0 : index
    %179 = vector.load %arg2[%c18, %c0_105, %c0_106] : memref<25x16x76xf32, #tpu.memory_space<vmem>>, vector<1x16x76xf32>
    %180 = vector.shape_cast %179 : vector<1x16x76xf32> to vector<16x76xf32>
    %181 = arith.mulf %180, %178 : vector<16x76xf32>
    %c18_107 = arith.constant 18 : index
    %c0_108 = arith.constant 0 : index
    %c0_109 = arith.constant 0 : index
    %182 = vector.load %arg3[%c18_107, %c0_108, %c0_109] : memref<25x16x76xf32, #tpu.memory_space<vmem>>, vector<1x16x76xf32>
    %183 = vector.shape_cast %182 : vector<1x16x76xf32> to vector<16x76xf32>
    %184 = arith.mulf %183, %178 : vector<16x76xf32>
    %185 = arith.addf %176, %181 : vector<16x76xf32>
    %186 = arith.addf %177, %184 : vector<16x76xf32>
    %187 = vector.extract_strided_slice %9 {offsets = [3, 0], sizes = [16, 76], strides = [1, 1]} : vector<20x76xf32> to vector<16x76xf32>
    %c19 = arith.constant 19 : index
    %c0_110 = arith.constant 0 : index
    %c0_111 = arith.constant 0 : index
    %188 = vector.load %arg2[%c19, %c0_110, %c0_111] : memref<25x16x76xf32, #tpu.memory_space<vmem>>, vector<1x16x76xf32>
    %189 = vector.shape_cast %188 : vector<1x16x76xf32> to vector<16x76xf32>
    %190 = arith.mulf %189, %187 : vector<16x76xf32>
    %c19_112 = arith.constant 19 : index
    %c0_113 = arith.constant 0 : index
    %c0_114 = arith.constant 0 : index
    %191 = vector.load %arg3[%c19_112, %c0_113, %c0_114] : memref<25x16x76xf32, #tpu.memory_space<vmem>>, vector<1x16x76xf32>
    %192 = vector.shape_cast %191 : vector<1x16x76xf32> to vector<16x76xf32>
    %193 = arith.mulf %192, %187 : vector<16x76xf32>
    %194 = arith.addf %185, %190 : vector<16x76xf32>
    %195 = arith.addf %186, %193 : vector<16x76xf32>
    %196 = vector.extract_strided_slice %1 {offsets = [4, 0], sizes = [16, 76], strides = [1, 1]} : vector<20x76xf32> to vector<16x76xf32>
    %c20 = arith.constant 20 : index
    %c0_115 = arith.constant 0 : index
    %c0_116 = arith.constant 0 : index
    %197 = vector.load %arg2[%c20, %c0_115, %c0_116] : memref<25x16x76xf32, #tpu.memory_space<vmem>>, vector<1x16x76xf32>
    %198 = vector.shape_cast %197 : vector<1x16x76xf32> to vector<16x76xf32>
    %199 = arith.mulf %198, %196 : vector<16x76xf32>
    %c20_117 = arith.constant 20 : index
    %c0_118 = arith.constant 0 : index
    %c0_119 = arith.constant 0 : index
    %200 = vector.load %arg3[%c20_117, %c0_118, %c0_119] : memref<25x16x76xf32, #tpu.memory_space<vmem>>, vector<1x16x76xf32>
    %201 = vector.shape_cast %200 : vector<1x16x76xf32> to vector<16x76xf32>
    %202 = arith.mulf %201, %196 : vector<16x76xf32>
    %203 = arith.addf %194, %199 : vector<16x76xf32>
    %204 = arith.addf %195, %202 : vector<16x76xf32>
    %205 = vector.extract_strided_slice %3 {offsets = [4, 0], sizes = [16, 76], strides = [1, 1]} : vector<20x76xf32> to vector<16x76xf32>
    %c21 = arith.constant 21 : index
    %c0_120 = arith.constant 0 : index
    %c0_121 = arith.constant 0 : index
    %206 = vector.load %arg2[%c21, %c0_120, %c0_121] : memref<25x16x76xf32, #tpu.memory_space<vmem>>, vector<1x16x76xf32>
    %207 = vector.shape_cast %206 : vector<1x16x76xf32> to vector<16x76xf32>
    %208 = arith.mulf %207, %205 : vector<16x76xf32>
    %c21_122 = arith.constant 21 : index
    %c0_123 = arith.constant 0 : index
    %c0_124 = arith.constant 0 : index
    %209 = vector.load %arg3[%c21_122, %c0_123, %c0_124] : memref<25x16x76xf32, #tpu.memory_space<vmem>>, vector<1x16x76xf32>
    %210 = vector.shape_cast %209 : vector<1x16x76xf32> to vector<16x76xf32>
    %211 = arith.mulf %210, %205 : vector<16x76xf32>
    %212 = arith.addf %203, %208 : vector<16x76xf32>
    %213 = arith.addf %204, %211 : vector<16x76xf32>
    %214 = vector.extract_strided_slice %5 {offsets = [4, 0], sizes = [16, 76], strides = [1, 1]} : vector<20x76xf32> to vector<16x76xf32>
    %c22 = arith.constant 22 : index
    %c0_125 = arith.constant 0 : index
    %c0_126 = arith.constant 0 : index
    %215 = vector.load %arg2[%c22, %c0_125, %c0_126] : memref<25x16x76xf32, #tpu.memory_space<vmem>>, vector<1x16x76xf32>
    %216 = vector.shape_cast %215 : vector<1x16x76xf32> to vector<16x76xf32>
    %217 = arith.mulf %216, %214 : vector<16x76xf32>
    %c22_127 = arith.constant 22 : index
    %c0_128 = arith.constant 0 : index
    %c0_129 = arith.constant 0 : index
    %218 = vector.load %arg3[%c22_127, %c0_128, %c0_129] : memref<25x16x76xf32, #tpu.memory_space<vmem>>, vector<1x16x76xf32>
    %219 = vector.shape_cast %218 : vector<1x16x76xf32> to vector<16x76xf32>
    %220 = arith.mulf %219, %214 : vector<16x76xf32>
    %221 = arith.addf %212, %217 : vector<16x76xf32>
    %222 = arith.addf %213, %220 : vector<16x76xf32>
    %223 = vector.extract_strided_slice %7 {offsets = [4, 0], sizes = [16, 76], strides = [1, 1]} : vector<20x76xf32> to vector<16x76xf32>
    %c23 = arith.constant 23 : index
    %c0_130 = arith.constant 0 : index
    %c0_131 = arith.constant 0 : index
    %224 = vector.load %arg2[%c23, %c0_130, %c0_131] : memref<25x16x76xf32, #tpu.memory_space<vmem>>, vector<1x16x76xf32>
    %225 = vector.shape_cast %224 : vector<1x16x76xf32> to vector<16x76xf32>
    %226 = arith.mulf %225, %223 : vector<16x76xf32>
    %c23_132 = arith.constant 23 : index
    %c0_133 = arith.constant 0 : index
    %c0_134 = arith.constant 0 : index
    %227 = vector.load %arg3[%c23_132, %c0_133, %c0_134] : memref<25x16x76xf32, #tpu.memory_space<vmem>>, vector<1x16x76xf32>
    %228 = vector.shape_cast %227 : vector<1x16x76xf32> to vector<16x76xf32>
    %229 = arith.mulf %228, %223 : vector<16x76xf32>
    %230 = arith.addf %221, %226 : vector<16x76xf32>
    %231 = arith.addf %222, %229 : vector<16x76xf32>
    %232 = vector.extract_strided_slice %9 {offsets = [4, 0], sizes = [16, 76], strides = [1, 1]} : vector<20x76xf32> to vector<16x76xf32>
    %c24 = arith.constant 24 : index
    %c0_135 = arith.constant 0 : index
    %c0_136 = arith.constant 0 : index
    %233 = vector.load %arg2[%c24, %c0_135, %c0_136] : memref<25x16x76xf32, #tpu.memory_space<vmem>>, vector<1x16x76xf32>
    %234 = vector.shape_cast %233 : vector<1x16x76xf32> to vector<16x76xf32>
    %235 = arith.mulf %234, %232 : vector<16x76xf32>
    %c24_137 = arith.constant 24 : index
    %c0_138 = arith.constant 0 : index
    %c0_139 = arith.constant 0 : index
    %236 = vector.load %arg3[%c24_137, %c0_138, %c0_139] : memref<25x16x76xf32, #tpu.memory_space<vmem>>, vector<1x16x76xf32>
    %237 = vector.shape_cast %236 : vector<1x16x76xf32> to vector<16x76xf32>
    %238 = arith.mulf %237, %232 : vector<16x76xf32>
    %239 = arith.addf %230, %235 : vector<16x76xf32>
    %240 = arith.addf %231, %238 : vector<16x76xf32>
    %241 = vector.extract_strided_slice %239 {offsets = [0, 0], sizes = [16, 16], strides = [1, 1]} : vector<16x76xf32> to vector<16x16xf32>
    %242 = vector.extract_strided_slice %239 {offsets = [0, 20], sizes = [16, 16], strides = [1, 1]} : vector<16x76xf32> to vector<16x16xf32>
    %243 = arith.addf %241, %242 : vector<16x16xf32>
    %244 = vector.extract_strided_slice %239 {offsets = [0, 40], sizes = [16, 16], strides = [1, 1]} : vector<16x76xf32> to vector<16x16xf32>
    %245 = arith.addf %243, %244 : vector<16x16xf32>
    %246 = vector.extract_strided_slice %239 {offsets = [0, 60], sizes = [16, 16], strides = [1, 1]} : vector<16x76xf32> to vector<16x16xf32>
    %247 = arith.addf %245, %246 : vector<16x16xf32>
    %248 = vector.extract_strided_slice %240 {offsets = [0, 0], sizes = [16, 16], strides = [1, 1]} : vector<16x76xf32> to vector<16x16xf32>
    %249 = vector.extract_strided_slice %240 {offsets = [0, 20], sizes = [16, 16], strides = [1, 1]} : vector<16x76xf32> to vector<16x16xf32>
    %250 = arith.addf %248, %249 : vector<16x16xf32>
    %251 = vector.extract_strided_slice %240 {offsets = [0, 40], sizes = [16, 16], strides = [1, 1]} : vector<16x76xf32> to vector<16x16xf32>
    %252 = arith.addf %250, %251 : vector<16x16xf32>
    %253 = vector.extract_strided_slice %240 {offsets = [0, 60], sizes = [16, 16], strides = [1, 1]} : vector<16x76xf32> to vector<16x16xf32>
    %254 = arith.addf %252, %253 : vector<16x16xf32>
    %c0_140 = arith.constant 0 : index
    %c0_141 = arith.constant 0 : index
    %255 = vector.load %arg4[%c0_140, %c0_141] : memref<16x16xf32, #tpu.memory_space<vmem>>, vector<16x16xf32>
    %c0_142 = arith.constant 0 : index
    %c0_143 = arith.constant 0 : index
    %256 = vector.load %arg5[%c0_142, %c0_143] : memref<16x16xf32, #tpu.memory_space<vmem>>, vector<16x16xf32>
    %c0_144 = arith.constant 0 : index
    %257 = memref.load %arg6[%c0_144] : memref<25xf32, #tpu.memory_space<smem>>
    %c1_145 = arith.constant 1 : index
    %258 = memref.load %arg6[%c1_145] : memref<25xf32, #tpu.memory_space<smem>>
    %c2_146 = arith.constant 2 : index
    %259 = memref.load %arg6[%c2_146] : memref<25xf32, #tpu.memory_space<smem>>
    %c3_147 = arith.constant 3 : index
    %260 = memref.load %arg6[%c3_147] : memref<25xf32, #tpu.memory_space<smem>>
    %c4_148 = arith.constant 4 : index
    %261 = memref.load %arg6[%c4_148] : memref<25xf32, #tpu.memory_space<smem>>
    %c5_149 = arith.constant 5 : index
    %262 = memref.load %arg6[%c5_149] : memref<25xf32, #tpu.memory_space<smem>>
    %c6_150 = arith.constant 6 : index
    %263 = memref.load %arg6[%c6_150] : memref<25xf32, #tpu.memory_space<smem>>
    %c7_151 = arith.constant 7 : index
    %264 = memref.load %arg6[%c7_151] : memref<25xf32, #tpu.memory_space<smem>>
    %c8_152 = arith.constant 8 : index
    %265 = memref.load %arg6[%c8_152] : memref<25xf32, #tpu.memory_space<smem>>
    %c9_153 = arith.constant 9 : index
    %266 = memref.load %arg6[%c9_153] : memref<25xf32, #tpu.memory_space<smem>>
    %c10_154 = arith.constant 10 : index
    %267 = memref.load %arg6[%c10_154] : memref<25xf32, #tpu.memory_space<smem>>
    %c11_155 = arith.constant 11 : index
    %268 = memref.load %arg6[%c11_155] : memref<25xf32, #tpu.memory_space<smem>>
    %c12_156 = arith.constant 12 : index
    %269 = memref.load %arg6[%c12_156] : memref<25xf32, #tpu.memory_space<smem>>
    %c13_157 = arith.constant 13 : index
    %270 = memref.load %arg6[%c13_157] : memref<25xf32, #tpu.memory_space<smem>>
    %c14_158 = arith.constant 14 : index
    %271 = memref.load %arg6[%c14_158] : memref<25xf32, #tpu.memory_space<smem>>
    %c15_159 = arith.constant 15 : index
    %272 = memref.load %arg6[%c15_159] : memref<25xf32, #tpu.memory_space<smem>>
    %c16_160 = arith.constant 16 : index
    %273 = memref.load %arg6[%c16_160] : memref<25xf32, #tpu.memory_space<smem>>
    %c17_161 = arith.constant 17 : index
    %274 = memref.load %arg6[%c17_161] : memref<25xf32, #tpu.memory_space<smem>>
    %c18_162 = arith.constant 18 : index
    %275 = memref.load %arg6[%c18_162] : memref<25xf32, #tpu.memory_space<smem>>
    %c19_163 = arith.constant 19 : index
    %276 = memref.load %arg6[%c19_163] : memref<25xf32, #tpu.memory_space<smem>>
    %c20_164 = arith.constant 20 : index
    %277 = memref.load %arg6[%c20_164] : memref<25xf32, #tpu.memory_space<smem>>
    %c21_165 = arith.constant 21 : index
    %278 = memref.load %arg6[%c21_165] : memref<25xf32, #tpu.memory_space<smem>>
    %c22_166 = arith.constant 22 : index
    %279 = memref.load %arg6[%c22_166] : memref<25xf32, #tpu.memory_space<smem>>
    %c23_167 = arith.constant 23 : index
    %280 = memref.load %arg6[%c23_167] : memref<25xf32, #tpu.memory_space<smem>>
    %c24_168 = arith.constant 24 : index
    %281 = memref.load %arg6[%c24_168] : memref<25xf32, #tpu.memory_space<smem>>
    %cst = arith.constant 0.000000e+00 : f32
    %282 = vector.broadcast %cst : f32 to vector<20x20xf32>
    %c0_169 = arith.constant 0 : index
    %c0_170 = arith.constant 0 : index
    %283 = vector.load %arg8[%c0_169, %c0_170] : memref<20x20xf32, #tpu.memory_space<vmem>>, vector<20x20xf32>
    tpu.vector_store %arg8[%c0_169, %c0_170], %282 {strides = array<i32>} : memref<20x20xf32, #tpu.memory_space<vmem>>, vector<20x20xf32>,
    %284 = arith.mulf %17, %247 : vector<16x16xf32>
    %285 = arith.addf %255, %284 : vector<16x16xf32>
    %c0_171 = arith.constant 0 : index
    %c0_172 = arith.constant 0 : index
    %c0_173 = arith.constant 0 : index
    %c0_174 = arith.constant 0 : index
    %286 = vector.load %arg7[%c0_171, %c0_172, %c0_173, %c0_174] : memref<1x4x16x16xf32, #tpu.memory_space<vmem>>, vector<1x1x16x16xf32>
    %287 = vector.shape_cast %286 : vector<1x1x16x16xf32> to vector<16x16xf32>
    %288 = vector.shape_cast %285 : vector<16x16xf32> to vector<1x1x16x16xf32>
    tpu.vector_store %arg7[%c0_171, %c0_172, %c0_173, %c0_174], %288 {strides = array<i32>} : memref<1x4x16x16xf32, #tpu.memory_space<vmem>>, vector<1x1x16x16xf32>,
    %c2_175 = arith.constant 2 : index
    %c2_176 = arith.constant 2 : index
    %289 = vector.load %arg8[%c2_175, %c2_176] : memref<20x20xf32, #tpu.memory_space<vmem>>, vector<16x16xf32>
    tpu.vector_store %arg8[%c2_175, %c2_176], %285 {strides = array<i32>} : memref<20x20xf32, #tpu.memory_space<vmem>>, vector<16x16xf32>,
    %c0_177 = arith.constant 0 : index
    %c0_178 = arith.constant 0 : index
    %290 = vector.load %arg8[%c0_177, %c0_178] : memref<20x20xf32, #tpu.memory_space<vmem>>, vector<20x16xf32>
    %c0_179 = arith.constant 0 : index
    %c1_180 = arith.constant 1 : index
    %291 = vector.load %arg8[%c0_179, %c1_180] : memref<20x20xf32, #tpu.memory_space<vmem>>, vector<20x16xf32>
    %c0_181 = arith.constant 0 : index
    %c2_182 = arith.constant 2 : index
    %292 = vector.load %arg8[%c0_181, %c2_182] : memref<20x20xf32, #tpu.memory_space<vmem>>, vector<20x16xf32>
    %c0_183 = arith.constant 0 : index
    %c3_184 = arith.constant 3 : index
    %293 = vector.load %arg8[%c0_183, %c3_184] : memref<20x20xf32, #tpu.memory_space<vmem>>, vector<20x16xf32>
    %c0_185 = arith.constant 0 : index
    %c4_186 = arith.constant 4 : index
    %294 = vector.load %arg8[%c0_185, %c4_186] : memref<20x20xf32, #tpu.memory_space<vmem>>, vector<20x16xf32>
    %295 = vector.extract_strided_slice %290 {offsets = [0, 0], sizes = [16, 16], strides = [1, 1]} : vector<20x16xf32> to vector<16x16xf32>
    %296 = vector.broadcast %257 : f32 to vector<16x16xf32>
    %297 = arith.mulf %296, %295 : vector<16x16xf32>
    %298 = vector.extract_strided_slice %291 {offsets = [0, 0], sizes = [16, 16], strides = [1, 1]} : vector<20x16xf32> to vector<16x16xf32>
    %299 = vector.broadcast %258 : f32 to vector<16x16xf32>
    %300 = arith.mulf %299, %298 : vector<16x16xf32>
    %301 = arith.addf %297, %300 : vector<16x16xf32>
    %302 = vector.extract_strided_slice %292 {offsets = [0, 0], sizes = [16, 16], strides = [1, 1]} : vector<20x16xf32> to vector<16x16xf32>
    %303 = vector.broadcast %259 : f32 to vector<16x16xf32>
    %304 = arith.mulf %303, %302 : vector<16x16xf32>
    %305 = arith.addf %301, %304 : vector<16x16xf32>
    %306 = vector.extract_strided_slice %293 {offsets = [0, 0], sizes = [16, 16], strides = [1, 1]} : vector<20x16xf32> to vector<16x16xf32>
    %307 = vector.broadcast %260 : f32 to vector<16x16xf32>
    %308 = arith.mulf %307, %306 : vector<16x16xf32>
    %309 = arith.addf %305, %308 : vector<16x16xf32>
    %310 = vector.extract_strided_slice %294 {offsets = [0, 0], sizes = [16, 16], strides = [1, 1]} : vector<20x16xf32> to vector<16x16xf32>
    %311 = vector.broadcast %261 : f32 to vector<16x16xf32>
    %312 = arith.mulf %311, %310 : vector<16x16xf32>
    %313 = arith.addf %309, %312 : vector<16x16xf32>
    %314 = vector.extract_strided_slice %290 {offsets = [1, 0], sizes = [16, 16], strides = [1, 1]} : vector<20x16xf32> to vector<16x16xf32>
    %315 = vector.broadcast %262 : f32 to vector<16x16xf32>
    %316 = arith.mulf %315, %314 : vector<16x16xf32>
    %317 = arith.addf %313, %316 : vector<16x16xf32>
    %318 = vector.extract_strided_slice %291 {offsets = [1, 0], sizes = [16, 16], strides = [1, 1]} : vector<20x16xf32> to vector<16x16xf32>
    %319 = vector.broadcast %263 : f32 to vector<16x16xf32>
    %320 = arith.mulf %319, %318 : vector<16x16xf32>
    %321 = arith.addf %317, %320 : vector<16x16xf32>
    %322 = vector.extract_strided_slice %292 {offsets = [1, 0], sizes = [16, 16], strides = [1, 1]} : vector<20x16xf32> to vector<16x16xf32>
    %323 = vector.broadcast %264 : f32 to vector<16x16xf32>
    %324 = arith.mulf %323, %322 : vector<16x16xf32>
    %325 = arith.addf %321, %324 : vector<16x16xf32>
    %326 = vector.extract_strided_slice %293 {offsets = [1, 0], sizes = [16, 16], strides = [1, 1]} : vector<20x16xf32> to vector<16x16xf32>
    %327 = vector.broadcast %265 : f32 to vector<16x16xf32>
    %328 = arith.mulf %327, %326 : vector<16x16xf32>
    %329 = arith.addf %325, %328 : vector<16x16xf32>
    %330 = vector.extract_strided_slice %294 {offsets = [1, 0], sizes = [16, 16], strides = [1, 1]} : vector<20x16xf32> to vector<16x16xf32>
    %331 = vector.broadcast %266 : f32 to vector<16x16xf32>
    %332 = arith.mulf %331, %330 : vector<16x16xf32>
    %333 = arith.addf %329, %332 : vector<16x16xf32>
    %334 = vector.extract_strided_slice %290 {offsets = [2, 0], sizes = [16, 16], strides = [1, 1]} : vector<20x16xf32> to vector<16x16xf32>
    %335 = vector.broadcast %267 : f32 to vector<16x16xf32>
    %336 = arith.mulf %335, %334 : vector<16x16xf32>
    %337 = arith.addf %333, %336 : vector<16x16xf32>
    %338 = vector.extract_strided_slice %291 {offsets = [2, 0], sizes = [16, 16], strides = [1, 1]} : vector<20x16xf32> to vector<16x16xf32>
    %339 = vector.broadcast %268 : f32 to vector<16x16xf32>
    %340 = arith.mulf %339, %338 : vector<16x16xf32>
    %341 = arith.addf %337, %340 : vector<16x16xf32>
    %342 = vector.extract_strided_slice %292 {offsets = [2, 0], sizes = [16, 16], strides = [1, 1]} : vector<20x16xf32> to vector<16x16xf32>
    %343 = vector.broadcast %269 : f32 to vector<16x16xf32>
    %344 = arith.mulf %343, %342 : vector<16x16xf32>
    %345 = arith.addf %341, %344 : vector<16x16xf32>
    %346 = vector.extract_strided_slice %293 {offsets = [2, 0], sizes = [16, 16], strides = [1, 1]} : vector<20x16xf32> to vector<16x16xf32>
    %347 = vector.broadcast %270 : f32 to vector<16x16xf32>
    %348 = arith.mulf %347, %346 : vector<16x16xf32>
    %349 = arith.addf %345, %348 : vector<16x16xf32>
    %350 = vector.extract_strided_slice %294 {offsets = [2, 0], sizes = [16, 16], strides = [1, 1]} : vector<20x16xf32> to vector<16x16xf32>
    %351 = vector.broadcast %271 : f32 to vector<16x16xf32>
    %352 = arith.mulf %351, %350 : vector<16x16xf32>
    %353 = arith.addf %349, %352 : vector<16x16xf32>
    %354 = vector.extract_strided_slice %290 {offsets = [3, 0], sizes = [16, 16], strides = [1, 1]} : vector<20x16xf32> to vector<16x16xf32>
    %355 = vector.broadcast %272 : f32 to vector<16x16xf32>
    %356 = arith.mulf %355, %354 : vector<16x16xf32>
    %357 = arith.addf %353, %356 : vector<16x16xf32>
    %358 = vector.extract_strided_slice %291 {offsets = [3, 0], sizes = [16, 16], strides = [1, 1]} : vector<20x16xf32> to vector<16x16xf32>
    %359 = vector.broadcast %273 : f32 to vector<16x16xf32>
    %360 = arith.mulf %359, %358 : vector<16x16xf32>
    %361 = arith.addf %357, %360 : vector<16x16xf32>
    %362 = vector.extract_strided_slice %292 {offsets = [3, 0], sizes = [16, 16], strides = [1, 1]} : vector<20x16xf32> to vector<16x16xf32>
    %363 = vector.broadcast %274 : f32 to vector<16x16xf32>
    %364 = arith.mulf %363, %362 : vector<16x16xf32>
    %365 = arith.addf %361, %364 : vector<16x16xf32>
    %366 = vector.extract_strided_slice %293 {offsets = [3, 0], sizes = [16, 16], strides = [1, 1]} : vector<20x16xf32> to vector<16x16xf32>
    %367 = vector.broadcast %275 : f32 to vector<16x16xf32>
    %368 = arith.mulf %367, %366 : vector<16x16xf32>
    %369 = arith.addf %365, %368 : vector<16x16xf32>
    %370 = vector.extract_strided_slice %294 {offsets = [3, 0], sizes = [16, 16], strides = [1, 1]} : vector<20x16xf32> to vector<16x16xf32>
    %371 = vector.broadcast %276 : f32 to vector<16x16xf32>
    %372 = arith.mulf %371, %370 : vector<16x16xf32>
    %373 = arith.addf %369, %372 : vector<16x16xf32>
    %374 = vector.extract_strided_slice %290 {offsets = [4, 0], sizes = [16, 16], strides = [1, 1]} : vector<20x16xf32> to vector<16x16xf32>
    %375 = vector.broadcast %277 : f32 to vector<16x16xf32>
    %376 = arith.mulf %375, %374 : vector<16x16xf32>
    %377 = arith.addf %373, %376 : vector<16x16xf32>
    %378 = vector.extract_strided_slice %291 {offsets = [4, 0], sizes = [16, 16], strides = [1, 1]} : vector<20x16xf32> to vector<16x16xf32>
    %379 = vector.broadcast %278 : f32 to vector<16x16xf32>
    %380 = arith.mulf %379, %378 : vector<16x16xf32>
    %381 = arith.addf %377, %380 : vector<16x16xf32>
    %382 = vector.extract_strided_slice %292 {offsets = [4, 0], sizes = [16, 16], strides = [1, 1]} : vector<20x16xf32> to vector<16x16xf32>
    %383 = vector.broadcast %279 : f32 to vector<16x16xf32>
    %384 = arith.mulf %383, %382 : vector<16x16xf32>
    %385 = arith.addf %381, %384 : vector<16x16xf32>
    %386 = vector.extract_strided_slice %293 {offsets = [4, 0], sizes = [16, 16], strides = [1, 1]} : vector<20x16xf32> to vector<16x16xf32>
    %387 = vector.broadcast %280 : f32 to vector<16x16xf32>
    %388 = arith.mulf %387, %386 : vector<16x16xf32>
    %389 = arith.addf %385, %388 : vector<16x16xf32>
    %390 = vector.extract_strided_slice %294 {offsets = [4, 0], sizes = [16, 16], strides = [1, 1]} : vector<20x16xf32> to vector<16x16xf32>
    %391 = vector.broadcast %281 : f32 to vector<16x16xf32>
    %392 = arith.mulf %391, %390 : vector<16x16xf32>
    %393 = arith.addf %389, %392 : vector<16x16xf32>
    %394 = arith.addf %254, %393 : vector<16x16xf32>
    %395 = arith.mulf %17, %394 : vector<16x16xf32>
    %396 = arith.addf %256, %395 : vector<16x16xf32>
    %c0_187 = arith.constant 0 : index
    %c1_188 = arith.constant 1 : index
    %c0_189 = arith.constant 0 : index
    %c0_190 = arith.constant 0 : index
    %397 = vector.load %arg7[%c0_187, %c1_188, %c0_189, %c0_190] : memref<1x4x16x16xf32, #tpu.memory_space<vmem>>, vector<1x1x16x16xf32>
    %398 = vector.shape_cast %397 : vector<1x1x16x16xf32> to vector<16x16xf32>
    %399 = vector.shape_cast %396 : vector<16x16xf32> to vector<1x1x16x16xf32>
    tpu.vector_store %arg7[%c0_187, %c1_188, %c0_189, %c0_190], %399 {strides = array<i32>} : memref<1x4x16x16xf32, #tpu.memory_space<vmem>>, vector<1x1x16x16xf32>,
    %c2_191 = arith.constant 2 : index
    %c2_192 = arith.constant 2 : index
    %400 = vector.load %arg8[%c2_191, %c2_192] : memref<20x20xf32, #tpu.memory_space<vmem>>, vector<16x16xf32>
    tpu.vector_store %arg8[%c2_191, %c2_192], %396 {strides = array<i32>} : memref<20x20xf32, #tpu.memory_space<vmem>>, vector<16x16xf32>,
    %c0_193 = arith.constant 0 : index
    %c0_194 = arith.constant 0 : index
    %401 = vector.load %arg8[%c0_193, %c0_194] : memref<20x20xf32, #tpu.memory_space<vmem>>, vector<20x16xf32>
    %c0_195 = arith.constant 0 : index
    %c1_196 = arith.constant 1 : index
    %402 = vector.load %arg8[%c0_195, %c1_196] : memref<20x20xf32, #tpu.memory_space<vmem>>, vector<20x16xf32>
    %c0_197 = arith.constant 0 : index
    %c2_198 = arith.constant 2 : index
    %403 = vector.load %arg8[%c0_197, %c2_198] : memref<20x20xf32, #tpu.memory_space<vmem>>, vector<20x16xf32>
    %c0_199 = arith.constant 0 : index
    %c3_200 = arith.constant 3 : index
    %404 = vector.load %arg8[%c0_199, %c3_200] : memref<20x20xf32, #tpu.memory_space<vmem>>, vector<20x16xf32>
    %c0_201 = arith.constant 0 : index
    %c4_202 = arith.constant 4 : index
    %405 = vector.load %arg8[%c0_201, %c4_202] : memref<20x20xf32, #tpu.memory_space<vmem>>, vector<20x16xf32>
    %406 = vector.extract_strided_slice %401 {offsets = [0, 0], sizes = [16, 16], strides = [1, 1]} : vector<20x16xf32> to vector<16x16xf32>
    %407 = vector.broadcast %257 : f32 to vector<16x16xf32>
    %408 = arith.mulf %407, %406 : vector<16x16xf32>
    %409 = vector.extract_strided_slice %402 {offsets = [0, 0], sizes = [16, 16], strides = [1, 1]} : vector<20x16xf32> to vector<16x16xf32>
    %410 = vector.broadcast %258 : f32 to vector<16x16xf32>
    %411 = arith.mulf %410, %409 : vector<16x16xf32>
    %412 = arith.addf %408, %411 : vector<16x16xf32>
    %413 = vector.extract_strided_slice %403 {offsets = [0, 0], sizes = [16, 16], strides = [1, 1]} : vector<20x16xf32> to vector<16x16xf32>
    %414 = vector.broadcast %259 : f32 to vector<16x16xf32>
    %415 = arith.mulf %414, %413 : vector<16x16xf32>
    %416 = arith.addf %412, %415 : vector<16x16xf32>
    %417 = vector.extract_strided_slice %404 {offsets = [0, 0], sizes = [16, 16], strides = [1, 1]} : vector<20x16xf32> to vector<16x16xf32>
    %418 = vector.broadcast %260 : f32 to vector<16x16xf32>
    %419 = arith.mulf %418, %417 : vector<16x16xf32>
    %420 = arith.addf %416, %419 : vector<16x16xf32>
    %421 = vector.extract_strided_slice %405 {offsets = [0, 0], sizes = [16, 16], strides = [1, 1]} : vector<20x16xf32> to vector<16x16xf32>
    %422 = vector.broadcast %261 : f32 to vector<16x16xf32>
    %423 = arith.mulf %422, %421 : vector<16x16xf32>
    %424 = arith.addf %420, %423 : vector<16x16xf32>
    %425 = vector.extract_strided_slice %401 {offsets = [1, 0], sizes = [16, 16], strides = [1, 1]} : vector<20x16xf32> to vector<16x16xf32>
    %426 = vector.broadcast %262 : f32 to vector<16x16xf32>
    %427 = arith.mulf %426, %425 : vector<16x16xf32>
    %428 = arith.addf %424, %427 : vector<16x16xf32>
    %429 = vector.extract_strided_slice %402 {offsets = [1, 0], sizes = [16, 16], strides = [1, 1]} : vector<20x16xf32> to vector<16x16xf32>
    %430 = vector.broadcast %263 : f32 to vector<16x16xf32>
    %431 = arith.mulf %430, %429 : vector<16x16xf32>
    %432 = arith.addf %428, %431 : vector<16x16xf32>
    %433 = vector.extract_strided_slice %403 {offsets = [1, 0], sizes = [16, 16], strides = [1, 1]} : vector<20x16xf32> to vector<16x16xf32>
    %434 = vector.broadcast %264 : f32 to vector<16x16xf32>
    %435 = arith.mulf %434, %433 : vector<16x16xf32>
    %436 = arith.addf %432, %435 : vector<16x16xf32>
    %437 = vector.extract_strided_slice %404 {offsets = [1, 0], sizes = [16, 16], strides = [1, 1]} : vector<20x16xf32> to vector<16x16xf32>
    %438 = vector.broadcast %265 : f32 to vector<16x16xf32>
    %439 = arith.mulf %438, %437 : vector<16x16xf32>
    %440 = arith.addf %436, %439 : vector<16x16xf32>
    %441 = vector.extract_strided_slice %405 {offsets = [1, 0], sizes = [16, 16], strides = [1, 1]} : vector<20x16xf32> to vector<16x16xf32>
    %442 = vector.broadcast %266 : f32 to vector<16x16xf32>
    %443 = arith.mulf %442, %441 : vector<16x16xf32>
    %444 = arith.addf %440, %443 : vector<16x16xf32>
    %445 = vector.extract_strided_slice %401 {offsets = [2, 0], sizes = [16, 16], strides = [1, 1]} : vector<20x16xf32> to vector<16x16xf32>
    %446 = vector.broadcast %267 : f32 to vector<16x16xf32>
    %447 = arith.mulf %446, %445 : vector<16x16xf32>
    %448 = arith.addf %444, %447 : vector<16x16xf32>
    %449 = vector.extract_strided_slice %402 {offsets = [2, 0], sizes = [16, 16], strides = [1, 1]} : vector<20x16xf32> to vector<16x16xf32>
    %450 = vector.broadcast %268 : f32 to vector<16x16xf32>
    %451 = arith.mulf %450, %449 : vector<16x16xf32>
    %452 = arith.addf %448, %451 : vector<16x16xf32>
    %453 = vector.extract_strided_slice %403 {offsets = [2, 0], sizes = [16, 16], strides = [1, 1]} : vector<20x16xf32> to vector<16x16xf32>
    %454 = vector.broadcast %269 : f32 to vector<16x16xf32>
    %455 = arith.mulf %454, %453 : vector<16x16xf32>
    %456 = arith.addf %452, %455 : vector<16x16xf32>
    %457 = vector.extract_strided_slice %404 {offsets = [2, 0], sizes = [16, 16], strides = [1, 1]} : vector<20x16xf32> to vector<16x16xf32>
    %458 = vector.broadcast %270 : f32 to vector<16x16xf32>
    %459 = arith.mulf %458, %457 : vector<16x16xf32>
    %460 = arith.addf %456, %459 : vector<16x16xf32>
    %461 = vector.extract_strided_slice %405 {offsets = [2, 0], sizes = [16, 16], strides = [1, 1]} : vector<20x16xf32> to vector<16x16xf32>
    %462 = vector.broadcast %271 : f32 to vector<16x16xf32>
    %463 = arith.mulf %462, %461 : vector<16x16xf32>
    %464 = arith.addf %460, %463 : vector<16x16xf32>
    %465 = vector.extract_strided_slice %401 {offsets = [3, 0], sizes = [16, 16], strides = [1, 1]} : vector<20x16xf32> to vector<16x16xf32>
    %466 = vector.broadcast %272 : f32 to vector<16x16xf32>
    %467 = arith.mulf %466, %465 : vector<16x16xf32>
    %468 = arith.addf %464, %467 : vector<16x16xf32>
    %469 = vector.extract_strided_slice %402 {offsets = [3, 0], sizes = [16, 16], strides = [1, 1]} : vector<20x16xf32> to vector<16x16xf32>
    %470 = vector.broadcast %273 : f32 to vector<16x16xf32>
    %471 = arith.mulf %470, %469 : vector<16x16xf32>
    %472 = arith.addf %468, %471 : vector<16x16xf32>
    %473 = vector.extract_strided_slice %403 {offsets = [3, 0], sizes = [16, 16], strides = [1, 1]} : vector<20x16xf32> to vector<16x16xf32>
    %474 = vector.broadcast %274 : f32 to vector<16x16xf32>
    %475 = arith.mulf %474, %473 : vector<16x16xf32>
    %476 = arith.addf %472, %475 : vector<16x16xf32>
    %477 = vector.extract_strided_slice %404 {offsets = [3, 0], sizes = [16, 16], strides = [1, 1]} : vector<20x16xf32> to vector<16x16xf32>
    %478 = vector.broadcast %275 : f32 to vector<16x16xf32>
    %479 = arith.mulf %478, %477 : vector<16x16xf32>
    %480 = arith.addf %476, %479 : vector<16x16xf32>
    %481 = vector.extract_strided_slice %405 {offsets = [3, 0], sizes = [16, 16], strides = [1, 1]} : vector<20x16xf32> to vector<16x16xf32>
    %482 = vector.broadcast %276 : f32 to vector<16x16xf32>
    %483 = arith.mulf %482, %481 : vector<16x16xf32>
    %484 = arith.addf %480, %483 : vector<16x16xf32>
    %485 = vector.extract_strided_slice %401 {offsets = [4, 0], sizes = [16, 16], strides = [1, 1]} : vector<20x16xf32> to vector<16x16xf32>
    %486 = vector.broadcast %277 : f32 to vector<16x16xf32>
    %487 = arith.mulf %486, %485 : vector<16x16xf32>
    %488 = arith.addf %484, %487 : vector<16x16xf32>
    %489 = vector.extract_strided_slice %402 {offsets = [4, 0], sizes = [16, 16], strides = [1, 1]} : vector<20x16xf32> to vector<16x16xf32>
    %490 = vector.broadcast %278 : f32 to vector<16x16xf32>
    %491 = arith.mulf %490, %489 : vector<16x16xf32>
    %492 = arith.addf %488, %491 : vector<16x16xf32>
    %493 = vector.extract_strided_slice %403 {offsets = [4, 0], sizes = [16, 16], strides = [1, 1]} : vector<20x16xf32> to vector<16x16xf32>
    %494 = vector.broadcast %279 : f32 to vector<16x16xf32>
    %495 = arith.mulf %494, %493 : vector<16x16xf32>
    %496 = arith.addf %492, %495 : vector<16x16xf32>
    %497 = vector.extract_strided_slice %404 {offsets = [4, 0], sizes = [16, 16], strides = [1, 1]} : vector<20x16xf32> to vector<16x16xf32>
    %498 = vector.broadcast %280 : f32 to vector<16x16xf32>
    %499 = arith.mulf %498, %497 : vector<16x16xf32>
    %500 = arith.addf %496, %499 : vector<16x16xf32>
    %501 = vector.extract_strided_slice %405 {offsets = [4, 0], sizes = [16, 16], strides = [1, 1]} : vector<20x16xf32> to vector<16x16xf32>
    %502 = vector.broadcast %281 : f32 to vector<16x16xf32>
    %503 = arith.mulf %502, %501 : vector<16x16xf32>
    %504 = arith.addf %500, %503 : vector<16x16xf32>
    %505 = arith.addf %254, %504 : vector<16x16xf32>
    %506 = arith.mulf %17, %505 : vector<16x16xf32>
    %507 = arith.addf %256, %506 : vector<16x16xf32>
    %c0_203 = arith.constant 0 : index
    %c2_204 = arith.constant 2 : index
    %c0_205 = arith.constant 0 : index
    %c0_206 = arith.constant 0 : index
    %508 = vector.load %arg7[%c0_203, %c2_204, %c0_205, %c0_206] : memref<1x4x16x16xf32, #tpu.memory_space<vmem>>, vector<1x1x16x16xf32>
    %509 = vector.shape_cast %508 : vector<1x1x16x16xf32> to vector<16x16xf32>
    %510 = vector.shape_cast %507 : vector<16x16xf32> to vector<1x1x16x16xf32>
    tpu.vector_store %arg7[%c0_203, %c2_204, %c0_205, %c0_206], %510 {strides = array<i32>} : memref<1x4x16x16xf32, #tpu.memory_space<vmem>>, vector<1x1x16x16xf32>,
    %c2_207 = arith.constant 2 : index
    %c2_208 = arith.constant 2 : index
    %511 = vector.load %arg8[%c2_207, %c2_208] : memref<20x20xf32, #tpu.memory_space<vmem>>, vector<16x16xf32>
    tpu.vector_store %arg8[%c2_207, %c2_208], %507 {strides = array<i32>} : memref<20x20xf32, #tpu.memory_space<vmem>>, vector<16x16xf32>,
    %c0_209 = arith.constant 0 : index
    %c0_210 = arith.constant 0 : index
    %512 = vector.load %arg8[%c0_209, %c0_210] : memref<20x20xf32, #tpu.memory_space<vmem>>, vector<20x16xf32>
    %c0_211 = arith.constant 0 : index
    %c1_212 = arith.constant 1 : index
    %513 = vector.load %arg8[%c0_211, %c1_212] : memref<20x20xf32, #tpu.memory_space<vmem>>, vector<20x16xf32>
    %c0_213 = arith.constant 0 : index
    %c2_214 = arith.constant 2 : index
    %514 = vector.load %arg8[%c0_213, %c2_214] : memref<20x20xf32, #tpu.memory_space<vmem>>, vector<20x16xf32>
    %c0_215 = arith.constant 0 : index
    %c3_216 = arith.constant 3 : index
    %515 = vector.load %arg8[%c0_215, %c3_216] : memref<20x20xf32, #tpu.memory_space<vmem>>, vector<20x16xf32>
    %c0_217 = arith.constant 0 : index
    %c4_218 = arith.constant 4 : index
    %516 = vector.load %arg8[%c0_217, %c4_218] : memref<20x20xf32, #tpu.memory_space<vmem>>, vector<20x16xf32>
    %517 = vector.extract_strided_slice %512 {offsets = [0, 0], sizes = [16, 16], strides = [1, 1]} : vector<20x16xf32> to vector<16x16xf32>
    %518 = vector.broadcast %257 : f32 to vector<16x16xf32>
    %519 = arith.mulf %518, %517 : vector<16x16xf32>
    %520 = vector.extract_strided_slice %513 {offsets = [0, 0], sizes = [16, 16], strides = [1, 1]} : vector<20x16xf32> to vector<16x16xf32>
    %521 = vector.broadcast %258 : f32 to vector<16x16xf32>
    %522 = arith.mulf %521, %520 : vector<16x16xf32>
    %523 = arith.addf %519, %522 : vector<16x16xf32>
    %524 = vector.extract_strided_slice %514 {offsets = [0, 0], sizes = [16, 16], strides = [1, 1]} : vector<20x16xf32> to vector<16x16xf32>
    %525 = vector.broadcast %259 : f32 to vector<16x16xf32>
    %526 = arith.mulf %525, %524 : vector<16x16xf32>
    %527 = arith.addf %523, %526 : vector<16x16xf32>
    %528 = vector.extract_strided_slice %515 {offsets = [0, 0], sizes = [16, 16], strides = [1, 1]} : vector<20x16xf32> to vector<16x16xf32>
    %529 = vector.broadcast %260 : f32 to vector<16x16xf32>
    %530 = arith.mulf %529, %528 : vector<16x16xf32>
    %531 = arith.addf %527, %530 : vector<16x16xf32>
    %532 = vector.extract_strided_slice %516 {offsets = [0, 0], sizes = [16, 16], strides = [1, 1]} : vector<20x16xf32> to vector<16x16xf32>
    %533 = vector.broadcast %261 : f32 to vector<16x16xf32>
    %534 = arith.mulf %533, %532 : vector<16x16xf32>
    %535 = arith.addf %531, %534 : vector<16x16xf32>
    %536 = vector.extract_strided_slice %512 {offsets = [1, 0], sizes = [16, 16], strides = [1, 1]} : vector<20x16xf32> to vector<16x16xf32>
    %537 = vector.broadcast %262 : f32 to vector<16x16xf32>
    %538 = arith.mulf %537, %536 : vector<16x16xf32>
    %539 = arith.addf %535, %538 : vector<16x16xf32>
    %540 = vector.extract_strided_slice %513 {offsets = [1, 0], sizes = [16, 16], strides = [1, 1]} : vector<20x16xf32> to vector<16x16xf32>
    %541 = vector.broadcast %263 : f32 to vector<16x16xf32>
    %542 = arith.mulf %541, %540 : vector<16x16xf32>
    %543 = arith.addf %539, %542 : vector<16x16xf32>
    %544 = vector.extract_strided_slice %514 {offsets = [1, 0], sizes = [16, 16], strides = [1, 1]} : vector<20x16xf32> to vector<16x16xf32>
    %545 = vector.broadcast %264 : f32 to vector<16x16xf32>
    %546 = arith.mulf %545, %544 : vector<16x16xf32>
    %547 = arith.addf %543, %546 : vector<16x16xf32>
    %548 = vector.extract_strided_slice %515 {offsets = [1, 0], sizes = [16, 16], strides = [1, 1]} : vector<20x16xf32> to vector<16x16xf32>
    %549 = vector.broadcast %265 : f32 to vector<16x16xf32>
    %550 = arith.mulf %549, %548 : vector<16x16xf32>
    %551 = arith.addf %547, %550 : vector<16x16xf32>
    %552 = vector.extract_strided_slice %516 {offsets = [1, 0], sizes = [16, 16], strides = [1, 1]} : vector<20x16xf32> to vector<16x16xf32>
    %553 = vector.broadcast %266 : f32 to vector<16x16xf32>
    %554 = arith.mulf %553, %552 : vector<16x16xf32>
    %555 = arith.addf %551, %554 : vector<16x16xf32>
    %556 = vector.extract_strided_slice %512 {offsets = [2, 0], sizes = [16, 16], strides = [1, 1]} : vector<20x16xf32> to vector<16x16xf32>
    %557 = vector.broadcast %267 : f32 to vector<16x16xf32>
    %558 = arith.mulf %557, %556 : vector<16x16xf32>
    %559 = arith.addf %555, %558 : vector<16x16xf32>
    %560 = vector.extract_strided_slice %513 {offsets = [2, 0], sizes = [16, 16], strides = [1, 1]} : vector<20x16xf32> to vector<16x16xf32>
    %561 = vector.broadcast %268 : f32 to vector<16x16xf32>
    %562 = arith.mulf %561, %560 : vector<16x16xf32>
    %563 = arith.addf %559, %562 : vector<16x16xf32>
    %564 = vector.extract_strided_slice %514 {offsets = [2, 0], sizes = [16, 16], strides = [1, 1]} : vector<20x16xf32> to vector<16x16xf32>
    %565 = vector.broadcast %269 : f32 to vector<16x16xf32>
    %566 = arith.mulf %565, %564 : vector<16x16xf32>
    %567 = arith.addf %563, %566 : vector<16x16xf32>
    %568 = vector.extract_strided_slice %515 {offsets = [2, 0], sizes = [16, 16], strides = [1, 1]} : vector<20x16xf32> to vector<16x16xf32>
    %569 = vector.broadcast %270 : f32 to vector<16x16xf32>
    %570 = arith.mulf %569, %568 : vector<16x16xf32>
    %571 = arith.addf %567, %570 : vector<16x16xf32>
    %572 = vector.extract_strided_slice %516 {offsets = [2, 0], sizes = [16, 16], strides = [1, 1]} : vector<20x16xf32> to vector<16x16xf32>
    %573 = vector.broadcast %271 : f32 to vector<16x16xf32>
    %574 = arith.mulf %573, %572 : vector<16x16xf32>
    %575 = arith.addf %571, %574 : vector<16x16xf32>
    %576 = vector.extract_strided_slice %512 {offsets = [3, 0], sizes = [16, 16], strides = [1, 1]} : vector<20x16xf32> to vector<16x16xf32>
    %577 = vector.broadcast %272 : f32 to vector<16x16xf32>
    %578 = arith.mulf %577, %576 : vector<16x16xf32>
    %579 = arith.addf %575, %578 : vector<16x16xf32>
    %580 = vector.extract_strided_slice %513 {offsets = [3, 0], sizes = [16, 16], strides = [1, 1]} : vector<20x16xf32> to vector<16x16xf32>
    %581 = vector.broadcast %273 : f32 to vector<16x16xf32>
    %582 = arith.mulf %581, %580 : vector<16x16xf32>
    %583 = arith.addf %579, %582 : vector<16x16xf32>
    %584 = vector.extract_strided_slice %514 {offsets = [3, 0], sizes = [16, 16], strides = [1, 1]} : vector<20x16xf32> to vector<16x16xf32>
    %585 = vector.broadcast %274 : f32 to vector<16x16xf32>
    %586 = arith.mulf %585, %584 : vector<16x16xf32>
    %587 = arith.addf %583, %586 : vector<16x16xf32>
    %588 = vector.extract_strided_slice %515 {offsets = [3, 0], sizes = [16, 16], strides = [1, 1]} : vector<20x16xf32> to vector<16x16xf32>
    %589 = vector.broadcast %275 : f32 to vector<16x16xf32>
    %590 = arith.mulf %589, %588 : vector<16x16xf32>
    %591 = arith.addf %587, %590 : vector<16x16xf32>
    %592 = vector.extract_strided_slice %516 {offsets = [3, 0], sizes = [16, 16], strides = [1, 1]} : vector<20x16xf32> to vector<16x16xf32>
    %593 = vector.broadcast %276 : f32 to vector<16x16xf32>
    %594 = arith.mulf %593, %592 : vector<16x16xf32>
    %595 = arith.addf %591, %594 : vector<16x16xf32>
    %596 = vector.extract_strided_slice %512 {offsets = [4, 0], sizes = [16, 16], strides = [1, 1]} : vector<20x16xf32> to vector<16x16xf32>
    %597 = vector.broadcast %277 : f32 to vector<16x16xf32>
    %598 = arith.mulf %597, %596 : vector<16x16xf32>
    %599 = arith.addf %595, %598 : vector<16x16xf32>
    %600 = vector.extract_strided_slice %513 {offsets = [4, 0], sizes = [16, 16], strides = [1, 1]} : vector<20x16xf32> to vector<16x16xf32>
    %601 = vector.broadcast %278 : f32 to vector<16x16xf32>
    %602 = arith.mulf %601, %600 : vector<16x16xf32>
    %603 = arith.addf %599, %602 : vector<16x16xf32>
    %604 = vector.extract_strided_slice %514 {offsets = [4, 0], sizes = [16, 16], strides = [1, 1]} : vector<20x16xf32> to vector<16x16xf32>
    %605 = vector.broadcast %279 : f32 to vector<16x16xf32>
    %606 = arith.mulf %605, %604 : vector<16x16xf32>
    %607 = arith.addf %603, %606 : vector<16x16xf32>
    %608 = vector.extract_strided_slice %515 {offsets = [4, 0], sizes = [16, 16], strides = [1, 1]} : vector<20x16xf32> to vector<16x16xf32>
    %609 = vector.broadcast %280 : f32 to vector<16x16xf32>
    %610 = arith.mulf %609, %608 : vector<16x16xf32>
    %611 = arith.addf %607, %610 : vector<16x16xf32>
    %612 = vector.extract_strided_slice %516 {offsets = [4, 0], sizes = [16, 16], strides = [1, 1]} : vector<20x16xf32> to vector<16x16xf32>
    %613 = vector.broadcast %281 : f32 to vector<16x16xf32>
    %614 = arith.mulf %613, %612 : vector<16x16xf32>
    %615 = arith.addf %611, %614 : vector<16x16xf32>
    %616 = arith.addf %254, %615 : vector<16x16xf32>
    %617 = arith.mulf %17, %616 : vector<16x16xf32>
    %618 = arith.addf %256, %617 : vector<16x16xf32>
    %c0_219 = arith.constant 0 : index
    %c3_220 = arith.constant 3 : index
    %c0_221 = arith.constant 0 : index
    %c0_222 = arith.constant 0 : index
    %619 = vector.load %arg7[%c0_219, %c3_220, %c0_221, %c0_222] : memref<1x4x16x16xf32, #tpu.memory_space<vmem>>, vector<1x1x16x16xf32>
    %620 = vector.shape_cast %619 : vector<1x1x16x16xf32> to vector<16x16xf32>
    %621 = vector.shape_cast %618 : vector<16x16xf32> to vector<1x1x16x16xf32>
    tpu.vector_store %arg7[%c0_219, %c3_220, %c0_221, %c0_222], %621 {strides = array<i32>} : memref<1x4x16x16xf32, #tpu.memory_space<vmem>>, vector<1x1x16x16xf32>,
    return
  }
  func.func @transform_0(%arg0: i32) -> (i32, i32, i32) {
    %c0_i32 = arith.constant 0 : i32
    %c0_i32_0 = arith.constant 0 : i32
    %c0_i32_1 = arith.constant 0 : i32
    return %arg0, %c0_i32, %c0_i32_0 : i32, i32, i32
  }
  func.func @transform_1(%arg0: i32) -> (i32, i32, i32) {
    %c0_i32 = arith.constant 0 : i32
    %c0_i32_0 = arith.constant 0 : i32
    %c0_i32_1 = arith.constant 0 : i32
    %c0_i32_2 = arith.constant 0 : i32
    return %c0_i32, %c0_i32_0, %c0_i32_1 : i32, i32, i32
  }
  func.func @transform_2(%arg0: i32) -> (i32, i32, i32) {
    %c0_i32 = arith.constant 0 : i32
    %c0_i32_0 = arith.constant 0 : i32
    %c0_i32_1 = arith.constant 0 : i32
    %c0_i32_2 = arith.constant 0 : i32
    return %c0_i32, %c0_i32_0, %c0_i32_1 : i32, i32, i32
  }
  func.func @transform_3(%arg0: i32) -> (i32, i32) {
    %c0_i32 = arith.constant 0 : i32
    %c0_i32_0 = arith.constant 0 : i32
    %c0_i32_1 = arith.constant 0 : i32
    return %c0_i32, %c0_i32_0 : i32, i32
  }
  func.func @transform_4(%arg0: i32) -> (i32, i32) {
    %c0_i32 = arith.constant 0 : i32
    %c0_i32_0 = arith.constant 0 : i32
    %c0_i32_1 = arith.constant 0 : i32
    return %c0_i32, %c0_i32_0 : i32, i32
  }
  func.func @transform_5(%arg0: i32) -> i32 {
    %c0_i32 = arith.constant 0 : i32
    %c0_i32_0 = arith.constant 0 : i32
    return %c0_i32 : i32
  }
  func.func @transform_6(%arg0: i32) -> (i32, i32, i32, i32) {
    %c0_i32 = arith.constant 0 : i32
    %c0_i32_0 = arith.constant 0 : i32
    %c0_i32_1 = arith.constant 0 : i32
    %c0_i32_2 = arith.constant 0 : i32
    return %arg0, %c0_i32, %c0_i32_0, %c0_i32_1 : i32, i32, i32, i32
  }
}

</mosaic_0001>

<llo_original>
// kernel: tpu_custom_call.1
$region0: #{tpu_custom_call.1}
  #allocation0 [shape = 'u32[]', space=smem, size = 0x4, offset = 0x4, fixed_abs, tag = 'smem constant byte address 0x4 - core index']
  #allocation1 [shape = 'u32[144,128]{1,0:T(1,128)}', space=vmem, size = 0x12000, scoped, tag = 'internal scratch']
  #allocation2 [shape = 'f32[20,20]{1,0:T(8,128)}', space=vmem, size = 0x3000, scoped, tag = 'scratch operand']
  %s0 = inlined_call_operand.vmem [shape: f32[2,20,80], index: 0, kind: input, shape index: {}]
  %s1 = inlined_call_operand.hbm [shape: f32[25,16,76], index: 1, kind: input, shape index: {}]
  %s2 = inlined_call_operand.hbm [shape: f32[25,16,76], index: 2, kind: input, shape index: {}]
  %s3 = inlined_call_operand.vmem [shape: f32[16,16], index: 3, kind: input, shape index: {}]
  %s4 = inlined_call_operand.vmem [shape: f32[16,16], index: 4, kind: input, shape index: {}]
  %s5 = inlined_call_operand.vmem [shape: f32[25], index: 5, kind: input, shape index: {}]
  %s6 = inlined_call_operand.hbm [shape: f32[2,4,16,16], index: 6, kind: output, shape index: {}]
  %s7 = sld [smem:[#allocation0]]
  $region69: #{tpu_custom_call.1} parent=0
    _
  %s9 = ssub.s32 1, %s7
  %s10 = scalar_select 0, %s9, %s7
  $region1: #{tpu_custom_call.1} parent=0
    #allocation3 [shape = 'u8[204800]{0}', space=vmem, size = 0x32000, scoped, tag = 'input window, operand 1, single buffered']
    #allocation4 [shape = 's32[2]{0}', space=sflag, size = 0x8, scoped, tag = 'scoped memory for tpu_custom_call.1']
    #allocation5 [shape = 's32[2]{0}', space=sflag, size = 0x8, scoped, tag = 'scoped memory for tpu_custom_call.1']
    #allocation6 [shape = 's32[2]{0}', space=sflag, size = 0x8, scoped, tag = 'scoped memory for tpu_custom_call.1']
    #allocation7 [shape = 'u8[204800]{0}', space=vmem, size = 0x32000, scoped, tag = 'input window, operand 2, single buffered']
    #allocation8 [shape = 's32[1]{0}', space=sflag, size = 0x4, scoped, tag = 'scoped memory for tpu_custom_call.1']
    #allocation9 [shape = 'u8[512]{0}', space=smem, size = 0x200, scoped, tag = 'input window, operand 5, single buffered']
    #allocation10 [shape = 'u8[65536]{0}', space=vmem, size = 0x10000, scoped, tag = 'output window, operand 0']
    %11 = vsyncpa [#allocation4], 0
    %12 = vsyncpa [#allocation8], 0
    %13 = vsyncpa [#allocation6], 0
    %14 = vsyncpa [#allocation5], 0
    %s15 = scalar_lea.sflag [#allocation5], 1
    %16 = vsyncpa %s15, 0
    loop: start=0, step=1, limit=4
    $region2: #{tpu_custom_call.1} parent=1 // loop_pre_header
      _
    $region3: #{tpu_custom_call.1} parent=1 // loop_header
      %s18 = sphi 0, %s22
      %p19 = scmp.ge.s32.totalorder %s18, 4
      %s28 = sphi 0, %s30
      %s31 = sphi 0, %s28
      %s32 = sphi 0, %s31
      %s48 = sphi 0, %s32
      %s52 = sphi 0, %s52
      %s54 = sphi 0, %s52
      %s55 = sphi 0, %s54
      %s69 = sphi 0, %s55
      %s73 = sphi 0, %s73
      %s75 = sphi 0, %s73
      %s76 = sphi 0, %s75
      %s90 = sphi 0, %s76
      %s94 = sphi 0, %s94
      %s96 = sphi 0, %s94
      %s97 = sphi 0, %s96
      %s111 = sphi 0, %s97
      %s115 = sphi 0, %s115
      %s117 = sphi 0, %s115
      %s118 = sphi 0, %s117
      %s132 = sphi 0, %s118
      %s136 = sphi 0, %s136
      %s138 = sphi 0, %s136
      %s139 = sphi 0, %s138
      %s153 = sphi 0, %s139
      %s159 = sphi 0, %s161
      %s162 = sphi 0, %s159
      %s163 = sphi 0, %s162
      %s179 = sphi 0, %s163
    $region4: #{tpu_custom_call.1} parent=1 // loop_header_branch
      %21 = sbr.rel (%p19) target = $region8
    $region5: #{tpu_custom_call.1} parent=1 // loop_body
      %s23 = ssub.s32 %s18, 1
      %s24 = ssub.s32 %s18, 2
      %s25 = sadd.s32 %s18, 1
      %s26 = ssub.s32 %s18, %s25
      %p27 = scmp.eq.s32.totalorder %s26, 0
      %s29 = sadd.s32 %s28, 1
      %s30 = scalar_select %p27, %s28, %s29
      %p33 = pneg %p27
      %p34 = scmp.eq.s32.totalorder %s18, 1
      %p35 = por %p33, %p34
      %p36 = scmp.ne.s32.totalorder %s28, %s31
      %p37 = scmp.eq.s32.totalorder %s18, 0
      %p38 = por %p36, %p37
      %p39 = scmp.ne.s32.totalorder %s28, %s31
      %p40 = scmp.eq.s32.totalorder %s23, 1
      %p41 = por %p39, %p40
      %p42 = scmp.ne.s32.totalorder %s31, %s32
      %p43 = scmp.eq.s32.totalorder %s23, 0
      %p44 = por %p42, %p43
      %p45 = scmp.ne.s32.totalorder %s31, %s32
      %p46 = scmp.eq.s32.totalorder %s24, 1
      %p47 = por %p45, %p46
      %p49 = scmp.ne.s32.totalorder %s32, %s48
      %p50 = scmp.eq.s32.totalorder %s24, 0
      %p51 = por %p49, %p50
      %s53 = sadd.s32 %s52, 1
      %p56 = scmp.eq.s32.totalorder %s18, 1
      %p57 = scmp.ne.s32.totalorder %s52, %s54
      %p58 = scmp.eq.s32.totalorder %s18, 0
      %p59 = por %p57, %p58
      %p60 = scmp.ne.s32.totalorder %s52, %s54
      %p61 = scmp.eq.s32.totalorder %s23, 1
      %p62 = por %p60, %p61
      %p63 = scmp.ne.s32.totalorder %s54, %s55
      %p64 = scmp.eq.s32.totalorder %s23, 0
      %p65 = por %p63, %p64
      %p66 = scmp.ne.s32.totalorder %s54, %s55
      %p67 = scmp.eq.s32.totalorder %s24, 1
      %p68 = por %p66, %p67
      %p70 = scmp.ne.s32.totalorder %s55, %s69
      %p71 = scmp.eq.s32.totalorder %s24, 0
      %p72 = por %p70, %p71
      %s74 = sadd.s32 %s73, 1
      %p77 = scmp.eq.s32.totalorder %s18, 1
      %p78 = scmp.ne.s32.totalorder %s73, %s75
      %p79 = scmp.eq.s32.totalorder %s18, 0
      %p80 = por %p78, %p79
      %p81 = scmp.ne.s32.totalorder %s73, %s75
      %p82 = scmp.eq.s32.totalorder %s23, 1
      %p83 = por %p81, %p82
      %p84 = scmp.ne.s32.totalorder %s75, %s76
      %p85 = scmp.eq.s32.totalorder %s23, 0
      %p86 = por %p84, %p85
      %p87 = scmp.ne.s32.totalorder %s75, %s76
      %p88 = scmp.eq.s32.totalorder %s24, 1
      %p89 = por %p87, %p88
      %p91 = scmp.ne.s32.totalorder %s76, %s90
      %p92 = scmp.eq.s32.totalorder %s24, 0
      %p93 = por %p91, %p92
      %s95 = sadd.s32 %s94, 1
      %p98 = scmp.eq.s32.totalorder %s18, 1
      %p99 = scmp.ne.s32.totalorder %s94, %s96
      %p100 = scmp.eq.s32.totalorder %s18, 0
      %p101 = por %p99, %p100
      %p102 = scmp.ne.s32.totalorder %s94, %s96
      %p103 = scmp.eq.s32.totalorder %s23, 1
      %p104 = por %p102, %p103
      %p105 = scmp.ne.s32.totalorder %s96, %s97
      %p106 = scmp.eq.s32.totalorder %s23, 0
      %p107 = por %p105, %p106
      %p108 = scmp.ne.s32.totalorder %s96, %s97
      %p109 = scmp.eq.s32.totalorder %s24, 1
      %p110 = por %p108, %p109
      %p112 = scmp.ne.s32.totalorder %s97, %s111
      %p113 = scmp.eq.s32.totalorder %s24, 0
      %p114 = por %p112, %p113
      %s116 = sadd.s32 %s115, 1
      %p119 = scmp.eq.s32.totalorder %s18, 1
      %p120 = scmp.ne.s32.totalorder %s115, %s117
      %p121 = scmp.eq.s32.totalorder %s18, 0
      %p122 = por %p120, %p121
      %p123 = scmp.ne.s32.totalorder %s115, %s117
      %p124 = scmp.eq.s32.totalorder %s23, 1
      %p125 = por %p123, %p124
      %p126 = scmp.ne.s32.totalorder %s117, %s118
      %p127 = scmp.eq.s32.totalorder %s23, 0
      %p128 = por %p126, %p127
      %p129 = scmp.ne.s32.totalorder %s117, %s118
      %p130 = scmp.eq.s32.totalorder %s24, 1
      %p131 = por %p129, %p130
      %p133 = scmp.ne.s32.totalorder %s118, %s132
      %p134 = scmp.eq.s32.totalorder %s24, 0
      %p135 = por %p133, %p134
      %s137 = sadd.s32 %s136, 1
      %p140 = scmp.eq.s32.totalorder %s18, 1
      %p141 = scmp.ne.s32.totalorder %s136, %s138
      %p142 = scmp.eq.s32.totalorder %s18, 0
      %p143 = por %p141, %p142
      %p144 = scmp.ne.s32.totalorder %s136, %s138
      %p145 = scmp.eq.s32.totalorder %s23, 1
      %p146 = por %p144, %p145
      %p147 = scmp.ne.s32.totalorder %s138, %s139
      %p148 = scmp.eq.s32.totalorder %s23, 0
      %p149 = por %p147, %p148
      %p150 = scmp.ne.s32.totalorder %s138, %s139
      %p151 = scmp.eq.s32.totalorder %s24, 1
      %p152 = por %p150, %p151
      %p154 = scmp.ne.s32.totalorder %s139, %s153
      %p155 = scmp.eq.s32.totalorder %s24, 0
      %p156 = por %p154, %p155
      %s157 = ssub.s32 %s18, %s25
      %p158 = scmp.eq.s32.totalorder %s157, 0
      %s160 = sadd.s32 %s159, 1
      %s161 = scalar_select %p158, %s159, %s160
      %p164 = pneg %p158
      %p165 = scmp.eq.s32.totalorder %s18, 1
      %p166 = por %p164, %p165
      %p167 = scmp.ne.s32.totalorder %s159, %s162
      %p168 = scmp.eq.s32.totalorder %s18, 0
      %p169 = por %p167, %p168
      %p170 = scmp.ne.s32.totalorder %s159, %s162
      %p171 = scmp.eq.s32.totalorder %s23, 1
      %p172 = por %p170, %p171
      %p173 = scmp.ne.s32.totalorder %s162, %s163
      %p174 = scmp.eq.s32.totalorder %s23, 0
      %p175 = por %p173, %p174
      %p176 = scmp.ne.s32.totalorder %s162, %s163
      %p177 = scmp.eq.s32.totalorder %s24, 1
      %p178 = por %p176, %p177
      %p180 = scmp.ne.s32.totalorder %s163, %s179
      %p181 = scmp.eq.s32.totalorder %s24, 0
      %p182 = por %p180, %p181
      %p183 = scmp.le.s32.totalorder 1, %s18
      %p184 = scmp.lt.s32.totalorder %s18, 3
      %p185 = pnand %p183, %p184
      %p186 = pneg %p185
      // Predicated region
      $region9: #{tpu_custom_call.1} parent=5 // pred_check
        _
      $region10: #{tpu_custom_call.1} parent=5 // pred_check_branch
        %188 = sbr.rel (%p185) target = $region12
      $region11: #{tpu_custom_call.1} parent=5 // pred_region
        %s189 = ssub.s32 %s18, 1
        // Predicated region
        $region13: #{tpu_custom_call.1} parent=11 // pred_check
          %p190 = pneg %p65
        $region14: #{tpu_custom_call.1} parent=11 // pred_check_branch
          %192 = sbr.rel (%p190) target = $region16
        $region15: #{tpu_custom_call.1} parent=11 // pred_region
          %s194 = ssub.s32 6400, 6400
          %195 = vsyncadd [#allocation4], %s194
          %s196 = sshll.u32 [#allocation3], 4
          %s197 = int_to_ptr.vmem [resolvable:$true] %s196
          %202 = dma.hbm_to_vmem [thread:$0]  %s1, 6400, %s197, [#allocation4], 128, 128, 8
        $region16: #{tpu_custom_call.1} parent=11 // pred_fallthru
          _
        // Predicated region
        $region17: #{tpu_custom_call.1} parent=11 // pred_check
          %p203 = pneg %p86
        $region18: #{tpu_custom_call.1} parent=11 // pred_check_branch
          %205 = sbr.rel (%p203) target = $region20
        $region19: #{tpu_custom_call.1} parent=11 // pred_region
          %s207 = ssub.s32 6400, 6400
          %208 = vsyncadd [#allocation8], %s207
          %s209 = sshll.u32 [#allocation7], 4
          %s210 = int_to_ptr.vmem [resolvable:$true] %s209
          %215 = dma.hbm_to_vmem [thread:$0]  %s2, 6400, %s210, [#allocation8], 128, 128, 8
        $region20: #{tpu_custom_call.1} parent=11 // pred_fallthru
          _
        // Predicated region
        $region21: #{tpu_custom_call.1} parent=11 // pred_check
          %p216 = pneg %p107
        $region22: #{tpu_custom_call.1} parent=11 // pred_check_branch
          %218 = sbr.rel (%p216) target = $region24
        $region23: #{tpu_custom_call.1} parent=11 // pred_region
          _
        $region24: #{tpu_custom_call.1} parent=11 // pred_fallthru
          _
        // Predicated region
        $region25: #{tpu_custom_call.1} parent=11 // pred_check
          %p219 = pneg %p128
        $region26: #{tpu_custom_call.1} parent=11 // pred_check_branch
          %221 = sbr.rel (%p219) target = $region28
        $region27: #{tpu_custom_call.1} parent=11 // pred_region
          _
        $region28: #{tpu_custom_call.1} parent=11 // pred_fallthru
          _
        // Predicated region
        $region29: #{tpu_custom_call.1} parent=11 // pred_check
          %p222 = pneg %p149
        $region30: #{tpu_custom_call.1} parent=11 // pred_check_branch
          %224 = sbr.rel (%p222) target = $region32
        $region31: #{tpu_custom_call.1} parent=11 // pred_region
          %s226 = ssub.s32 16, 16
          %227 = vsyncadd [#allocation6], %s226
          %s229 = sshll.u32 %s5, 4
          %s230 = int_to_ptr.vmem [resolvable:$true] %s229
          %232 = dma.vmem_to_smem %s230, 16, [#allocation9], [#allocation6]
        $region32: #{tpu_custom_call.1} parent=11 // pred_fallthru
          _
      $region12: #{tpu_custom_call.1} parent=5 // pred_fallthru
        _
      %p233 = scmp.lt.s32.totalorder %s18, 2
      // Predicated region
      $region33: #{tpu_custom_call.1} parent=5 // pred_check
        %p234 = pneg %p233
      $region34: #{tpu_custom_call.1} parent=5 // pred_check_branch
        %236 = sbr.rel (%p234) target = $region36
      $region35: #{tpu_custom_call.1} parent=5 // pred_region
        // Predicated region
        $region37: #{tpu_custom_call.1} parent=35 // pred_check
          %p237 = pneg %p38
        $region38: #{tpu_custom_call.1} parent=35 // pred_check_branch
          %239 = sbr.rel (%p237) target = $region40
        $region39: #{tpu_custom_call.1} parent=35 // pred_region
          %p240 = scmp.lt.s32.totalorder %s18, 1
          %s241 = scalar_select %p240, %s18, 1
          %s242 = smul.addr %s241, 3
          %s243 = smul.addr %s242, 8
          %s244 = scalar_lea.vmem %s0, %s243
        $region40: #{tpu_custom_call.1} parent=35 // pred_fallthru
          _
      $region36: #{tpu_custom_call.1} parent=5 // pred_fallthru
        _
      %p245 = scmp.le.s32.totalorder 1, %s18
      %p246 = scmp.lt.s32.totalorder %s18, 3
      %p247 = pnand %p245, %p246
      %p248 = pneg %p247
      // Predicated region
      $region41: #{tpu_custom_call.1} parent=5 // pred_check
        _
      $region42: #{tpu_custom_call.1} parent=5 // pred_check_branch
        %250 = sbr.rel (%p247) target = $region44
      $region43: #{tpu_custom_call.1} parent=5 // pred_region
        %s251 = ssub.s32 %s18, 1
        // Predicated region
        $region45: #{tpu_custom_call.1} parent=43 // pred_check
          %p252 = pneg %p65
        $region46: #{tpu_custom_call.1} parent=43 // pred_check_branch
          %254 = sbr.rel (%p252) target = $region48
        $region47: #{tpu_custom_call.1} parent=43 // pred_region
          %255 = dma.done [#allocation4], 6400
        $region48: #{tpu_custom_call.1} parent=43 // pred_fallthru
          _
        // Predicated region
        $region49: #{tpu_custom_call.1} parent=43 // pred_check
          %p256 = pneg %p86
        $region50: #{tpu_custom_call.1} parent=43 // pred_check_branch
          %258 = sbr.rel (%p256) target = $region52
        $region51: #{tpu_custom_call.1} parent=43 // pred_region
          %259 = dma.done [#allocation8], 6400
        $region52: #{tpu_custom_call.1} parent=43 // pred_fallthru
          _
        // Predicated region
        $region53: #{tpu_custom_call.1} parent=43 // pred_check
          %p260 = pneg %p149
        $region54: #{tpu_custom_call.1} parent=43 // pred_check_branch
          %262 = sbr.rel (%p260) target = $region56
        $region55: #{tpu_custom_call.1} parent=43 // pred_region
          %263 = dma.done [#allocation6], 16
        $region56: #{tpu_custom_call.1} parent=43 // pred_fallthru
          _
        %264 = sfence
        %p265 = scmp.lt.s32.totalorder %s23, 1
        %s266 = scalar_select %p265, %s23, 1
        %s267 = smul.addr %s266, 3
        %s268 = smul.addr %s267, 8
        %s269 = scalar_lea.vmem %s0, %s268
        %p270 = pneg %p44
        %p271 = pneg %p41
        %p272 = pneg %p65
        %p273 = pneg %p62
        %p274 = pneg %p86
        %p275 = pneg %p83
        %p276 = pneg %p107
        %p277 = pneg %p104
        %p278 = pneg %p128
        %p279 = pneg %p125
        %p280 = pneg %p149
        %p281 = pneg %p146
        %p282 = pneg %p175
        %p283 = pneg %p172
        %s284 = sand.u32 %s162, 1
        %s285 = scalar_lea.sflag [#allocation5], %s284
        %s286 = sand.u32 %s162, 1
        %s287 = smul.addr %s286, 64
        %s288 = scalar_lea.vmem [#allocation10], %s287
        %p289 = scmp.lt.s32.totalorder %s23, 1
        %s290 = scalar_select %p289, %s23, 1
        %s291 = smul.addr %s290, 3
        %s292 = smul.addr %s291, 8
        %s293 = scalar_lea.vmem %s0, %s292
        %v294 = vld [vmem:[%s293] sm:$0xff]
        %v295 = vld [vmem:[%s293 + $0x8] sm:$0xff]
        %v296 = vld [vmem:[%s293 + $0x10] sm:$0xf]
        %v297 = vlaneseq
        %v298 = vshrl.u32 %v297, 7
        %v299 = vadd.s32 %v298, 8
        %vm300 = vcmp.gt.s32.totalorder %v298, 0
        %vm301 = vcmp.gt.s32.totalorder %v299, 0
        %vm302 = vcmp.lt.s32.totalorder %v298, 15
        %vm303 = vcmp.lt.s32.totalorder %v299, 15
        %vm304 = vmand %vm300, %vm302
        %vm305 = vmand %vm301, %vm303
        %v306 = vsel %vm304, 1, 0
        %v307 = vsel %vm305, 1, 0
        %v308 = vcvt.s32.f32 %v306
        %v309 = vcvt.s32.f32 %v307
        %v310 = vld [vmem:[#allocation3] sm:$0xff]
        %v311 = vld [vmem:[#allocation3 + $0x8] sm:$0xff]
        %v312 = vmul.f32 %v310, %v294
        %v313 = vmul.f32 %v311, %v295
        %v314 = vld [vmem:[#allocation7] sm:$0xff]
        %v315 = vld [vmem:[#allocation7 + $0x8] sm:$0xff]
        %v316 = vmul.f32 %v314, %v294
        %v317 = vmul.f32 %v315, %v295
        %s318 = scalar_lea.vmem [#allocation3], 16
        %v319 = vld [vmem:[%s318] sm:$0xff]
        %v320 = vld [vmem:[%s318 + $0x8] sm:$0xff]
        %323 = vrot.lane.b32.xlu0 %v294, 127
        %v324 = vpop.permute.xlu0 %323
        %325 = vrot.lane.b32.xlu0 %v295, 127
        %v326 = vpop.permute.xlu0 %325
        %v329 = vmul.f32 %v319, %v324
        %v330 = vmul.f32 %v320, %v326
        %s331 = scalar_lea.vmem [#allocation7], 16
        %v332 = vld [vmem:[%s331] sm:$0xff]
        %v333 = vld [vmem:[%s331 + $0x8] sm:$0xff]
        %v334 = vmul.f32 %v332, %v324
        %v335 = vmul.f32 %v333, %v326
        %v336 = vadd.f32 %v312, %v329
        %v337 = vadd.f32 %v313, %v330
        %v338 = vadd.f32 %v316, %v334
        %v339 = vadd.f32 %v317, %v335
        %s340 = scalar_lea.vmem [#allocation3], 32
        %v341 = vld [vmem:[%s340] sm:$0xff]
        %v342 = vld [vmem:[%s340 + $0x8] sm:$0xff]
        %343 = vrot.lane.b32.xlu0 %v294, 126
        %v344 = vpop.permute.xlu0 %343
        %345 = vrot.lane.b32.xlu0 %v295, 126
        %v346 = vpop.permute.xlu0 %345
        %v349 = vmul.f32 %v341, %v344
        %v350 = vmul.f32 %v342, %v346
        %s351 = scalar_lea.vmem [#allocation7], 32
        %v352 = vld [vmem:[%s351] sm:$0xff]
        %v353 = vld [vmem:[%s351 + $0x8] sm:$0xff]
        %v354 = vmul.f32 %v352, %v344
        %v355 = vmul.f32 %v353, %v346
        %v356 = vadd.f32 %v336, %v349
        %v357 = vadd.f32 %v337, %v350
        %v358 = vadd.f32 %v338, %v354
        %v359 = vadd.f32 %v339, %v355
        %s360 = scalar_lea.vmem [#allocation3], 48
        %v361 = vld [vmem:[%s360] sm:$0xff]
        %v362 = vld [vmem:[%s360 + $0x8] sm:$0xff]
        %363 = vrot.lane.b32.xlu0 %v294, 125
        %v364 = vpop.permute.xlu0 %363
        %365 = vrot.lane.b32.xlu0 %v295, 125
        %v366 = vpop.permute.xlu0 %365
        %v369 = vmul.f32 %v361, %v364
        %v370 = vmul.f32 %v362, %v366
        %s371 = scalar_lea.vmem [#allocation7], 48
        %v372 = vld [vmem:[%s371] sm:$0xff]
        %v373 = vld [vmem:[%s371 + $0x8] sm:$0xff]
        %v374 = vmul.f32 %v372, %v364
        %v375 = vmul.f32 %v373, %v366
        %v376 = vadd.f32 %v356, %v369
        %v377 = vadd.f32 %v357, %v370
        %v378 = vadd.f32 %v358, %v374
        %v379 = vadd.f32 %v359, %v375
        %s380 = scalar_lea.vmem [#allocation3], 64
        %v381 = vld [vmem:[%s380] sm:$0xff]
        %v382 = vld [vmem:[%s380 + $0x8] sm:$0xff]
        %383 = vrot.lane.b32.xlu0 %v294, 124
        %v384 = vpop.permute.xlu0 %383
        %385 = vrot.lane.b32.xlu0 %v295, 124
        %v386 = vpop.permute.xlu0 %385
        %v389 = vmul.f32 %v381, %v384
        %v390 = vmul.f32 %v382, %v386
        %s391 = scalar_lea.vmem [#allocation7], 64
        %v392 = vld [vmem:[%s391] sm:$0xff]
        %v393 = vld [vmem:[%s391 + $0x8] sm:$0xff]
        %v394 = vmul.f32 %v392, %v384
        %v395 = vmul.f32 %v393, %v386
        %v396 = vadd.f32 %v376, %v389
        %v397 = vadd.f32 %v377, %v390
        %v398 = vadd.f32 %v378, %v394
        %v399 = vadd.f32 %v379, %v395
        %s400 = scalar_lea.vmem [#allocation3], 80
        %v401 = vld [vmem:[%s400] sm:$0xff]
        %v402 = vld [vmem:[%s400 + $0x8] sm:$0xff]
        %vm404 = vcmask 1046528
        %v405 = vrot.slane %v294, 1
        %v406 = vrot.slane %v295, 1
        %v407 = vsel %vm404, %v405, %v406
        %v408 = vrot.slane %v296, 1
        %v409 = vsel %vm404, %v406, %v408
        %v412 = vmul.f32 %v401, %v407
        %v413 = vmul.f32 %v402, %v409
        %s414 = scalar_lea.vmem [#allocation7], 80
        %v415 = vld [vmem:[%s414] sm:$0xff]
        %v416 = vld [vmem:[%s414 + $0x8] sm:$0xff]
        %v417 = vmul.f32 %v415, %v407
        %v418 = vmul.f32 %v416, %v409
        %v419 = vadd.f32 %v396, %v412
        %v420 = vadd.f32 %v397, %v413
        %v421 = vadd.f32 %v398, %v417
        %v422 = vadd.f32 %v399, %v418
        %s423 = scalar_lea.vmem [#allocation3], 96
        %v424 = vld [vmem:[%s423] sm:$0xff]
        %v425 = vld [vmem:[%s423 + $0x8] sm:$0xff]
        %426 = vrot.lane.b32.xlu0 %v407, 127
        %v427 = vpop.permute.xlu0 %426
        %428 = vrot.lane.b32.xlu0 %v409, 127
        %v429 = vpop.permute.xlu0 %428
        %v432 = vmul.f32 %v424, %v427
        %v433 = vmul.f32 %v425, %v429
        %s434 = scalar_lea.vmem [#allocation7], 96
        %v435 = vld [vmem:[%s434] sm:$0xff]
        %v436 = vld [vmem:[%s434 + $0x8] sm:$0xff]
        %v437 = vmul.f32 %v435, %v427
        %v438 = vmul.f32 %v436, %v429
        %v439 = vadd.f32 %v419, %v432
        %v440 = vadd.f32 %v420, %v433
        %v441 = vadd.f32 %v421, %v437
        %v442 = vadd.f32 %v422, %v438
        %s443 = scalar_lea.vmem [#allocation3], 112
        %v444 = vld [vmem:[%s443] sm:$0xff]
        %v445 = vld [vmem:[%s443 + $0x8] sm:$0xff]
        %446 = vrot.lane.b32.xlu0 %v407, 126
        %v447 = vpop.permute.xlu0 %446
        %448 = vrot.lane.b32.xlu0 %v409, 126
        %v449 = vpop.permute.xlu0 %448
        %v452 = vmul.f32 %v444, %v447
        %v453 = vmul.f32 %v445, %v449
        %s454 = scalar_lea.vmem [#allocation7], 112
        %v455 = vld [vmem:[%s454] sm:$0xff]
        %v456 = vld [vmem:[%s454 + $0x8] sm:$0xff]
        %v457 = vmul.f32 %v455, %v447
        %v458 = vmul.f32 %v456, %v449
        %v459 = vadd.f32 %v439, %v452
        %v460 = vadd.f32 %v440, %v453
        %v461 = vadd.f32 %v441, %v457
        %v462 = vadd.f32 %v442, %v458
        %s463 = scalar_lea.vmem [#allocation3], 128
        %v464 = vld [vmem:[%s463] sm:$0xff]
        %v465 = vld [vmem:[%s463 + $0x8] sm:$0xff]
        %466 = vrot.lane.b32.xlu0 %v407, 125
        %v467 = vpop.permute.xlu0 %466
        %468 = vrot.lane.b32.xlu0 %v409, 125
        %v469 = vpop.permute.xlu0 %468
        %v472 = vmul.f32 %v464, %v467
        %v473 = vmul.f32 %v465, %v469
        %s474 = scalar_lea.vmem [#allocation7], 128
        %v475 = vld [vmem:[%s474] sm:$0xff]
        %v476 = vld [vmem:[%s474 + $0x8] sm:$0xff]
        %v477 = vmul.f32 %v475, %v467
        %v478 = vmul.f32 %v476, %v469
        %v479 = vadd.f32 %v459, %v472
        %v480 = vadd.f32 %v460, %v473
        %v481 = vadd.f32 %v461, %v477
        %v482 = vadd.f32 %v462, %v478
        %s483 = scalar_lea.vmem [#allocation3], 144
        %v484 = vld [vmem:[%s483] sm:$0xff]
        %v485 = vld [vmem:[%s483 + $0x8] sm:$0xff]
        %486 = vrot.lane.b32.xlu0 %v407, 124
        %v487 = vpop.permute.xlu0 %486
        %488 = vrot.lane.b32.xlu0 %v409, 124
        %v489 = vpop.permute.xlu0 %488
        %v492 = vmul.f32 %v484, %v487
        %v493 = vmul.f32 %v485, %v489
        %s494 = scalar_lea.vmem [#allocation7], 144
        %v495 = vld [vmem:[%s494] sm:$0xff]
        %v496 = vld [vmem:[%s494 + $0x8] sm:$0xff]
        %v497 = vmul.f32 %v495, %v487
        %v498 = vmul.f32 %v496, %v489
        %v499 = vadd.f32 %v479, %v492
        %v500 = vadd.f32 %v480, %v493
        %v501 = vadd.f32 %v481, %v497
        %v502 = vadd.f32 %v482, %v498
        %s503 = scalar_lea.vmem [#allocation3], 160
        %v504 = vld [vmem:[%s503] sm:$0xff]
        %v505 = vld [vmem:[%s503 + $0x8] sm:$0xff]
        %vm506 = vcmask 1045504
        %v507 = vrot.slane %v294, 2
        %v508 = vrot.slane %v295, 2
        %v509 = vsel %vm506, %v507, %v508
        %v510 = vrot.slane %v296, 2
        %v511 = vsel %vm506, %v508, %v510
        %v514 = vmul.f32 %v504, %v509
        %v515 = vmul.f32 %v505, %v511
        %s516 = scalar_lea.vmem [#allocation7], 160
        %v517 = vld [vmem:[%s516] sm:$0xff]
        %v518 = vld [vmem:[%s516 + $0x8] sm:$0xff]
        %v519 = vmul.f32 %v517, %v509
        %v520 = vmul.f32 %v518, %v511
        %v521 = vadd.f32 %v499, %v514
        %v522 = vadd.f32 %v500, %v515
        %v523 = vadd.f32 %v501, %v519
        %v524 = vadd.f32 %v502, %v520
        %s525 = scalar_lea.vmem [#allocation3], 176
        %v526 = vld [vmem:[%s525] sm:$0xff]
        %v527 = vld [vmem:[%s525 + $0x8] sm:$0xff]
        %528 = vrot.lane.b32.xlu0 %v509, 127
        %v529 = vpop.permute.xlu0 %528
        %530 = vrot.lane.b32.xlu0 %v511, 127
        %v531 = vpop.permute.xlu0 %530
        %v534 = vmul.f32 %v526, %v529
        %v535 = vmul.f32 %v527, %v531
        %s536 = scalar_lea.vmem [#allocation7], 176
        %v537 = vld [vmem:[%s536] sm:$0xff]
        %v538 = vld [vmem:[%s536 + $0x8] sm:$0xff]
        %v539 = vmul.f32 %v537, %v529
        %v540 = vmul.f32 %v538, %v531
        %v541 = vadd.f32 %v521, %v534
        %v542 = vadd.f32 %v522, %v535
        %v543 = vadd.f32 %v523, %v539
        %v544 = vadd.f32 %v524, %v540
        %s545 = scalar_lea.vmem [#allocation3], 192
        %v546 = vld [vmem:[%s545] sm:$0xff]
        %v547 = vld [vmem:[%s545 + $0x8] sm:$0xff]
        %548 = vrot.lane.b32.xlu0 %v509, 126
        %v549 = vpop.permute.xlu0 %548
        %550 = vrot.lane.b32.xlu0 %v511, 126
        %v551 = vpop.permute.xlu0 %550
        %v554 = vmul.f32 %v546, %v549
        %v555 = vmul.f32 %v547, %v551
        %s556 = scalar_lea.vmem [#allocation7], 192
        %v557 = vld [vmem:[%s556] sm:$0xff]
        %v558 = vld [vmem:[%s556 + $0x8] sm:$0xff]
        %v559 = vmul.f32 %v557, %v549
        %v560 = vmul.f32 %v558, %v551
        %v561 = vadd.f32 %v541, %v554
        %v562 = vadd.f32 %v542, %v555
        %v563 = vadd.f32 %v543, %v559
        %v564 = vadd.f32 %v544, %v560
        %s565 = scalar_lea.vmem [#allocation3], 208
        %v566 = vld [vmem:[%s565] sm:$0xff]
        %v567 = vld [vmem:[%s565 + $0x8] sm:$0xff]
        %568 = vrot.lane.b32.xlu0 %v509, 125
        %v569 = vpop.permute.xlu0 %568
        %570 = vrot.lane.b32.xlu0 %v511, 125
        %v571 = vpop.permute.xlu0 %570
        %v574 = vmul.f32 %v566, %v569
        %v575 = vmul.f32 %v567, %v571
        %s576 = scalar_lea.vmem [#allocation7], 208
        %v577 = vld [vmem:[%s576] sm:$0xff]
        %v578 = vld [vmem:[%s576 + $0x8] sm:$0xff]
        %v579 = vmul.f32 %v577, %v569
        %v580 = vmul.f32 %v578, %v571
        %v581 = vadd.f32 %v561, %v574
        %v582 = vadd.f32 %v562, %v575
        %v583 = vadd.f32 %v563, %v579
        %v584 = vadd.f32 %v564, %v580
        %s585 = scalar_lea.vmem [#allocation3], 224
        %v586 = vld [vmem:[%s585] sm:$0xff]
        %v587 = vld [vmem:[%s585 + $0x8] sm:$0xff]
        %588 = vrot.lane.b32.xlu0 %v509, 124
        %v589 = vpop.permute.xlu0 %588
        %590 = vrot.lane.b32.xlu0 %v511, 124
        %v591 = vpop.permute.xlu0 %590
        %v594 = vmul.f32 %v586, %v589
        %v595 = vmul.f32 %v587, %v591
        %s596 = scalar_lea.vmem [#allocation7], 224
        %v597 = vld [vmem:[%s596] sm:$0xff]
        %v598 = vld [vmem:[%s596 + $0x8] sm:$0xff]
        %v599 = vmul.f32 %v597, %v589
        %v600 = vmul.f32 %v598, %v591
        %v601 = vadd.f32 %v581, %v594
        %v602 = vadd.f32 %v582, %v595
        %v603 = vadd.f32 %v583, %v599
        %v604 = vadd.f32 %v584, %v600
        %s605 = scalar_lea.vmem [#allocation3], 240
        %v606 = vld [vmem:[%s605] sm:$0xff]
        %v607 = vld [vmem:[%s605 + $0x8] sm:$0xff]
        %vm608 = vcmask 1044480
        %v609 = vrot.slane %v294, 3
        %v610 = vrot.slane %v295, 3
        %v611 = vsel %vm608, %v609, %v610
        %v612 = vrot.slane %v296, 3
        %v613 = vsel %vm608, %v610, %v612
        %v616 = vmul.f32 %v606, %v611
        %v617 = vmul.f32 %v607, %v613
        %s618 = scalar_lea.vmem [#allocation7], 240
        %v619 = vld [vmem:[%s618] sm:$0xff]
        %v620 = vld [vmem:[%s618 + $0x8] sm:$0xff]
        %v621 = vmul.f32 %v619, %v611
        %v622 = vmul.f32 %v620, %v613
        %v623 = vadd.f32 %v601, %v616
        %v624 = vadd.f32 %v602, %v617
        %v625 = vadd.f32 %v603, %v621
        %v626 = vadd.f32 %v604, %v622
        %s627 = scalar_lea.vmem [#allocation3], 256
        %v628 = vld [vmem:[%s627] sm:$0xff]
        %v629 = vld [vmem:[%s627 + $0x8] sm:$0xff]
        %630 = vrot.lane.b32.xlu0 %v611, 127
        %v631 = vpop.permute.xlu0 %630
        %632 = vrot.lane.b32.xlu0 %v613, 127
        %v633 = vpop.permute.xlu0 %632
        %v636 = vmul.f32 %v628, %v631
        %v637 = vmul.f32 %v629, %v633
        %s638 = scalar_lea.vmem [#allocation7], 256
        %v639 = vld [vmem:[%s638] sm:$0xff]
        %v640 = vld [vmem:[%s638 + $0x8] sm:$0xff]
        %v641 = vmul.f32 %v639, %v631
        %v642 = vmul.f32 %v640, %v633
        %v643 = vadd.f32 %v623, %v636
        %v644 = vadd.f32 %v624, %v637
        %v645 = vadd.f32 %v625, %v641
        %v646 = vadd.f32 %v626, %v642
        %s647 = scalar_lea.vmem [#allocation3], 272
        %v648 = vld [vmem:[%s647] sm:$0xff]
        %v649 = vld [vmem:[%s647 + $0x8] sm:$0xff]
        %650 = vrot.lane.b32.xlu0 %v611, 126
        %v651 = vpop.permute.xlu0 %650
        %652 = vrot.lane.b32.xlu0 %v613, 126
        %v653 = vpop.permute.xlu0 %652
        %v656 = vmul.f32 %v648, %v651
        %v657 = vmul.f32 %v649, %v653
        %s658 = scalar_lea.vmem [#allocation7], 272
        %v659 = vld [vmem:[%s658] sm:$0xff]
        %v660 = vld [vmem:[%s658 + $0x8] sm:$0xff]
        %v661 = vmul.f32 %v659, %v651
        %v662 = vmul.f32 %v660, %v653
        %v663 = vadd.f32 %v643, %v656
        %v664 = vadd.f32 %v644, %v657
        %v665 = vadd.f32 %v645, %v661
        %v666 = vadd.f32 %v646, %v662
        %s667 = scalar_lea.vmem [#allocation3], 288
        %v668 = vld [vmem:[%s667] sm:$0xff]
        %v669 = vld [vmem:[%s667 + $0x8] sm:$0xff]
        %670 = vrot.lane.b32.xlu0 %v611, 125
        %v671 = vpop.permute.xlu0 %670
        %672 = vrot.lane.b32.xlu0 %v613, 125
        %v673 = vpop.permute.xlu0 %672
        %v676 = vmul.f32 %v668, %v671
        %v677 = vmul.f32 %v669, %v673
        %s678 = scalar_lea.vmem [#allocation7], 288
        %v679 = vld [vmem:[%s678] sm:$0xff]
        %v680 = vld [vmem:[%s678 + $0x8] sm:$0xff]
        %v681 = vmul.f32 %v679, %v671
        %v682 = vmul.f32 %v680, %v673
        %v683 = vadd.f32 %v663, %v676
        %v684 = vadd.f32 %v664, %v677
        %v685 = vadd.f32 %v665, %v681
        %v686 = vadd.f32 %v666, %v682
        %s687 = scalar_lea.vmem [#allocation3], 304
        %v688 = vld [vmem:[%s687] sm:$0xff]
        %v689 = vld [vmem:[%s687 + $0x8] sm:$0xff]
        %690 = vrot.lane.b32.xlu0 %v611, 124
        %v691 = vpop.permute.xlu0 %690
        %692 = vrot.lane.b32.xlu0 %v613, 124
        %v693 = vpop.permute.xlu0 %692
        %v696 = vmul.f32 %v688, %v691
        %v697 = vmul.f32 %v689, %v693
        %s698 = scalar_lea.vmem [#allocation7], 304
        %v699 = vld [vmem:[%s698] sm:$0xff]
        %v700 = vld [vmem:[%s698 + $0x8] sm:$0xff]
        %v701 = vmul.f32 %v699, %v691
        %v702 = vmul.f32 %v700, %v693
        %v703 = vadd.f32 %v683, %v696
        %v704 = vadd.f32 %v684, %v697
        %v705 = vadd.f32 %v685, %v701
        %v706 = vadd.f32 %v686, %v702
        %s707 = scalar_lea.vmem [#allocation3], 320
        %v708 = vld [vmem:[%s707] sm:$0xff]
        %v709 = vld [vmem:[%s707 + $0x8] sm:$0xff]
        %vm710 = vcmask 1043456
        %v711 = vrot.slane %v294, 4
        %v712 = vrot.slane %v295, 4
        %v713 = vsel %vm710, %v711, %v712
        %v714 = vrot.slane %v296, 4
        %v715 = vsel %vm710, %v712, %v714
        %v718 = vmul.f32 %v708, %v713
        %v719 = vmul.f32 %v709, %v715
        %s720 = scalar_lea.vmem [#allocation7], 320
        %v721 = vld [vmem:[%s720] sm:$0xff]
        %v722 = vld [vmem:[%s720 + $0x8] sm:$0xff]
        %v723 = vmul.f32 %v721, %v713
        %v724 = vmul.f32 %v722, %v715
        %v725 = vadd.f32 %v703, %v718
        %v726 = vadd.f32 %v704, %v719
        %v727 = vadd.f32 %v705, %v723
        %v728 = vadd.f32 %v706, %v724
        %s729 = scalar_lea.vmem [#allocation3], 336
        %v730 = vld [vmem:[%s729] sm:$0xff]
        %v731 = vld [vmem:[%s729 + $0x8] sm:$0xff]
        %732 = vrot.lane.b32.xlu0 %v713, 127
        %v733 = vpop.permute.xlu0 %732
        %734 = vrot.lane.b32.xlu0 %v715, 127
        %v735 = vpop.permute.xlu0 %734
        %v738 = vmul.f32 %v730, %v733
        %v739 = vmul.f32 %v731, %v735
        %s740 = scalar_lea.vmem [#allocation7], 336
        %v741 = vld [vmem:[%s740] sm:$0xff]
        %v742 = vld [vmem:[%s740 + $0x8] sm:$0xff]
        %v743 = vmul.f32 %v741, %v733
        %v744 = vmul.f32 %v742, %v735
        %v745 = vadd.f32 %v725, %v738
        %v746 = vadd.f32 %v726, %v739
        %v747 = vadd.f32 %v727, %v743
        %v748 = vadd.f32 %v728, %v744
        %s749 = scalar_lea.vmem [#allocation3], 352
        %v750 = vld [vmem:[%s749] sm:$0xff]
        %v751 = vld [vmem:[%s749 + $0x8] sm:$0xff]
        %752 = vrot.lane.b32.xlu0 %v713, 126
        %v753 = vpop.permute.xlu0 %752
        %754 = vrot.lane.b32.xlu0 %v715, 126
        %v755 = vpop.permute.xlu0 %754
        %v758 = vmul.f32 %v750, %v753
        %v759 = vmul.f32 %v751, %v755
        %s760 = scalar_lea.vmem [#allocation7], 352
        %v761 = vld [vmem:[%s760] sm:$0xff]
        %v762 = vld [vmem:[%s760 + $0x8] sm:$0xff]
        %v763 = vmul.f32 %v761, %v753
        %v764 = vmul.f32 %v762, %v755
        %v765 = vadd.f32 %v745, %v758
        %v766 = vadd.f32 %v746, %v759
        %v767 = vadd.f32 %v747, %v763
        %v768 = vadd.f32 %v748, %v764
        %s769 = scalar_lea.vmem [#allocation3], 368
        %v770 = vld [vmem:[%s769] sm:$0xff]
        %v771 = vld [vmem:[%s769 + $0x8] sm:$0xff]
        %772 = vrot.lane.b32.xlu0 %v713, 125
        %v773 = vpop.permute.xlu0 %772
        %774 = vrot.lane.b32.xlu0 %v715, 125
        %v775 = vpop.permute.xlu0 %774
        %v778 = vmul.f32 %v770, %v773
        %v779 = vmul.f32 %v771, %v775
        %s780 = scalar_lea.vmem [#allocation7], 368
        %v781 = vld [vmem:[%s780] sm:$0xff]
        %v782 = vld [vmem:[%s780 + $0x8] sm:$0xff]
        %v783 = vmul.f32 %v781, %v773
        %v784 = vmul.f32 %v782, %v775
        %v785 = vadd.f32 %v765, %v778
        %v786 = vadd.f32 %v766, %v779
        %v787 = vadd.f32 %v767, %v783
        %v788 = vadd.f32 %v768, %v784
        %s789 = scalar_lea.vmem [#allocation3], 384
        %v790 = vld [vmem:[%s789] sm:$0xff]
        %v791 = vld [vmem:[%s789 + $0x8] sm:$0xff]
        %792 = vrot.lane.b32.xlu0 %v713, 124
        %v793 = vpop.permute.xlu0 %792
        %794 = vrot.lane.b32.xlu0 %v715, 124
        %v795 = vpop.permute.xlu0 %794
        %v798 = vmul.f32 %v790, %v793
        %v799 = vmul.f32 %v791, %v795
        %s800 = scalar_lea.vmem [#allocation7], 384
        %v801 = vld [vmem:[%s800] sm:$0xff]
        %v802 = vld [vmem:[%s800 + $0x8] sm:$0xff]
        %v803 = vmul.f32 %v801, %v793
        %v804 = vmul.f32 %v802, %v795
        %v805 = vadd.f32 %v785, %v798
        %v806 = vadd.f32 %v786, %v799
        %v807 = vadd.f32 %v787, %v803
        %v808 = vadd.f32 %v788, %v804
        %811 = vrot.lane.b32.xlu0 %v805, 108
        %v812 = vpop.permute.xlu0 %811
        %813 = vrot.lane.b32.xlu0 %v806, 108
        %v814 = vpop.permute.xlu0 %813
        %v817 = vadd.f32 %v805, %v812
        %v818 = vadd.f32 %v806, %v814
        %819 = vrot.lane.b32.xlu0 %v805, 88
        %v820 = vpop.permute.xlu0 %819
        %821 = vrot.lane.b32.xlu0 %v806, 88
        %v822 = vpop.permute.xlu0 %821
        %v825 = vadd.f32 %v817, %v820
        %v826 = vadd.f32 %v818, %v822
        %827 = vrot.lane.b32.xlu0 %v805, 68
        %v828 = vpop.permute.xlu0 %827
        %829 = vrot.lane.b32.xlu0 %v806, 68
        %v830 = vpop.permute.xlu0 %829
        %v833 = vadd.f32 %v825, %v828
        %v834 = vadd.f32 %v826, %v830
        %837 = vrot.lane.b32.xlu0 %v807, 108
        %v838 = vpop.permute.xlu0 %837
        %839 = vrot.lane.b32.xlu0 %v808, 108
        %v840 = vpop.permute.xlu0 %839
        %v843 = vadd.f32 %v807, %v838
        %v844 = vadd.f32 %v808, %v840
        %845 = vrot.lane.b32.xlu0 %v807, 88
        %v846 = vpop.permute.xlu0 %845
        %847 = vrot.lane.b32.xlu0 %v808, 88
        %v848 = vpop.permute.xlu0 %847
        %v851 = vadd.f32 %v843, %v846
        %v852 = vadd.f32 %v844, %v848
        %853 = vrot.lane.b32.xlu0 %v807, 68
        %v854 = vpop.permute.xlu0 %853
        %855 = vrot.lane.b32.xlu0 %v808, 68
        %v856 = vpop.permute.xlu0 %855
        %v859 = vadd.f32 %v851, %v854
        %v860 = vadd.f32 %v852, %v856
        %v861 = vld [vmem:[%s3] sm:$0xff]
        %v862 = vld [vmem:[%s3 + $0x8] sm:$0xff]
        %v863 = vld [vmem:[%s4] sm:$0xff]
        %v864 = vld [vmem:[%s4 + $0x8] sm:$0xff]
        %s865 = sld [smem:[#allocation9]]
        %s866 = sld [smem:[#allocation9 + $0x1]]
        %s867 = sld [smem:[#allocation9 + $0x2]]
        %s868 = sld [smem:[#allocation9 + $0x3]]
        %s869 = sld [smem:[#allocation9 + $0x4]]
        %s870 = sld [smem:[#allocation9 + $0x5]]
        %s871 = sld [smem:[#allocation9 + $0x6]]
        %s872 = sld [smem:[#allocation9 + $0x7]]
        %s873 = sld [smem:[#allocation9 + $0x8]]
        %s874 = sld [smem:[#allocation9 + $0x9]]
        %s875 = sld [smem:[#allocation9 + $0xa]]
        %s876 = sld [smem:[#allocation9 + $0xb]]
        %s877 = sld [smem:[#allocation9 + $0xc]]
        %s878 = sld [smem:[#allocation9 + $0xd]]
        %s879 = sld [smem:[#allocation9 + $0xe]]
        %s880 = sld [smem:[#allocation9 + $0xf]]
        %s881 = sld [smem:[#allocation9 + $0x10]]
        %s882 = sld [smem:[#allocation9 + $0x11]]
        %s883 = sld [smem:[#allocation9 + $0x12]]
        %s884 = sld [smem:[#allocation9 + $0x13]]
        %s885 = sld [smem:[#allocation9 + $0x14]]
        %s886 = sld [smem:[#allocation9 + $0x15]]
        %s887 = sld [smem:[#allocation9 + $0x16]]
        %s888 = sld [smem:[#allocation9 + $0x17]]
        %s889 = sld [smem:[#allocation9 + $0x18]]
        %vm890 = vcmask 162816
        %891 = vst.msk [vmem:[#allocation2] sm:$0xff] %vm890, 0.0
        %892 = vst.msk [vmem:[#allocation2 + $0x8] sm:$0xff] %vm890, 0.0
        %vm893 = vcmask 158720
        %894 = vst.msk [vmem:[#allocation2 + $0x10] sm:$0xf] %vm893, 0.0
        %v895 = vmul.f32 %v308, %v833
        %v896 = vmul.f32 %v309, %v834
        %v897 = vadd.f32 %v861, %v895
        %v898 = vadd.f32 %v862, %v896
        %vm899 = vcmask 130048
        %900 = vst.msk [vmem:[%s288] sm:$0xff] %vm899, %v897
        %901 = vst.msk [vmem:[%s288 + $0x8] sm:$0xff] %vm899, %v898
        %904 = vrot.lane.b32.xlu0 %v897, 2
        %v905 = vpop.permute.xlu0 %904
        %906 = vrot.lane.b32.xlu0 %v898, 2
        %v907 = vpop.permute.xlu0 %906
        %vm910 = vcmask 146448
        %911 = vst.msk [vmem:[#allocation2 + $0x2] sm:$0xff] %vm910, %v905
        %912 = vst.msk [vmem:[#allocation2 + $0xa] sm:$0xff] %vm910, %v907
        %v913 = vld [vmem:[#allocation2] sm:$0xff]
        %v914 = vld [vmem:[#allocation2 + $0x8] sm:$0xff]
        %v915 = vld [vmem:[#allocation2 + $0x10] sm:$0xf]
        %v916 = vstv %s865
        %v917 = vmul.f32 %v916, %v913
        %v918 = vmul.f32 %v916, %v914
        %v919 = vstv %s866
        %v920 = vmul.f32 %v919, %v913
        %v921 = vmul.f32 %v919, %v914
        %924 = vrot.lane.b32.xlu0 %v920, 127
        %v925 = vpop.permute.xlu0 %924
        %926 = vrot.lane.b32.xlu0 %v921, 127
        %v927 = vpop.permute.xlu0 %926
        %v930 = vadd.f32 %v917, %v925
        %v931 = vadd.f32 %v918, %v927
        %v932 = vstv %s867
        %v933 = vmul.f32 %v932, %v913
        %v934 = vmul.f32 %v932, %v914
        %937 = vrot.lane.b32.xlu0 %v933, 126
        %v938 = vpop.permute.xlu0 %937
        %939 = vrot.lane.b32.xlu0 %v934, 126
        %v940 = vpop.permute.xlu0 %939
        %v943 = vadd.f32 %v930, %v938
        %v944 = vadd.f32 %v931, %v940
        %v945 = vstv %s868
        %v946 = vmul.f32 %v945, %v913
        %v947 = vmul.f32 %v945, %v914
        %950 = vrot.lane.b32.xlu0 %v946, 125
        %v951 = vpop.permute.xlu0 %950
        %952 = vrot.lane.b32.xlu0 %v947, 125
        %v953 = vpop.permute.xlu0 %952
        %v956 = vadd.f32 %v943, %v951
        %v957 = vadd.f32 %v944, %v953
        %v958 = vstv %s869
        %v959 = vmul.f32 %v958, %v913
        %v960 = vmul.f32 %v958, %v914
        %963 = vrot.lane.b32.xlu0 %v959, 124
        %v964 = vpop.permute.xlu0 %963
        %965 = vrot.lane.b32.xlu0 %v960, 124
        %v966 = vpop.permute.xlu0 %965
        %v969 = vadd.f32 %v956, %v964
        %v970 = vadd.f32 %v957, %v966
        %v971 = vstv %s870
        %v972 = vmul.f32 %v971, %v913
        %v973 = vmul.f32 %v971, %v914
        %v974 = vmul.f32 %v971, %v915
        %v978 = vrot.slane %v972, 1
        %v979 = vrot.slane %v973, 1
        %v980 = vsel %vm404, %v978, %v979
        %v981 = vrot.slane %v974, 1
        %v982 = vsel %vm404, %v979, %v981
        %v985 = vadd.f32 %v969, %v980
        %v986 = vadd.f32 %v970, %v982
        %v987 = vstv %s871
        %v988 = vmul.f32 %v987, %v913
        %v989 = vmul.f32 %v987, %v914
        %v990 = vmul.f32 %v987, %v915
        %v994 = vrot.slane %v988, 1
        %v995 = vrot.slane %v989, 1
        %v996 = vsel %vm404, %v994, %v995
        %v997 = vrot.slane %v990, 1
        %v998 = vsel %vm404, %v995, %v997
        %999 = vrot.lane.b32.xlu0 %v996, 127
        %v1000 = vpop.permute.xlu0 %999
        %1001 = vrot.lane.b32.xlu0 %v998, 127
        %v1002 = vpop.permute.xlu0 %1001
        %v1005 = vadd.f32 %v985, %v1000
        %v1006 = vadd.f32 %v986, %v1002
        %v1007 = vstv %s872
        %v1008 = vmul.f32 %v1007, %v913
        %v1009 = vmul.f32 %v1007, %v914
        %v1010 = vmul.f32 %v1007, %v915
        %v1014 = vrot.slane %v1008, 1
        %v1015 = vrot.slane %v1009, 1
        %v1016 = vsel %vm404, %v1014, %v1015
        %v1017 = vrot.slane %v1010, 1
        %v1018 = vsel %vm404, %v1015, %v1017
        %1019 = vrot.lane.b32.xlu0 %v1016, 126
        %v1020 = vpop.permute.xlu0 %1019
        %1021 = vrot.lane.b32.xlu0 %v1018, 126
        %v1022 = vpop.permute.xlu0 %1021
        %v1025 = vadd.f32 %v1005, %v1020
        %v1026 = vadd.f32 %v1006, %v1022
        %v1027 = vstv %s873
        %v1028 = vmul.f32 %v1027, %v913
        %v1029 = vmul.f32 %v1027, %v914
        %v1030 = vmul.f32 %v1027, %v915
        %v1034 = vrot.slane %v1028, 1
        %v1035 = vrot.slane %v1029, 1
        %v1036 = vsel %vm404, %v1034, %v1035
        %v1037 = vrot.slane %v1030, 1
        %v1038 = vsel %vm404, %v1035, %v1037
        %1039 = vrot.lane.b32.xlu0 %v1036, 125
        %v1040 = vpop.permute.xlu0 %1039
        %1041 = vrot.lane.b32.xlu0 %v1038, 125
        %v1042 = vpop.permute.xlu0 %1041
        %v1045 = vadd.f32 %v1025, %v1040
        %v1046 = vadd.f32 %v1026, %v1042
        %v1047 = vstv %s874
        %v1048 = vmul.f32 %v1047, %v913
        %v1049 = vmul.f32 %v1047, %v914
        %v1050 = vmul.f32 %v1047, %v915
        %v1054 = vrot.slane %v1048, 1
        %v1055 = vrot.slane %v1049, 1
        %v1056 = vsel %vm404, %v1054, %v1055
        %v1057 = vrot.slane %v1050, 1
        %v1058 = vsel %vm404, %v1055, %v1057
        %1059 = vrot.lane.b32.xlu0 %v1056, 124
        %v1060 = vpop.permute.xlu0 %1059
        %1061 = vrot.lane.b32.xlu0 %v1058, 124
        %v1062 = vpop.permute.xlu0 %1061
        %v1065 = vadd.f32 %v1045, %v1060
        %v1066 = vadd.f32 %v1046, %v1062
        %v1067 = vstv %s875
        %v1068 = vmul.f32 %v1067, %v913
        %v1069 = vmul.f32 %v1067, %v914
        %v1070 = vmul.f32 %v1067, %v915
        %v1074 = vrot.slane %v1068, 2
        %v1075 = vrot.slane %v1069, 2
        %v1076 = vsel %vm506, %v1074, %v1075
        %v1077 = vrot.slane %v1070, 2
        %v1078 = vsel %vm506, %v1075, %v1077
        %v1081 = vadd.f32 %v1065, %v1076
        %v1082 = vadd.f32 %v1066, %v1078
        %v1083 = vstv %s876
        %v1084 = vmul.f32 %v1083, %v913
        %v1085 = vmul.f32 %v1083, %v914
        %v1086 = vmul.f32 %v1083, %v915
        %v1090 = vrot.slane %v1084, 2
        %v1091 = vrot.slane %v1085, 2
        %v1092 = vsel %vm506, %v1090, %v1091
        %v1093 = vrot.slane %v1086, 2
        %v1094 = vsel %vm506, %v1091, %v1093
        %1095 = vrot.lane.b32.xlu0 %v1092, 127
        %v1096 = vpop.permute.xlu0 %1095
        %1097 = vrot.lane.b32.xlu0 %v1094, 127
        %v1098 = vpop.permute.xlu0 %1097
        %v1101 = vadd.f32 %v1081, %v1096
        %v1102 = vadd.f32 %v1082, %v1098
        %v1103 = vstv %s877
        %v1104 = vmul.f32 %v1103, %v913
        %v1105 = vmul.f32 %v1103, %v914
        %v1106 = vmul.f32 %v1103, %v915
        %v1110 = vrot.slane %v1104, 2
        %v1111 = vrot.slane %v1105, 2
        %v1112 = vsel %vm506, %v1110, %v1111
        %v1113 = vrot.slane %v1106, 2
        %v1114 = vsel %vm506, %v1111, %v1113
        %1115 = vrot.lane.b32.xlu0 %v1112, 126
        %v1116 = vpop.permute.xlu0 %1115
        %1117 = vrot.lane.b32.xlu0 %v1114, 126
        %v1118 = vpop.permute.xlu0 %1117
        %v1121 = vadd.f32 %v1101, %v1116
        %v1122 = vadd.f32 %v1102, %v1118
        %v1123 = vstv %s878
        %v1124 = vmul.f32 %v1123, %v913
        %v1125 = vmul.f32 %v1123, %v914
        %v1126 = vmul.f32 %v1123, %v915
        %v1130 = vrot.slane %v1124, 2
        %v1131 = vrot.slane %v1125, 2
        %v1132 = vsel %vm506, %v1130, %v1131
        %v1133 = vrot.slane %v1126, 2
        %v1134 = vsel %vm506, %v1131, %v1133
        %1135 = vrot.lane.b32.xlu0 %v1132, 125
        %v1136 = vpop.permute.xlu0 %1135
        %1137 = vrot.lane.b32.xlu0 %v1134, 125
        %v1138 = vpop.permute.xlu0 %1137
        %v1141 = vadd.f32 %v1121, %v1136
        %v1142 = vadd.f32 %v1122, %v1138
        %v1143 = vstv %s879
        %v1144 = vmul.f32 %v1143, %v913
        %v1145 = vmul.f32 %v1143, %v914
        %v1146 = vmul.f32 %v1143, %v915
        %v1150 = vrot.slane %v1144, 2
        %v1151 = vrot.slane %v1145, 2
        %v1152 = vsel %vm506, %v1150, %v1151
        %v1153 = vrot.slane %v1146, 2
        %v1154 = vsel %vm506, %v1151, %v1153
        %1155 = vrot.lane.b32.xlu0 %v1152, 124
        %v1156 = vpop.permute.xlu0 %1155
        %1157 = vrot.lane.b32.xlu0 %v1154, 124
        %v1158 = vpop.permute.xlu0 %1157
        %v1161 = vadd.f32 %v1141, %v1156
        %v1162 = vadd.f32 %v1142, %v1158
        %v1163 = vstv %s880
        %v1164 = vmul.f32 %v1163, %v913
        %v1165 = vmul.f32 %v1163, %v914
        %v1166 = vmul.f32 %v1163, %v915
        %v1170 = vrot.slane %v1164, 3
        %v1171 = vrot.slane %v1165, 3
        %v1172 = vsel %vm608, %v1170, %v1171
        %v1173 = vrot.slane %v1166, 3
        %v1174 = vsel %vm608, %v1171, %v1173
        %v1177 = vadd.f32 %v1161, %v1172
        %v1178 = vadd.f32 %v1162, %v1174
        %v1179 = vstv %s881
        %v1180 = vmul.f32 %v1179, %v913
        %v1181 = vmul.f32 %v1179, %v914
        %v1182 = vmul.f32 %v1179, %v915
        %v1186 = vrot.slane %v1180, 3
        %v1187 = vrot.slane %v1181, 3
        %v1188 = vsel %vm608, %v1186, %v1187
        %v1189 = vrot.slane %v1182, 3
        %v1190 = vsel %vm608, %v1187, %v1189
        %1191 = vrot.lane.b32.xlu0 %v1188, 127
        %v1192 = vpop.permute.xlu0 %1191
        %1193 = vrot.lane.b32.xlu0 %v1190, 127
        %v1194 = vpop.permute.xlu0 %1193
        %v1197 = vadd.f32 %v1177, %v1192
        %v1198 = vadd.f32 %v1178, %v1194
        %v1199 = vstv %s882
        %v1200 = vmul.f32 %v1199, %v913
        %v1201 = vmul.f32 %v1199, %v914
        %v1202 = vmul.f32 %v1199, %v915
        %v1206 = vrot.slane %v1200, 3
        %v1207 = vrot.slane %v1201, 3
        %v1208 = vsel %vm608, %v1206, %v1207
        %v1209 = vrot.slane %v1202, 3
        %v1210 = vsel %vm608, %v1207, %v1209
        %1211 = vrot.lane.b32.xlu0 %v1208, 126
        %v1212 = vpop.permute.xlu0 %1211
        %1213 = vrot.lane.b32.xlu0 %v1210, 126
        %v1214 = vpop.permute.xlu0 %1213
        %v1217 = vadd.f32 %v1197, %v1212
        %v1218 = vadd.f32 %v1198, %v1214
        %v1219 = vstv %s883
        %v1220 = vmul.f32 %v1219, %v913
        %v1221 = vmul.f32 %v1219, %v914
        %v1222 = vmul.f32 %v1219, %v915
        %v1226 = vrot.slane %v1220, 3
        %v1227 = vrot.slane %v1221, 3
        %v1228 = vsel %vm608, %v1226, %v1227
        %v1229 = vrot.slane %v1222, 3
        %v1230 = vsel %vm608, %v1227, %v1229
        %1231 = vrot.lane.b32.xlu0 %v1228, 125
        %v1232 = vpop.permute.xlu0 %1231
        %1233 = vrot.lane.b32.xlu0 %v1230, 125
        %v1234 = vpop.permute.xlu0 %1233
        %v1237 = vadd.f32 %v1217, %v1232
        %v1238 = vadd.f32 %v1218, %v1234
        %v1239 = vstv %s884
        %v1240 = vmul.f32 %v1239, %v913
        %v1241 = vmul.f32 %v1239, %v914
        %v1242 = vmul.f32 %v1239, %v915
        %v1246 = vrot.slane %v1240, 3
        %v1247 = vrot.slane %v1241, 3
        %v1248 = vsel %vm608, %v1246, %v1247
        %v1249 = vrot.slane %v1242, 3
        %v1250 = vsel %vm608, %v1247, %v1249
        %1251 = vrot.lane.b32.xlu0 %v1248, 124
        %v1252 = vpop.permute.xlu0 %1251
        %1253 = vrot.lane.b32.xlu0 %v1250, 124
        %v1254 = vpop.permute.xlu0 %1253
        %v1257 = vadd.f32 %v1237, %v1252
        %v1258 = vadd.f32 %v1238, %v1254
        %v1259 = vstv %s885
        %v1260 = vmul.f32 %v1259, %v913
        %v1261 = vmul.f32 %v1259, %v914
        %v1262 = vmul.f32 %v1259, %v915
        %v1266 = vrot.slane %v1260, 4
        %v1267 = vrot.slane %v1261, 4
        %v1268 = vsel %vm710, %v1266, %v1267
        %v1269 = vrot.slane %v1262, 4
        %v1270 = vsel %vm710, %v1267, %v1269
        %v1273 = vadd.f32 %v1257, %v1268
        %v1274 = vadd.f32 %v1258, %v1270
        %v1275 = vstv %s886
        %v1276 = vmul.f32 %v1275, %v913
        %v1277 = vmul.f32 %v1275, %v914
        %v1278 = vmul.f32 %v1275, %v915
        %v1282 = vrot.slane %v1276, 4
        %v1283 = vrot.slane %v1277, 4
        %v1284 = vsel %vm710, %v1282, %v1283
        %v1285 = vrot.slane %v1278, 4
        %v1286 = vsel %vm710, %v1283, %v1285
        %1287 = vrot.lane.b32.xlu0 %v1284, 127
        %v1288 = vpop.permute.xlu0 %1287
        %1289 = vrot.lane.b32.xlu0 %v1286, 127
        %v1290 = vpop.permute.xlu0 %1289
        %v1293 = vadd.f32 %v1273, %v1288
        %v1294 = vadd.f32 %v1274, %v1290
        %v1295 = vstv %s887
        %v1296 = vmul.f32 %v1295, %v913
        %v1297 = vmul.f32 %v1295, %v914
        %v1298 = vmul.f32 %v1295, %v915
        %v1302 = vrot.slane %v1296, 4
        %v1303 = vrot.slane %v1297, 4
        %v1304 = vsel %vm710, %v1302, %v1303
        %v1305 = vrot.slane %v1298, 4
        %v1306 = vsel %vm710, %v1303, %v1305
        %1307 = vrot.lane.b32.xlu0 %v1304, 126
        %v1308 = vpop.permute.xlu0 %1307
        %1309 = vrot.lane.b32.xlu0 %v1306, 126
        %v1310 = vpop.permute.xlu0 %1309
        %v1313 = vadd.f32 %v1293, %v1308
        %v1314 = vadd.f32 %v1294, %v1310
        %v1315 = vstv %s888
        %v1316 = vmul.f32 %v1315, %v913
        %v1317 = vmul.f32 %v1315, %v914
        %v1318 = vmul.f32 %v1315, %v915
        %v1322 = vrot.slane %v1316, 4
        %v1323 = vrot.slane %v1317, 4
        %v1324 = vsel %vm710, %v1322, %v1323
        %v1325 = vrot.slane %v1318, 4
        %v1326 = vsel %vm710, %v1323, %v1325
        %1327 = vrot.lane.b32.xlu0 %v1324, 125
        %v1328 = vpop.permute.xlu0 %1327
        %1329 = vrot.lane.b32.xlu0 %v1326, 125
        %v1330 = vpop.permute.xlu0 %1329
        %v1333 = vadd.f32 %v1313, %v1328
        %v1334 = vadd.f32 %v1314, %v1330
        %v1335 = vstv %s889
        %v1336 = vmul.f32 %v1335, %v913
        %v1337 = vmul.f32 %v1335, %v914
        %v1338 = vmul.f32 %v1335, %v915
        %v1342 = vrot.slane %v1336, 4
        %v1343 = vrot.slane %v1337, 4
        %v1344 = vsel %vm710, %v1342, %v1343
        %v1345 = vrot.slane %v1338, 4
        %v1346 = vsel %vm710, %v1343, %v1345
        %1347 = vrot.lane.b32.xlu0 %v1344, 124
        %v1348 = vpop.permute.xlu0 %1347
        %1349 = vrot.lane.b32.xlu0 %v1346, 124
        %v1350 = vpop.permute.xlu0 %1349
        %v1353 = vadd.f32 %v1333, %v1348
        %v1354 = vadd.f32 %v1334, %v1350
        %v1355 = vadd.f32 %v859, %v1353
        %v1356 = vadd.f32 %v860, %v1354
        %v1357 = vmul.f32 %v308, %v1355
        %v1358 = vmul.f32 %v309, %v1356
        %v1359 = vadd.f32 %v863, %v1357
        %v1360 = vadd.f32 %v864, %v1358
        %s1361 = scalar_lea.vmem %s288, 16 [#allocation10]
        %1362 = vst.msk [vmem:[%s1361] sm:$0xff] %vm899, %v1359
        %1363 = vst.msk [vmem:[%s1361 + $0x8] sm:$0xff] %vm899, %v1360
        %1366 = vrot.lane.b32.xlu0 %v1359, 2
        %v1367 = vpop.permute.xlu0 %1366
        %1368 = vrot.lane.b32.xlu0 %v1360, 2
        %v1369 = vpop.permute.xlu0 %1368
        %1372 = vst.msk [vmem:[#allocation2 + $0x2] sm:$0xff] %vm910, %v1367
        %1373 = vst.msk [vmem:[#allocation2 + $0xa] sm:$0xff] %vm910, %v1369
        %v1374 = vld [vmem:[#allocation2] sm:$0xff]
        %v1375 = vld [vmem:[#allocation2 + $0x8] sm:$0xff]
        %v1376 = vld [vmem:[#allocation2 + $0x10] sm:$0xf]
        %v1377 = vmul.f32 %v916, %v1374
        %v1378 = vmul.f32 %v916, %v1375
        %v1379 = vmul.f32 %v919, %v1374
        %v1380 = vmul.f32 %v919, %v1375
        %1383 = vrot.lane.b32.xlu0 %v1379, 127
        %v1384 = vpop.permute.xlu0 %1383
        %1385 = vrot.lane.b32.xlu0 %v1380, 127
        %v1386 = vpop.permute.xlu0 %1385
        %v1389 = vadd.f32 %v1377, %v1384
        %v1390 = vadd.f32 %v1378, %v1386
        %v1391 = vmul.f32 %v932, %v1374
        %v1392 = vmul.f32 %v932, %v1375
        %1395 = vrot.lane.b32.xlu0 %v1391, 126
        %v1396 = vpop.permute.xlu0 %1395
        %1397 = vrot.lane.b32.xlu0 %v1392, 126
        %v1398 = vpop.permute.xlu0 %1397
        %v1401 = vadd.f32 %v1389, %v1396
        %v1402 = vadd.f32 %v1390, %v1398
        %v1403 = vmul.f32 %v945, %v1374
        %v1404 = vmul.f32 %v945, %v1375
        %1407 = vrot.lane.b32.xlu0 %v1403, 125
        %v1408 = vpop.permute.xlu0 %1407
        %1409 = vrot.lane.b32.xlu0 %v1404, 125
        %v1410 = vpop.permute.xlu0 %1409
        %v1413 = vadd.f32 %v1401, %v1408
        %v1414 = vadd.f32 %v1402, %v1410
        %v1415 = vmul.f32 %v958, %v1374
        %v1416 = vmul.f32 %v958, %v1375
        %1419 = vrot.lane.b32.xlu0 %v1415, 124
        %v1420 = vpop.permute.xlu0 %1419
        %1421 = vrot.lane.b32.xlu0 %v1416, 124
        %v1422 = vpop.permute.xlu0 %1421
        %v1425 = vadd.f32 %v1413, %v1420
        %v1426 = vadd.f32 %v1414, %v1422
        %v1427 = vmul.f32 %v971, %v1374
        %v1428 = vmul.f32 %v971, %v1375
        %v1429 = vmul.f32 %v971, %v1376
        %v1433 = vrot.slane %v1427, 1
        %v1434 = vrot.slane %v1428, 1
        %v1435 = vsel %vm404, %v1433, %v1434
        %v1436 = vrot.slane %v1429, 1
        %v1437 = vsel %vm404, %v1434, %v1436
        %v1440 = vadd.f32 %v1425, %v1435
        %v1441 = vadd.f32 %v1426, %v1437
        %v1442 = vmul.f32 %v987, %v1374
        %v1443 = vmul.f32 %v987, %v1375
        %v1444 = vmul.f32 %v987, %v1376
        %v1448 = vrot.slane %v1442, 1
        %v1449 = vrot.slane %v1443, 1
        %v1450 = vsel %vm404, %v1448, %v1449
        %v1451 = vrot.slane %v1444, 1
        %v1452 = vsel %vm404, %v1449, %v1451
        %1453 = vrot.lane.b32.xlu0 %v1450, 127
        %v1454 = vpop.permute.xlu0 %1453
        %1455 = vrot.lane.b32.xlu0 %v1452, 127
        %v1456 = vpop.permute.xlu0 %1455
        %v1459 = vadd.f32 %v1440, %v1454
        %v1460 = vadd.f32 %v1441, %v1456
        %v1461 = vmul.f32 %v1007, %v1374
        %v1462 = vmul.f32 %v1007, %v1375
        %v1463 = vmul.f32 %v1007, %v1376
        %v1467 = vrot.slane %v1461, 1
        %v1468 = vrot.slane %v1462, 1
        %v1469 = vsel %vm404, %v1467, %v1468
        %v1470 = vrot.slane %v1463, 1
        %v1471 = vsel %vm404, %v1468, %v1470
        %1472 = vrot.lane.b32.xlu0 %v1469, 126
        %v1473 = vpop.permute.xlu0 %1472
        %1474 = vrot.lane.b32.xlu0 %v1471, 126
        %v1475 = vpop.permute.xlu0 %1474
        %v1478 = vadd.f32 %v1459, %v1473
        %v1479 = vadd.f32 %v1460, %v1475
        %v1480 = vmul.f32 %v1027, %v1374
        %v1481 = vmul.f32 %v1027, %v1375
        %v1482 = vmul.f32 %v1027, %v1376
        %v1486 = vrot.slane %v1480, 1
        %v1487 = vrot.slane %v1481, 1
        %v1488 = vsel %vm404, %v1486, %v1487
        %v1489 = vrot.slane %v1482, 1
        %v1490 = vsel %vm404, %v1487, %v1489
        %1491 = vrot.lane.b32.xlu0 %v1488, 125
        %v1492 = vpop.permute.xlu0 %1491
        %1493 = vrot.lane.b32.xlu0 %v1490, 125
        %v1494 = vpop.permute.xlu0 %1493
        %v1497 = vadd.f32 %v1478, %v1492
        %v1498 = vadd.f32 %v1479, %v1494
        %v1499 = vmul.f32 %v1047, %v1374
        %v1500 = vmul.f32 %v1047, %v1375
        %v1501 = vmul.f32 %v1047, %v1376
        %v1505 = vrot.slane %v1499, 1
        %v1506 = vrot.slane %v1500, 1
        %v1507 = vsel %vm404, %v1505, %v1506
        %v1508 = vrot.slane %v1501, 1
        %v1509 = vsel %vm404, %v1506, %v1508
        %1510 = vrot.lane.b32.xlu0 %v1507, 124
        %v1511 = vpop.permute.xlu0 %1510
        %1512 = vrot.lane.b32.xlu0 %v1509, 124
        %v1513 = vpop.permute.xlu0 %1512
        %v1516 = vadd.f32 %v1497, %v1511
        %v1517 = vadd.f32 %v1498, %v1513
        %v1518 = vmul.f32 %v1067, %v1374
        %v1519 = vmul.f32 %v1067, %v1375
        %v1520 = vmul.f32 %v1067, %v1376
        %v1524 = vrot.slane %v1518, 2
        %v1525 = vrot.slane %v1519, 2
        %v1526 = vsel %vm506, %v1524, %v1525
        %v1527 = vrot.slane %v1520, 2
        %v1528 = vsel %vm506, %v1525, %v1527
        %v1531 = vadd.f32 %v1516, %v1526
        %v1532 = vadd.f32 %v1517, %v1528
        %v1533 = vmul.f32 %v1083, %v1374
        %v1534 = vmul.f32 %v1083, %v1375
        %v1535 = vmul.f32 %v1083, %v1376
        %v1539 = vrot.slane %v1533, 2
        %v1540 = vrot.slane %v1534, 2
        %v1541 = vsel %vm506, %v1539, %v1540
        %v1542 = vrot.slane %v1535, 2
        %v1543 = vsel %vm506, %v1540, %v1542
        %1544 = vrot.lane.b32.xlu0 %v1541, 127
        %v1545 = vpop.permute.xlu0 %1544
        %1546 = vrot.lane.b32.xlu0 %v1543, 127
        %v1547 = vpop.permute.xlu0 %1546
        %v1550 = vadd.f32 %v1531, %v1545
        %v1551 = vadd.f32 %v1532, %v1547
        %v1552 = vmul.f32 %v1103, %v1374
        %v1553 = vmul.f32 %v1103, %v1375
        %v1554 = vmul.f32 %v1103, %v1376
        %v1558 = vrot.slane %v1552, 2
        %v1559 = vrot.slane %v1553, 2
        %v1560 = vsel %vm506, %v1558, %v1559
        %v1561 = vrot.slane %v1554, 2
        %v1562 = vsel %vm506, %v1559, %v1561
        %1563 = vrot.lane.b32.xlu0 %v1560, 126
        %v1564 = vpop.permute.xlu0 %1563
        %1565 = vrot.lane.b32.xlu0 %v1562, 126
        %v1566 = vpop.permute.xlu0 %1565
        %v1569 = vadd.f32 %v1550, %v1564
        %v1570 = vadd.f32 %v1551, %v1566
        %v1571 = vmul.f32 %v1123, %v1374
        %v1572 = vmul.f32 %v1123, %v1375
        %v1573 = vmul.f32 %v1123, %v1376
        %v1577 = vrot.slane %v1571, 2
        %v1578 = vrot.slane %v1572, 2
        %v1579 = vsel %vm506, %v1577, %v1578
        %v1580 = vrot.slane %v1573, 2
        %v1581 = vsel %vm506, %v1578, %v1580
        %1582 = vrot.lane.b32.xlu0 %v1579, 125
        %v1583 = vpop.permute.xlu0 %1582
        %1584 = vrot.lane.b32.xlu0 %v1581, 125
        %v1585 = vpop.permute.xlu0 %1584
        %v1588 = vadd.f32 %v1569, %v1583
        %v1589 = vadd.f32 %v1570, %v1585
        %v1590 = vmul.f32 %v1143, %v1374
        %v1591 = vmul.f32 %v1143, %v1375
        %v1592 = vmul.f32 %v1143, %v1376
        %v1596 = vrot.slane %v1590, 2
        %v1597 = vrot.slane %v1591, 2
        %v1598 = vsel %vm506, %v1596, %v1597
        %v1599 = vrot.slane %v1592, 2
        %v1600 = vsel %vm506, %v1597, %v1599
        %1601 = vrot.lane.b32.xlu0 %v1598, 124
        %v1602 = vpop.permute.xlu0 %1601
        %1603 = vrot.lane.b32.xlu0 %v1600, 124
        %v1604 = vpop.permute.xlu0 %1603
        %v1607 = vadd.f32 %v1588, %v1602
        %v1608 = vadd.f32 %v1589, %v1604
        %v1609 = vmul.f32 %v1163, %v1374
        %v1610 = vmul.f32 %v1163, %v1375
        %v1611 = vmul.f32 %v1163, %v1376
        %v1615 = vrot.slane %v1609, 3
        %v1616 = vrot.slane %v1610, 3
        %v1617 = vsel %vm608, %v1615, %v1616
        %v1618 = vrot.slane %v1611, 3
        %v1619 = vsel %vm608, %v1616, %v1618
        %v1622 = vadd.f32 %v1607, %v1617
        %v1623 = vadd.f32 %v1608, %v1619
        %v1624 = vmul.f32 %v1179, %v1374
        %v1625 = vmul.f32 %v1179, %v1375
        %v1626 = vmul.f32 %v1179, %v1376
        %v1630 = vrot.slane %v1624, 3
        %v1631 = vrot.slane %v1625, 3
        %v1632 = vsel %vm608, %v1630, %v1631
        %v1633 = vrot.slane %v1626, 3
        %v1634 = vsel %vm608, %v1631, %v1633
        %1635 = vrot.lane.b32.xlu0 %v1632, 127
        %v1636 = vpop.permute.xlu0 %1635
        %1637 = vrot.lane.b32.xlu0 %v1634, 127
        %v1638 = vpop.permute.xlu0 %1637
        %v1641 = vadd.f32 %v1622, %v1636
        %v1642 = vadd.f32 %v1623, %v1638
        %v1643 = vmul.f32 %v1199, %v1374
        %v1644 = vmul.f32 %v1199, %v1375
        %v1645 = vmul.f32 %v1199, %v1376
        %v1649 = vrot.slane %v1643, 3
        %v1650 = vrot.slane %v1644, 3
        %v1651 = vsel %vm608, %v1649, %v1650
        %v1652 = vrot.slane %v1645, 3
        %v1653 = vsel %vm608, %v1650, %v1652
        %1654 = vrot.lane.b32.xlu0 %v1651, 126
        %v1655 = vpop.permute.xlu0 %1654
        %1656 = vrot.lane.b32.xlu0 %v1653, 126
        %v1657 = vpop.permute.xlu0 %1656
        %v1660 = vadd.f32 %v1641, %v1655
        %v1661 = vadd.f32 %v1642, %v1657
        %v1662 = vmul.f32 %v1219, %v1374
        %v1663 = vmul.f32 %v1219, %v1375
        %v1664 = vmul.f32 %v1219, %v1376
        %v1668 = vrot.slane %v1662, 3
        %v1669 = vrot.slane %v1663, 3
        %v1670 = vsel %vm608, %v1668, %v1669
        %v1671 = vrot.slane %v1664, 3
        %v1672 = vsel %vm608, %v1669, %v1671
        %1673 = vrot.lane.b32.xlu0 %v1670, 125
        %v1674 = vpop.permute.xlu0 %1673
        %1675 = vrot.lane.b32.xlu0 %v1672, 125
        %v1676 = vpop.permute.xlu0 %1675
        %v1679 = vadd.f32 %v1660, %v1674
        %v1680 = vadd.f32 %v1661, %v1676
        %v1681 = vmul.f32 %v1239, %v1374
        %v1682 = vmul.f32 %v1239, %v1375
        %v1683 = vmul.f32 %v1239, %v1376
        %v1687 = vrot.slane %v1681, 3
        %v1688 = vrot.slane %v1682, 3
        %v1689 = vsel %vm608, %v1687, %v1688
        %v1690 = vrot.slane %v1683, 3
        %v1691 = vsel %vm608, %v1688, %v1690
        %1692 = vrot.lane.b32.xlu0 %v1689, 124
        %v1693 = vpop.permute.xlu0 %1692
        %1694 = vrot.lane.b32.xlu0 %v1691, 124
        %v1695 = vpop.permute.xlu0 %1694
        %v1698 = vadd.f32 %v1679, %v1693
        %v1699 = vadd.f32 %v1680, %v1695
        %v1700 = vmul.f32 %v1259, %v1374
        %v1701 = vmul.f32 %v1259, %v1375
        %v1702 = vmul.f32 %v1259, %v1376
        %v1706 = vrot.slane %v1700, 4
        %v1707 = vrot.slane %v1701, 4
        %v1708 = vsel %vm710, %v1706, %v1707
        %v1709 = vrot.slane %v1702, 4
        %v1710 = vsel %vm710, %v1707, %v1709
        %v1713 = vadd.f32 %v1698, %v1708
        %v1714 = vadd.f32 %v1699, %v1710
        %v1715 = vmul.f32 %v1275, %v1374
        %v1716 = vmul.f32 %v1275, %v1375
        %v1717 = vmul.f32 %v1275, %v1376
        %v1721 = vrot.slane %v1715, 4
        %v1722 = vrot.slane %v1716, 4
        %v1723 = vsel %vm710, %v1721, %v1722
        %v1724 = vrot.slane %v1717, 4
        %v1725 = vsel %vm710, %v1722, %v1724
        %1726 = vrot.lane.b32.xlu0 %v1723, 127
        %v1727 = vpop.permute.xlu0 %1726
        %1728 = vrot.lane.b32.xlu0 %v1725, 127
        %v1729 = vpop.permute.xlu0 %1728
        %v1732 = vadd.f32 %v1713, %v1727
        %v1733 = vadd.f32 %v1714, %v1729
        %v1734 = vmul.f32 %v1295, %v1374
        %v1735 = vmul.f32 %v1295, %v1375
        %v1736 = vmul.f32 %v1295, %v1376
        %v1740 = vrot.slane %v1734, 4
        %v1741 = vrot.slane %v1735, 4
        %v1742 = vsel %vm710, %v1740, %v1741
        %v1743 = vrot.slane %v1736, 4
        %v1744 = vsel %vm710, %v1741, %v1743
        %1745 = vrot.lane.b32.xlu0 %v1742, 126
        %v1746 = vpop.permute.xlu0 %1745
        %1747 = vrot.lane.b32.xlu0 %v1744, 126
        %v1748 = vpop.permute.xlu0 %1747
        %v1751 = vadd.f32 %v1732, %v1746
        %v1752 = vadd.f32 %v1733, %v1748
        %v1753 = vmul.f32 %v1315, %v1374
        %v1754 = vmul.f32 %v1315, %v1375
        %v1755 = vmul.f32 %v1315, %v1376
        %v1759 = vrot.slane %v1753, 4
        %v1760 = vrot.slane %v1754, 4
        %v1761 = vsel %vm710, %v1759, %v1760
        %v1762 = vrot.slane %v1755, 4
        %v1763 = vsel %vm710, %v1760, %v1762
        %1764 = vrot.lane.b32.xlu0 %v1761, 125
        %v1765 = vpop.permute.xlu0 %1764
        %1766 = vrot.lane.b32.xlu0 %v1763, 125
        %v1767 = vpop.permute.xlu0 %1766
        %v1770 = vadd.f32 %v1751, %v1765
        %v1771 = vadd.f32 %v1752, %v1767
        %v1772 = vmul.f32 %v1335, %v1374
        %v1773 = vmul.f32 %v1335, %v1375
        %v1774 = vmul.f32 %v1335, %v1376
        %v1778 = vrot.slane %v1772, 4
        %v1779 = vrot.slane %v1773, 4
        %v1780 = vsel %vm710, %v1778, %v1779
        %v1781 = vrot.slane %v1774, 4
        %v1782 = vsel %vm710, %v1779, %v1781
        %1783 = vrot.lane.b32.xlu0 %v1780, 124
        %v1784 = vpop.permute.xlu0 %1783
        %1785 = vrot.lane.b32.xlu0 %v1782, 124
        %v1786 = vpop.permute.xlu0 %1785
        %v1789 = vadd.f32 %v1770, %v1784
        %v1790 = vadd.f32 %v1771, %v1786
        %v1791 = vadd.f32 %v859, %v1789
        %v1792 = vadd.f32 %v860, %v1790
        %v1793 = vmul.f32 %v308, %v1791
        %v1794 = vmul.f32 %v309, %v1792
        %v1795 = vadd.f32 %v863, %v1793
        %v1796 = vadd.f32 %v864, %v1794
        %s1797 = scalar_lea.vmem %s288, 32 [#allocation10]
        %1798 = vst.msk [vmem:[%s1797] sm:$0xff] %vm899, %v1795
        %1799 = vst.msk [vmem:[%s1797 + $0x8] sm:$0xff] %vm899, %v1796
        %1802 = vrot.lane.b32.xlu0 %v1795, 2
        %v1803 = vpop.permute.xlu0 %1802
        %1804 = vrot.lane.b32.xlu0 %v1796, 2
        %v1805 = vpop.permute.xlu0 %1804
        %1808 = vst.msk [vmem:[#allocation2 + $0x2] sm:$0xff] %vm910, %v1803
        %1809 = vst.msk [vmem:[#allocation2 + $0xa] sm:$0xff] %vm910, %v1805
        %v1810 = vld [vmem:[#allocation2] sm:$0xff]
        %v1811 = vld [vmem:[#allocation2 + $0x8] sm:$0xff]
        %v1812 = vld [vmem:[#allocation2 + $0x10] sm:$0xf]
        %v1813 = vmul.f32 %v916, %v1810
        %v1814 = vmul.f32 %v916, %v1811
        %v1815 = vmul.f32 %v919, %v1810
        %v1816 = vmul.f32 %v919, %v1811
        %1819 = vrot.lane.b32.xlu0 %v1815, 127
        %v1820 = vpop.permute.xlu0 %1819
        %1821 = vrot.lane.b32.xlu0 %v1816, 127
        %v1822 = vpop.permute.xlu0 %1821
        %v1825 = vadd.f32 %v1813, %v1820
        %v1826 = vadd.f32 %v1814, %v1822
        %v1827 = vmul.f32 %v932, %v1810
        %v1828 = vmul.f32 %v932, %v1811
        %1831 = vrot.lane.b32.xlu0 %v1827, 126
        %v1832 = vpop.permute.xlu0 %1831
        %1833 = vrot.lane.b32.xlu0 %v1828, 126
        %v1834 = vpop.permute.xlu0 %1833
        %v1837 = vadd.f32 %v1825, %v1832
        %v1838 = vadd.f32 %v1826, %v1834
        %v1839 = vmul.f32 %v945, %v1810
        %v1840 = vmul.f32 %v945, %v1811
        %1843 = vrot.lane.b32.xlu0 %v1839, 125
        %v1844 = vpop.permute.xlu0 %1843
        %1845 = vrot.lane.b32.xlu0 %v1840, 125
        %v1846 = vpop.permute.xlu0 %1845
        %v1849 = vadd.f32 %v1837, %v1844
        %v1850 = vadd.f32 %v1838, %v1846
        %v1851 = vmul.f32 %v958, %v1810
        %v1852 = vmul.f32 %v958, %v1811
        %1855 = vrot.lane.b32.xlu0 %v1851, 124
        %v1856 = vpop.permute.xlu0 %1855
        %1857 = vrot.lane.b32.xlu0 %v1852, 124
        %v1858 = vpop.permute.xlu0 %1857
        %v1861 = vadd.f32 %v1849, %v1856
        %v1862 = vadd.f32 %v1850, %v1858
        %v1863 = vmul.f32 %v971, %v1810
        %v1864 = vmul.f32 %v971, %v1811
        %v1865 = vmul.f32 %v971, %v1812
        %v1869 = vrot.slane %v1863, 1
        %v1870 = vrot.slane %v1864, 1
        %v1871 = vsel %vm404, %v1869, %v1870
        %v1872 = vrot.slane %v1865, 1
        %v1873 = vsel %vm404, %v1870, %v1872
        %v1876 = vadd.f32 %v1861, %v1871
        %v1877 = vadd.f32 %v1862, %v1873
        %v1878 = vmul.f32 %v987, %v1810
        %v1879 = vmul.f32 %v987, %v1811
        %v1880 = vmul.f32 %v987, %v1812
        %v1884 = vrot.slane %v1878, 1
        %v1885 = vrot.slane %v1879, 1
        %v1886 = vsel %vm404, %v1884, %v1885
        %v1887 = vrot.slane %v1880, 1
        %v1888 = vsel %vm404, %v1885, %v1887
        %1889 = vrot.lane.b32.xlu0 %v1886, 127
        %v1890 = vpop.permute.xlu0 %1889
        %1891 = vrot.lane.b32.xlu0 %v1888, 127
        %v1892 = vpop.permute.xlu0 %1891
        %v1895 = vadd.f32 %v1876, %v1890
        %v1896 = vadd.f32 %v1877, %v1892
        %v1897 = vmul.f32 %v1007, %v1810
        %v1898 = vmul.f32 %v1007, %v1811
        %v1899 = vmul.f32 %v1007, %v1812
        %v1903 = vrot.slane %v1897, 1
        %v1904 = vrot.slane %v1898, 1
        %v1905 = vsel %vm404, %v1903, %v1904
        %v1906 = vrot.slane %v1899, 1
        %v1907 = vsel %vm404, %v1904, %v1906
        %1908 = vrot.lane.b32.xlu0 %v1905, 126
        %v1909 = vpop.permute.xlu0 %1908
        %1910 = vrot.lane.b32.xlu0 %v1907, 126
        %v1911 = vpop.permute.xlu0 %1910
        %v1914 = vadd.f32 %v1895, %v1909
        %v1915 = vadd.f32 %v1896, %v1911
        %v1916 = vmul.f32 %v1027, %v1810
        %v1917 = vmul.f32 %v1027, %v1811
        %v1918 = vmul.f32 %v1027, %v1812
        %v1922 = vrot.slane %v1916, 1
        %v1923 = vrot.slane %v1917, 1
        %v1924 = vsel %vm404, %v1922, %v1923
        %v1925 = vrot.slane %v1918, 1
        %v1926 = vsel %vm404, %v1923, %v1925
        %1927 = vrot.lane.b32.xlu0 %v1924, 125
        %v1928 = vpop.permute.xlu0 %1927
        %1929 = vrot.lane.b32.xlu0 %v1926, 125
        %v1930 = vpop.permute.xlu0 %1929
        %v1933 = vadd.f32 %v1914, %v1928
        %v1934 = vadd.f32 %v1915, %v1930
        %v1935 = vmul.f32 %v1047, %v1810
        %v1936 = vmul.f32 %v1047, %v1811
        %v1937 = vmul.f32 %v1047, %v1812
        %v1941 = vrot.slane %v1935, 1
        %v1942 = vrot.slane %v1936, 1
        %v1943 = vsel %vm404, %v1941, %v1942
        %v1944 = vrot.slane %v1937, 1
        %v1945 = vsel %vm404, %v1942, %v1944
        %1946 = vrot.lane.b32.xlu0 %v1943, 124
        %v1947 = vpop.permute.xlu0 %1946
        %1948 = vrot.lane.b32.xlu0 %v1945, 124
        %v1949 = vpop.permute.xlu0 %1948
        %v1952 = vadd.f32 %v1933, %v1947
        %v1953 = vadd.f32 %v1934, %v1949
        %v1954 = vmul.f32 %v1067, %v1810
        %v1955 = vmul.f32 %v1067, %v1811
        %v1956 = vmul.f32 %v1067, %v1812
        %v1960 = vrot.slane %v1954, 2
        %v1961 = vrot.slane %v1955, 2
        %v1962 = vsel %vm506, %v1960, %v1961
        %v1963 = vrot.slane %v1956, 2
        %v1964 = vsel %vm506, %v1961, %v1963
        %v1967 = vadd.f32 %v1952, %v1962
        %v1968 = vadd.f32 %v1953, %v1964
        %v1969 = vmul.f32 %v1083, %v1810
        %v1970 = vmul.f32 %v1083, %v1811
        %v1971 = vmul.f32 %v1083, %v1812
        %v1975 = vrot.slane %v1969, 2
        %v1976 = vrot.slane %v1970, 2
        %v1977 = vsel %vm506, %v1975, %v1976
        %v1978 = vrot.slane %v1971, 2
        %v1979 = vsel %vm506, %v1976, %v1978
        %1980 = vrot.lane.b32.xlu0 %v1977, 127
        %v1981 = vpop.permute.xlu0 %1980
        %1982 = vrot.lane.b32.xlu0 %v1979, 127
        %v1983 = vpop.permute.xlu0 %1982
        %v1986 = vadd.f32 %v1967, %v1981
        %v1987 = vadd.f32 %v1968, %v1983
        %v1988 = vmul.f32 %v1103, %v1810
        %v1989 = vmul.f32 %v1103, %v1811
        %v1990 = vmul.f32 %v1103, %v1812
        %v1994 = vrot.slane %v1988, 2
        %v1995 = vrot.slane %v1989, 2
        %v1996 = vsel %vm506, %v1994, %v1995
        %v1997 = vrot.slane %v1990, 2
        %v1998 = vsel %vm506, %v1995, %v1997
        %1999 = vrot.lane.b32.xlu0 %v1996, 126
        %v2000 = vpop.permute.xlu0 %1999
        %2001 = vrot.lane.b32.xlu0 %v1998, 126
        %v2002 = vpop.permute.xlu0 %2001
        %v2005 = vadd.f32 %v1986, %v2000
        %v2006 = vadd.f32 %v1987, %v2002
        %v2007 = vmul.f32 %v1123, %v1810
        %v2008 = vmul.f32 %v1123, %v1811
        %v2009 = vmul.f32 %v1123, %v1812
        %v2013 = vrot.slane %v2007, 2
        %v2014 = vrot.slane %v2008, 2
        %v2015 = vsel %vm506, %v2013, %v2014
        %v2016 = vrot.slane %v2009, 2
        %v2017 = vsel %vm506, %v2014, %v2016
        %2018 = vrot.lane.b32.xlu0 %v2015, 125
        %v2019 = vpop.permute.xlu0 %2018
        %2020 = vrot.lane.b32.xlu0 %v2017, 125
        %v2021 = vpop.permute.xlu0 %2020
        %v2024 = vadd.f32 %v2005, %v2019
        %v2025 = vadd.f32 %v2006, %v2021
        %v2026 = vmul.f32 %v1143, %v1810
        %v2027 = vmul.f32 %v1143, %v1811
        %v2028 = vmul.f32 %v1143, %v1812
        %v2032 = vrot.slane %v2026, 2
        %v2033 = vrot.slane %v2027, 2
        %v2034 = vsel %vm506, %v2032, %v2033
        %v2035 = vrot.slane %v2028, 2
        %v2036 = vsel %vm506, %v2033, %v2035
        %2037 = vrot.lane.b32.xlu0 %v2034, 124
        %v2038 = vpop.permute.xlu0 %2037
        %2039 = vrot.lane.b32.xlu0 %v2036, 124
        %v2040 = vpop.permute.xlu0 %2039
        %v2043 = vadd.f32 %v2024, %v2038
        %v2044 = vadd.f32 %v2025, %v2040
        %v2045 = vmul.f32 %v1163, %v1810
        %v2046 = vmul.f32 %v1163, %v1811
        %v2047 = vmul.f32 %v1163, %v1812
        %v2051 = vrot.slane %v2045, 3
        %v2052 = vrot.slane %v2046, 3
        %v2053 = vsel %vm608, %v2051, %v2052
        %v2054 = vrot.slane %v2047, 3
        %v2055 = vsel %vm608, %v2052, %v2054
        %v2058 = vadd.f32 %v2043, %v2053
        %v2059 = vadd.f32 %v2044, %v2055
        %v2060 = vmul.f32 %v1179, %v1810
        %v2061 = vmul.f32 %v1179, %v1811
        %v2062 = vmul.f32 %v1179, %v1812
        %v2066 = vrot.slane %v2060, 3
        %v2067 = vrot.slane %v2061, 3
        %v2068 = vsel %vm608, %v2066, %v2067
        %v2069 = vrot.slane %v2062, 3
        %v2070 = vsel %vm608, %v2067, %v2069
        %2071 = vrot.lane.b32.xlu0 %v2068, 127
        %v2072 = vpop.permute.xlu0 %2071
        %2073 = vrot.lane.b32.xlu0 %v2070, 127
        %v2074 = vpop.permute.xlu0 %2073
        %v2077 = vadd.f32 %v2058, %v2072
        %v2078 = vadd.f32 %v2059, %v2074
        %v2079 = vmul.f32 %v1199, %v1810
        %v2080 = vmul.f32 %v1199, %v1811
        %v2081 = vmul.f32 %v1199, %v1812
        %v2085 = vrot.slane %v2079, 3
        %v2086 = vrot.slane %v2080, 3
        %v2087 = vsel %vm608, %v2085, %v2086
        %v2088 = vrot.slane %v2081, 3
        %v2089 = vsel %vm608, %v2086, %v2088
        %2090 = vrot.lane.b32.xlu0 %v2087, 126
        %v2091 = vpop.permute.xlu0 %2090
        %2092 = vrot.lane.b32.xlu0 %v2089, 126
        %v2093 = vpop.permute.xlu0 %2092
        %v2096 = vadd.f32 %v2077, %v2091
        %v2097 = vadd.f32 %v2078, %v2093
        %v2098 = vmul.f32 %v1219, %v1810
        %v2099 = vmul.f32 %v1219, %v1811
        %v2100 = vmul.f32 %v1219, %v1812
        %v2104 = vrot.slane %v2098, 3
        %v2105 = vrot.slane %v2099, 3
        %v2106 = vsel %vm608, %v2104, %v2105
        %v2107 = vrot.slane %v2100, 3
        %v2108 = vsel %vm608, %v2105, %v2107
        %2109 = vrot.lane.b32.xlu0 %v2106, 125
        %v2110 = vpop.permute.xlu0 %2109
        %2111 = vrot.lane.b32.xlu0 %v2108, 125
        %v2112 = vpop.permute.xlu0 %2111
        %v2115 = vadd.f32 %v2096, %v2110
        %v2116 = vadd.f32 %v2097, %v2112
        %v2117 = vmul.f32 %v1239, %v1810
        %v2118 = vmul.f32 %v1239, %v1811
        %v2119 = vmul.f32 %v1239, %v1812
        %v2123 = vrot.slane %v2117, 3
        %v2124 = vrot.slane %v2118, 3
        %v2125 = vsel %vm608, %v2123, %v2124
        %v2126 = vrot.slane %v2119, 3
        %v2127 = vsel %vm608, %v2124, %v2126
        %2128 = vrot.lane.b32.xlu0 %v2125, 124
        %v2129 = vpop.permute.xlu0 %2128
        %2130 = vrot.lane.b32.xlu0 %v2127, 124
        %v2131 = vpop.permute.xlu0 %2130
        %v2134 = vadd.f32 %v2115, %v2129
        %v2135 = vadd.f32 %v2116, %v2131
        %v2136 = vmul.f32 %v1259, %v1810
        %v2137 = vmul.f32 %v1259, %v1811
        %v2138 = vmul.f32 %v1259, %v1812
        %v2142 = vrot.slane %v2136, 4
        %v2143 = vrot.slane %v2137, 4
        %v2144 = vsel %vm710, %v2142, %v2143
        %v2145 = vrot.slane %v2138, 4
        %v2146 = vsel %vm710, %v2143, %v2145
        %v2149 = vadd.f32 %v2134, %v2144
        %v2150 = vadd.f32 %v2135, %v2146
        %v2151 = vmul.f32 %v1275, %v1810
        %v2152 = vmul.f32 %v1275, %v1811
        %v2153 = vmul.f32 %v1275, %v1812
        %v2157 = vrot.slane %v2151, 4
        %v2158 = vrot.slane %v2152, 4
        %v2159 = vsel %vm710, %v2157, %v2158
        %v2160 = vrot.slane %v2153, 4
        %v2161 = vsel %vm710, %v2158, %v2160
        %2162 = vrot.lane.b32.xlu0 %v2159, 127
        %v2163 = vpop.permute.xlu0 %2162
        %2164 = vrot.lane.b32.xlu0 %v2161, 127
        %v2165 = vpop.permute.xlu0 %2164
        %v2168 = vadd.f32 %v2149, %v2163
        %v2169 = vadd.f32 %v2150, %v2165
        %v2170 = vmul.f32 %v1295, %v1810
        %v2171 = vmul.f32 %v1295, %v1811
        %v2172 = vmul.f32 %v1295, %v1812
        %v2176 = vrot.slane %v2170, 4
        %v2177 = vrot.slane %v2171, 4
        %v2178 = vsel %vm710, %v2176, %v2177
        %v2179 = vrot.slane %v2172, 4
        %v2180 = vsel %vm710, %v2177, %v2179
        %2181 = vrot.lane.b32.xlu0 %v2178, 126
        %v2182 = vpop.permute.xlu0 %2181
        %2183 = vrot.lane.b32.xlu0 %v2180, 126
        %v2184 = vpop.permute.xlu0 %2183
        %v2187 = vadd.f32 %v2168, %v2182
        %v2188 = vadd.f32 %v2169, %v2184
        %v2189 = vmul.f32 %v1315, %v1810
        %v2190 = vmul.f32 %v1315, %v1811
        %v2191 = vmul.f32 %v1315, %v1812
        %v2195 = vrot.slane %v2189, 4
        %v2196 = vrot.slane %v2190, 4
        %v2197 = vsel %vm710, %v2195, %v2196
        %v2198 = vrot.slane %v2191, 4
        %v2199 = vsel %vm710, %v2196, %v2198
        %2200 = vrot.lane.b32.xlu0 %v2197, 125
        %v2201 = vpop.permute.xlu0 %2200
        %2202 = vrot.lane.b32.xlu0 %v2199, 125
        %v2203 = vpop.permute.xlu0 %2202
        %v2206 = vadd.f32 %v2187, %v2201
        %v2207 = vadd.f32 %v2188, %v2203
        %v2208 = vmul.f32 %v1335, %v1810
        %v2209 = vmul.f32 %v1335, %v1811
        %v2210 = vmul.f32 %v1335, %v1812
        %v2214 = vrot.slane %v2208, 4
        %v2215 = vrot.slane %v2209, 4
        %v2216 = vsel %vm710, %v2214, %v2215
        %v2217 = vrot.slane %v2210, 4
        %v2218 = vsel %vm710, %v2215, %v2217
        %2219 = vrot.lane.b32.xlu0 %v2216, 124
        %v2220 = vpop.permute.xlu0 %2219
        %2221 = vrot.lane.b32.xlu0 %v2218, 124
        %v2222 = vpop.permute.xlu0 %2221
        %v2225 = vadd.f32 %v2206, %v2220
        %v2226 = vadd.f32 %v2207, %v2222
        %v2227 = vadd.f32 %v859, %v2225
        %v2228 = vadd.f32 %v860, %v2226
        %v2229 = vmul.f32 %v308, %v2227
        %v2230 = vmul.f32 %v309, %v2228
        %v2231 = vadd.f32 %v863, %v2229
        %v2232 = vadd.f32 %v864, %v2230
        %s2233 = scalar_lea.vmem %s288, 48 [#allocation10]
        %2234 = vst.msk [vmem:[%s2233] sm:$0xff] %vm899, %v2231
        %2235 = vst.msk [vmem:[%s2233 + $0x8] sm:$0xff] %vm899, %v2232
        %s2236 = sand.u32 %s162, 1
        %s2237 = scalar_lea.sflag [#allocation5], %s2236
        %s2238 = sand.u32 %s162, 1
        %s2239 = smul.addr %s2238, 64
        %s2240 = scalar_lea.vmem [#allocation10], %s2239
        // Predicated region
        $region57: #{tpu_custom_call.1} parent=43 // pred_check
          %p2241 = pneg %p172
        $region58: #{tpu_custom_call.1} parent=43 // pred_check_branch
          %2243 = sbr.rel (%p2241) target = $region60
        $region59: #{tpu_custom_call.1} parent=43 // pred_region
          %s2245 = ssub.s32 1024, 1024
          %2246 = vsyncadd %s2237, %s2245
          %s2247 = smul.addr %s23, 8
          %s2248 = smul.addr %s2247, 128
          %s2249 = scalar_lea.hbm %s6, %s2248
          %s2250 = sshll.u32 %s2240, 4
          %s2251 = int_to_ptr.vmem [resolvable:$true] %s2250
          %2256 = dma.vmem_to_hbm [thread:$0]  %s2251, 1024, %s2249, %s2237, 128, 128, 8
        $region60: #{tpu_custom_call.1} parent=43 // pred_fallthru
          _
      $region44: #{tpu_custom_call.1} parent=5 // pred_fallthru
        _
      %p2257 = scmp.le.s32.totalorder 2, %s18
      // Predicated region
      $region61: #{tpu_custom_call.1} parent=5 // pred_check
        %p2258 = pneg %p2257
      $region62: #{tpu_custom_call.1} parent=5 // pred_check_branch
        %2260 = sbr.rel (%p2258) target = $region64
      $region63: #{tpu_custom_call.1} parent=5 // pred_region
        %s2261 = ssub.s32 %s18, 2
        // Predicated region
        $region65: #{tpu_custom_call.1} parent=63 // pred_check
          %p2262 = pneg %p178
        $region66: #{tpu_custom_call.1} parent=63 // pred_check_branch
          %2264 = sbr.rel (%p2262) target = $region68
        $region67: #{tpu_custom_call.1} parent=63 // pred_region
          %s2265 = sand.u32 %s163, 1
          %s2266 = scalar_lea.sflag [#allocation5], %s2265
          %s2267 = sand.u32 %s163, 1
          %s2268 = smul.addr %s2267, 64
          %s2269 = scalar_lea.vmem [#allocation10], %s2268
          %2270 = dma.done %s2266, 1024
        $region68: #{tpu_custom_call.1} parent=63 // pred_fallthru
          _
      $region64: #{tpu_custom_call.1} parent=5 // pred_fallthru
        _
    $region6: #{tpu_custom_call.1} parent=1 // loop_footer
      %s22 = sadd.s32 1, %s18
    $region7: #{tpu_custom_call.1} parent=1 // loop_footer_branch
      %17 = sbr.rel target = $region3
    $region8: #{tpu_custom_call.1} parent=1 // loop_exit
      _
    %2271 = vsyncpa [#allocation4], 1
    %s2272 = scalar_lea.sflag [#allocation4], 1
    %2273 = vsyncpa %s2272, 1
    %2274 = vsyncpa [#allocation8], 1
    %2275 = vsyncpa [#allocation5], 1
    %s2276 = scalar_lea.sflag [#allocation5], 1
    %2277 = vsyncpa %s2276, 1
    %2278 = vsyncpa [#allocation6], 1
    %s2279 = scalar_lea.sflag [#allocation6], 1
    %2280 = vsyncpa %s2279, 1

</llo_original>
